<compile_context>
chip_gen: v5e
topology: v5e:2x2
jax: 0.10.0
libtpu: 0.0.40
codegen_flags: <defaults>
</compile_context>

<pallas_src>
import jax
import jax.numpy as jnp
from jax.experimental import pallas as pl
from jax.experimental.pallas import tpu as pltpu

D = 256         # stand-in embed dim (128-aligned; real vim_t uses 192)
HID = 512       # token-mixer / regressor hidden dim (128-aligned)
PATCH = 8       # patch size for the synthetic patch embed
CW = 512        # lane width of the packed constant block
EPS_LN = 1e-6
EPS_BN = 1e-5
TILE_CAP = 512                   # per review: safe on v7x (64 MiB VMEM), good on v5e/v6e
VMEM_LIMIT = 48 * 1024 * 1024    # explicit budget; leaves headroom on v7x


# ----------------------------------------------------------------------------
# Shared building block: LayerNorm -> Linear -> SiLU -> Linear -> residual
# (Mamba-block stand-in; per-token, so it commutes with token pooling).
# Used both inside the kernel and at init time (to hoist the cls-token path).
# ----------------------------------------------------------------------------
def _mix_block(x, gamma, beta, w1, b1, w2, b2):
    mu = jnp.mean(x, axis=-1, keepdims=True)
    var = jnp.mean(jnp.square(x - mu), axis=-1, keepdims=True)
    xn = (x - mu) * jax.lax.rsqrt(var + EPS_LN) * gamma + beta
    h = jnp.dot(xn.astype(jnp.bfloat16), w1, preferred_element_type=jnp.float32) + b1
    # SiLU via tanh: h*sigmoid(h) == 0.5*h*(1+tanh(h/2))  (single EUP op/elem)
    h = 0.5 * h * (1.0 + jnp.tanh(0.5 * h))
    y = jnp.dot(h.astype(jnp.bfloat16), w2, preferred_element_type=jnp.float32) + b2
    return x + y


# ----------------------------------------------------------------------------
# Fully fused kernel: one grid step = one batch x one patch tile.
#   generator branch -> 2x-1 -> score branch -> token-sum accumulator
#   last tile: mean pool (+ hoisted cls token) -> regressor -> sigmoid
# Packed constant rows (f32, width CW):
#   0 g_pe_b[:D]   1 g_gamma[:D]  2 g_beta[:D]   3 g_b1[:HID]  4 g_b2[:D]
#   5 g_out_b[:pd] 6 s_pe_b[:D]   7 s_gamma[:D]  8 s_beta[:D]  9 s_b1[:HID]
#  10 s_b2[:D]    11 s_ctok[:D]  12 r_b1[:HID]  13 r_w2[:HID] 14 r_b2[:1]
# ----------------------------------------------------------------------------
def _make_fused_kernel(inv_l, pd):
    def kernel(patches_ref, const_ref,
               g_pe_w, g_pos, g_w1, g_w2, g_out_w,
               s_pe_w, s_pos, s_w1, s_w2, r_w1,
               out_ref, acc_ref):
        t = pl.program_id(1)

        @pl.when(t == 0)
        def _():
            acc_ref[...] = jnp.zeros_like(acc_ref)

        c = const_ref[...]                                          # (16, CW) f32

        # --- noise-generator branch (in-kernel bf16 cast; no wrapper pad) ---
        p = patches_ref[0].astype(jnp.bfloat16)                     # (tn, pd)
        gtok = (jnp.dot(p, g_pe_w[...], preferred_element_type=jnp.float32)
                + c[0:1, :D] + g_pos[...])                          # (tn, D) f32
        gtok = _mix_block(gtok, c[1:2, :D], c[2:3, :D],
                          g_w1[...], c[3:4, :HID], g_w2[...], c[4:5, :D])
        noise = (jnp.dot(gtok.astype(jnp.bfloat16), g_out_w[...],
                         preferred_element_type=jnp.float32)
                 + c[5:6, :pd])                                     # (tn, pd) f32
        noise = 2.0 * noise - 1.0                                   # (x-0.5)/0.5

        # --- score branch, fused (noise tile never goes to HBM) ---
        stok = (jnp.dot(noise.astype(jnp.bfloat16), s_pe_w[...],
                        preferred_element_type=jnp.float32)
                + c[6:7, :D] + s_pos[...])                          # (tn, D) f32
        stok = _mix_block(stok, c[7:8, :D], c[8:9, :D],
                          s_w1[...], c[9:10, :HID], s_w2[...], c[10:11, :D])
        acc_ref[...] += jnp.sum(stok, axis=0, keepdims=True)        # (1, D)

        @pl.when(t == pl.num_programs(1) - 1)
        def _():
            # mean over L = npq + 1 tokens; cls-token path hoisted to init.
            pooled = (acc_ref[...] + c[11:12, :D]) * inv_l          # (1, D)
            # regressor: Linear(D,512) with eval-mode BN folded in -> ReLU
            h = (jnp.dot(pooled.astype(jnp.bfloat16), r_w1[...],
                         preferred_element_type=jnp.float32) + c[12:13, :HID])
            h = jnp.maximum(h, 0.0)
            # Linear(512,1): VPU multiply + lane reduction (no N=1 MXU pass)
            s = jnp.sum(h * c[13:14, :HID], axis=-1, keepdims=True) + c[14:15, 0:1]
            out_ref[0] = jax.nn.sigmoid(s).astype(out_ref.dtype)
    return kernel


# ----------------------------------------------------------------------------
# JAX glue: patchify (reshape/transpose only; no pad, no cast)
# ----------------------------------------------------------------------------
def patchify(img, p):
    B, C, H, W = img.shape
    x = img.reshape(B, C, H // p, p, W // p, p)
    x = x.transpose(0, 2, 4, 1, 3, 5)                  # B, nH, nW, C, p, p
    return x.reshape(B, (H // p) * (W // p), C * p * p)


def _pick_tile(npq, cap=TILE_CAP):
    if npq <= cap:
        return npq                                      # full extent always valid
    for t in range(cap, 0, -8):                          # multiples of 8, descending
        if npq % t == 0:
            return t
    # TODO(synk): a ragged last tile would need masking in the score accumulator.
    raise NotImplementedError(f"npq={npq} has no multiple-of-8 tile <= {cap}")


# ----------------------------------------------------------------------------
# Deterministic parameter init (synthetic; no checkpoint loading)
# ----------------------------------------------------------------------------
def _kaiming(key, shape):
    return jax.random.normal(key, shape, jnp.float32) * jnp.sqrt(2.0 / shape[0])


def _scaled(key, shape):
    return jax.random.normal(key, shape, jnp.float32) / jnp.sqrt(float(shape[0]))


def _pack_consts(rows, width=CW, nrows=16):
    out = jnp.zeros((nrows, width), jnp.float32)
    for i, r in enumerate(rows):
        r = jnp.asarray(r, jnp.float32).reshape(1, -1)
        out = out.at[i:i + 1, :r.shape[1]].set(r)
    return out


def init_params(key, C, H, W):
    pd = C * PATCH * PATCH
    npq = (H // PATCH) * (W // PATCH)
    ks = jax.random.split(key, 14)

    # --- noise generator (Vim-UNet stand-in) ---
    g_pe_w = _scaled(ks[0], (pd, D)).astype(jnp.bfloat16)
    g_pe_b = jnp.zeros((D,), jnp.float32)
    g_pos = jax.random.normal(ks[1], (npq, D), jnp.float32) * 0.02
    g_gamma = jnp.ones((D,), jnp.float32)
    g_beta = jnp.zeros((D,), jnp.float32)
    g_w1 = _scaled(ks[2], (D, HID)).astype(jnp.bfloat16)
    g_b1 = jnp.zeros((HID,), jnp.float32)
    g_w2 = _scaled(ks[3], (HID, D)).astype(jnp.bfloat16)
    g_b2 = jnp.zeros((D,), jnp.float32)
    g_out_w = _scaled(ks[4], (D, pd)).astype(jnp.bfloat16)
    g_out_b = jnp.zeros((pd,), jnp.float32)

    # --- score backbone (Vim encoder stand-in, with cls token) ---
    s_pe_w = _scaled(ks[5], (pd, D)).astype(jnp.bfloat16)
    s_pe_b = jnp.zeros((D,), jnp.float32)
    s_cls = jax.random.normal(ks[6], (1, D), jnp.float32) * 0.02
    s_pos_cls = jax.random.normal(ks[7], (1, D), jnp.float32) * 0.02
    s_pos_patch = jax.random.normal(ks[8], (npq, D), jnp.float32) * 0.02
    s_gamma = jnp.ones((D,), jnp.float32)
    s_beta = jnp.zeros((D,), jnp.float32)
    s_w1 = _scaled(ks[9], (D, HID)).astype(jnp.bfloat16)
    s_b1 = jnp.zeros((HID,), jnp.float32)
    s_w2 = _scaled(ks[10], (HID, D)).astype(jnp.bfloat16)
    s_b2 = jnp.zeros((D,), jnp.float32)

    # hoisted cls-token path (grid/batch-invariant for the per-token block)
    s_ctok = _mix_block(s_cls + s_pos_cls,
                        s_gamma.reshape(1, D), s_beta.reshape(1, D),
                        s_w1, s_b1.reshape(1, HID), s_w2, s_b2.reshape(1, D))

    # --- regressor: eval-mode BatchNorm1d folded into Linear(D,512) ---
    rm = jnp.zeros((HID,), jnp.float32)
    rv = jnp.ones((HID,), jnp.float32)
    bn_g = jnp.ones((HID,), jnp.float32)
    bn_b = jnp.zeros((HID,), jnp.float32)
    scale = bn_g * jax.lax.rsqrt(rv + EPS_BN)
    r_w1 = _kaiming(ks[11], (D, HID))
    r_b1 = jnp.zeros((HID,), jnp.float32)
    r_w1_fold = (r_w1 * scale[None, :]).astype(jnp.bfloat16)
    r_b1_fold = (r_b1 - rm) * scale + bn_b
    r_w2 = _kaiming(ks[12], (HID, 1)).reshape(HID)        # row vector for VPU reduce
    r_b2 = jnp.zeros((1,), jnp.float32)

    consts = _pack_consts([g_pe_b, g_gamma, g_beta, g_b1, g_b2, g_out_b,
                           s_pe_b, s_gamma, s_beta, s_b1, s_b2, s_ctok,
                           r_b1_fold, r_w2, r_b2])

    return {
        "consts": consts,
        "g_pe_w": g_pe_w, "g_pos": g_pos, "g_w1": g_w1, "g_w2": g_w2,
        "g_out_w": g_out_w,
        "s_pe_w": s_pe_w, "s_pos_patch": s_pos_patch, "s_w1": s_w1, "s_w2": s_w2,
        "r_w1": r_w1_fold,
    }


# ----------------------------------------------------------------------------
# Generator.forward  (noise_generator -> normalize -> score_net), fully fused
# ----------------------------------------------------------------------------
def generator_forward(x, params):
    # TODO(synk): the full bidirectional Mamba selective-scan blocks of the
    # external get_vimunet_model / get_vim_encoder are not reproduced; a
    # LN + gated-MLP token mixer stands in.
    B, C, H, W = x.shape
    npq = (H // PATCH) * (W // PATCH)
    pd = C * PATCH * PATCH
    tn = _pick_tile(npq)
    nt = npq // tn
    L = npq + 1                                  # tokens incl. cls
    inv_l = 1.0 / L

    def rep(shape):
        zeros = (0,) * len(shape)
        return pl.BlockSpec(shape, lambda b, t, z=zeros: z)

    patches = patchify(x, PATCH)                                       # (B, npq, pd) f32

    # TODO(synk): for B=1 on v7x the only "parallel" axis has extent 1 (one TC
    # idle); splitting the token-sum reduction across cores would need per-core
    # partial accumulators and a combine step.
    score = pl.pallas_call(
        _make_fused_kernel(inv_l, pd),
        out_shape=jax.ShapeDtypeStruct((B, 1, 1), jnp.float32),
        grid=(B, nt),
        in_specs=[
            pl.BlockSpec((1, tn, pd), lambda b, t: (b, t, 0)),         # patches (f32)
            rep((16, CW)),                                             # packed consts
            rep((pd, D)),                                              # g patch embed W
            pl.BlockSpec((tn, D), lambda b, t: (t, 0)),                # g pos embed
            rep((D, HID)), rep((HID, D)),                              # g mixer MLP
            rep((D, pd)),                                              # g out projection
            rep((pd, D)),                                              # s patch embed W
            pl.BlockSpec((tn, D), lambda b, t: (t, 0)),                # s pos embed
            rep((D, HID)), rep((HID, D)),                              # s mixer MLP
            rep((D, HID)),                                             # regressor W1 (BN-folded)
        ],
        out_specs=pl.BlockSpec((1, 1, 1), lambda b, t: (b, 0, 0)),
        scratch_shapes=[pltpu.VMEM((1, D), jnp.float32)],              # token-sum acc
        compiler_params=pltpu.CompilerParams(
            dimension_semantics=("parallel", "arbitrary"),
            vmem_limit_bytes=VMEM_LIMIT),
    )(patches, params["consts"],
      params["g_pe_w"], params["g_pos"], params["g_w1"], params["g_w2"],
      params["g_out_w"],
      params["s_pe_w"], params["s_pos_patch"], params["s_w1"], params["s_w2"],
      params["r_w1"])

    return score.reshape(B, 1)


if __name__ == "__main__":
    key = jax.random.PRNGKey(0)
    kx, kp = jax.random.split(key)
    B, C, H, W = 2, 3, 16, 16
    x = jax.random.uniform(kx, (B, C, H, W), jnp.float32)   # NCHW input image
    params = init_params(kp, C, H, W)

    fwd = jax.jit(generator_forward)
    score = jax.block_until_ready(fwd(x, params))

    assert score.shape == (B, 1) and score.dtype == jnp.float32
    assert bool(jnp.all(jnp.isfinite(score)))
    assert bool(jnp.all((score >= 0.0) & (score <= 1.0)))
    print("KERNEL_OK")
</pallas_src>

<mosaic_0001>
module attributes {stable_mosaic.version = 11 : i64} {
  func.func @kernel(%arg0: i32, %arg1: i32, %arg2: memref<1x4x192xf32, #tpu.memory_space<vmem>>, %arg3: memref<16x512xf32, #tpu.memory_space<vmem>>, %arg4: memref<192x256xbf16, #tpu.memory_space<vmem>>, %arg5: memref<4x256xf32, #tpu.memory_space<vmem>>, %arg6: memref<256x512xbf16, #tpu.memory_space<vmem>>, %arg7: memref<512x256xbf16, #tpu.memory_space<vmem>>, %arg8: memref<256x192xbf16, #tpu.memory_space<vmem>>, %arg9: memref<192x256xbf16, #tpu.memory_space<vmem>>, %arg10: memref<4x256xf32, #tpu.memory_space<vmem>>, %arg11: memref<256x512xbf16, #tpu.memory_space<vmem>>, %arg12: memref<512x256xbf16, #tpu.memory_space<vmem>>, %arg13: memref<256x512xbf16, #tpu.memory_space<vmem>>, %arg14: memref<1x1x1xf32, #tpu.memory_space<vmem>>, %arg15: memref<1x256xf32, #tpu.memory_space<vmem>>) attributes {dimension_semantics = [#tpu.dimension_semantics<parallel>, #tpu.dimension_semantics<arbitrary>], iteration_bounds = array<i64: 2, 1>, scalar_prefetch = 0 : i64, scratch_operands = 1 : i64, tpu.core_type = #tpu.core_type<tc>, window_params = [{transform_indices = @transform_0, window_bounds = array<i64: 1, 4, 192>}, {pipeline_mode = #tpu.pipeline_mode<synchronous>, transform_indices = @transform_1, window_bounds = array<i64: 16, 512>}, {pipeline_mode = #tpu.pipeline_mode<synchronous>, transform_indices = @transform_2, window_bounds = array<i64: 192, 256>}, {transform_indices = @transform_3, window_bounds = array<i64: 4, 256>}, {pipeline_mode = #tpu.pipeline_mode<synchronous>, transform_indices = @transform_4, window_bounds = array<i64: 256, 512>}, {pipeline_mode = #tpu.pipeline_mode<synchronous>, transform_indices = @transform_5, window_bounds = array<i64: 512, 256>}, {pipeline_mode = #tpu.pipeline_mode<synchronous>, transform_indices = @transform_6, window_bounds = array<i64: 256, 192>}, {pipeline_mode = #tpu.pipeline_mode<synchronous>, transform_indices = @transform_7, window_bounds = array<i64: 192, 256>}, {transform_indices = @transform_8, window_bounds = array<i64: 4, 256>}, {pipeline_mode = #tpu.pipeline_mode<synchronous>, transform_indices = @transform_9, window_bounds = array<i64: 256, 512>}, {pipeline_mode = #tpu.pipeline_mode<synchronous>, transform_indices = @transform_10, window_bounds = array<i64: 512, 256>}, {pipeline_mode = #tpu.pipeline_mode<synchronous>, transform_indices = @transform_11, window_bounds = array<i64: 256, 512>}, {transform_indices = @transform_12, window_bounds = array<i64: 1, 1, 1>}]} {
    %c0_i32 = arith.constant 0 : i32
    %0 = arith.cmpi eq, %arg1, %c0_i32 : i32
    %1 = arith.extui %0 : i1 to i32
    %c0_i32_0 = arith.constant 0 : i32
    %2 = arith.cmpi ne, %1, %c0_i32_0 : i32
    scf.if %2 {
      %cst_54 = arith.constant 0.000000e+00 : f32
      %130 = vector.broadcast %cst_54 : f32 to vector<1x256xf32>
      %c0_55 = arith.constant 0 : index
      %c0_56 = arith.constant 0 : index
      %131 = vector.load %arg15[%c0_55, %c0_56] : memref<1x256xf32, #tpu.memory_space<vmem>>, vector<1x256xf32>
      tpu.vector_store %arg15[%c0_55, %c0_56], %130 {strides = array<i32>} : memref<1x256xf32, #tpu.memory_space<vmem>>, vector<1x256xf32>,
    } else {
    }
    %c0 = arith.constant 0 : index
    %c0_1 = arith.constant 0 : index
    %3 = vector.load %arg3[%c0, %c0_1] : memref<16x512xf32, #tpu.memory_space<vmem>>, vector<16x512xf32>
    %c0_2 = arith.constant 0 : index
    %c0_3 = arith.constant 0 : index
    %c0_4 = arith.constant 0 : index
    %4 = vector.load %arg2[%c0_2, %c0_3, %c0_4] : memref<1x4x192xf32, #tpu.memory_space<vmem>>, vector<1x4x192xf32>
    %5 = vector.shape_cast %4 : vector<1x4x192xf32> to vector<4x192xf32>
    %6 = arith.truncf %5 : vector<4x192xf32> to vector<4x192xbf16>
    %c0_5 = arith.constant 0 : index
    %c0_6 = arith.constant 0 : index
    %7 = vector.load %arg4[%c0_5, %c0_6] : memref<192x256xbf16, #tpu.memory_space<vmem>>, vector<192x256xbf16>
    %cst = arith.constant dense<0.000000e+00> : vector<4x256xf32>
    %8 = tpu.matmul %6, %7, %cst {dimension_numbers = #tpu.dot_dimension_numbers<[1], [0], [0], [1], [0, 0, 1, 1], [], []>} : vector<4x192xbf16>, vector<192x256xbf16>, vector<4x256xf32> -> vector<4x256xf32>
    %9 = vector.extract_strided_slice %3 {offsets = [0, 0], sizes = [1, 256], strides = [1, 1]} : vector<16x512xf32> to vector<1x256xf32>
    %10 = vector.broadcast %9 : vector<1x256xf32> to vector<4x256xf32>
    %11 = arith.addf %8, %10 : vector<4x256xf32>
    %c0_7 = arith.constant 0 : index
    %c0_8 = arith.constant 0 : index
    %12 = vector.load %arg5[%c0_7, %c0_8] : memref<4x256xf32, #tpu.memory_space<vmem>>, vector<4x256xf32>
    %13 = arith.addf %11, %12 : vector<4x256xf32>
    %14 = vector.extract_strided_slice %3 {offsets = [1, 0], sizes = [1, 256], strides = [1, 1]} : vector<16x512xf32> to vector<1x256xf32>
    %15 = vector.extract_strided_slice %3 {offsets = [2, 0], sizes = [1, 256], strides = [1, 1]} : vector<16x512xf32> to vector<1x256xf32>
    %c0_9 = arith.constant 0 : index
    %c0_10 = arith.constant 0 : index
    %16 = vector.load %arg6[%c0_9, %c0_10] : memref<256x512xbf16, #tpu.memory_space<vmem>>, vector<256x512xbf16>
    %17 = vector.extract_strided_slice %3 {offsets = [3, 0], sizes = [1, 512], strides = [1, 1]} : vector<16x512xf32> to vector<1x512xf32>
    %c0_11 = arith.constant 0 : index
    %c0_12 = arith.constant 0 : index
    %18 = vector.load %arg7[%c0_11, %c0_12] : memref<512x256xbf16, #tpu.memory_space<vmem>>, vector<512x256xbf16>
    %19 = vector.extract_strided_slice %3 {offsets = [4, 0], sizes = [1, 256], strides = [1, 1]} : vector<16x512xf32> to vector<1x256xf32>
    %cst_13 = arith.constant dense<0.000000e+00> : vector<4xf32>
    %20 = vector.multi_reduction <add>, %13, %cst_13 [1] : vector<4x256xf32> to vector<4xf32>
    %21 = vector.shape_cast %20 : vector<4xf32> to vector<4x1xf32>
    %cst_14 = arith.constant 2.560000e+02 : f32
    %22 = vector.broadcast %cst_14 : f32 to vector<4x1xf32>
    %23 = arith.divf %21, %22 : vector<4x1xf32>
    %24 = vector.broadcast %23 : vector<4x1xf32> to vector<4x256xf32>
    %25 = arith.subf %13, %24 : vector<4x256xf32>
    %26 = arith.mulf %25, %25 : vector<4x256xf32>
    %cst_15 = arith.constant dense<0.000000e+00> : vector<4xf32>
    %27 = vector.multi_reduction <add>, %26, %cst_15 [1] : vector<4x256xf32> to vector<4xf32>
    %28 = vector.shape_cast %27 : vector<4xf32> to vector<4x1xf32>
    %cst_16 = arith.constant 2.560000e+02 : f32
    %29 = vector.broadcast %cst_16 : f32 to vector<4x1xf32>
    %30 = arith.divf %28, %29 : vector<4x1xf32>
    %31 = vector.broadcast %23 : vector<4x1xf32> to vector<4x256xf32>
    %32 = arith.subf %13, %31 : vector<4x256xf32>
    %cst_17 = arith.constant 9.99999997E-7 : f32
    %33 = vector.broadcast %cst_17 : f32 to vector<4x1xf32>
    %34 = arith.addf %30, %33 : vector<4x1xf32>
    %35 = math.rsqrt %34 : vector<4x1xf32>
    %36 = vector.broadcast %35 : vector<4x1xf32> to vector<4x256xf32>
    %37 = arith.mulf %32, %36 : vector<4x256xf32>
    %38 = vector.broadcast %14 : vector<1x256xf32> to vector<4x256xf32>
    %39 = arith.mulf %37, %38 : vector<4x256xf32>
    %40 = vector.broadcast %15 : vector<1x256xf32> to vector<4x256xf32>
    %41 = arith.addf %39, %40 : vector<4x256xf32>
    %42 = arith.truncf %41 : vector<4x256xf32> to vector<4x256xbf16>
    %cst_18 = arith.constant dense<0.000000e+00> : vector<4x512xf32>
    %43 = tpu.matmul %42, %16, %cst_18 {dimension_numbers = #tpu.dot_dimension_numbers<[1], [0], [0], [1], [0, 0, 1, 1], [], []>} : vector<4x256xbf16>, vector<256x512xbf16>, vector<4x512xf32> -> vector<4x512xf32>
    %44 = vector.broadcast %17 : vector<1x512xf32> to vector<4x512xf32>
    %45 = arith.addf %43, %44 : vector<4x512xf32>
    %cst_19 = arith.constant 5.000000e-01 : f32
    %46 = vector.broadcast %cst_19 : f32 to vector<4x512xf32>
    %47 = arith.mulf %46, %45 : vector<4x512xf32>
    %cst_20 = arith.constant 5.000000e-01 : f32
    %48 = vector.broadcast %cst_20 : f32 to vector<4x512xf32>
    %49 = arith.mulf %48, %45 : vector<4x512xf32>
    %50 = math.tanh %49 : vector<4x512xf32>
    %cst_21 = arith.constant 1.000000e+00 : f32
    %51 = vector.broadcast %cst_21 : f32 to vector<4x512xf32>
    %52 = arith.addf %51, %50 : vector<4x512xf32>
    %53 = arith.mulf %47, %52 : vector<4x512xf32>
    %54 = arith.truncf %53 : vector<4x512xf32> to vector<4x512xbf16>
    %cst_22 = arith.constant dense<0.000000e+00> : vector<4x256xf32>
    %55 = tpu.matmul %54, %18, %cst_22 {dimension_numbers = #tpu.dot_dimension_numbers<[1], [0], [0], [1], [0, 0, 1, 1], [], []>} : vector<4x512xbf16>, vector<512x256xbf16>, vector<4x256xf32> -> vector<4x256xf32>
    %56 = vector.broadcast %19 : vector<1x256xf32> to vector<4x256xf32>
    %57 = arith.addf %55, %56 : vector<4x256xf32>
    %58 = arith.addf %13, %57 : vector<4x256xf32>
    %59 = arith.truncf %58 : vector<4x256xf32> to vector<4x256xbf16>
    %c0_23 = arith.constant 0 : index
    %c0_24 = arith.constant 0 : index
    %60 = vector.load %arg8[%c0_23, %c0_24] : memref<256x192xbf16, #tpu.memory_space<vmem>>, vector<256x192xbf16>
    %cst_25 = arith.constant dense<0.000000e+00> : vector<4x192xf32>
    %61 = tpu.matmul %59, %60, %cst_25 {dimension_numbers = #tpu.dot_dimension_numbers<[1], [0], [0], [1], [0, 0, 1, 1], [], []>} : vector<4x256xbf16>, vector<256x192xbf16>, vector<4x192xf32> -> vector<4x192xf32>
    %62 = vector.extract_strided_slice %3 {offsets = [5, 0], sizes = [1, 192], strides = [1, 1]} : vector<16x512xf32> to vector<1x192xf32>
    %63 = vector.broadcast %62 : vector<1x192xf32> to vector<4x192xf32>
    %64 = arith.addf %61, %63 : vector<4x192xf32>
    %cst_26 = arith.constant 2.000000e+00 : f32
    %65 = vector.broadcast %cst_26 : f32 to vector<4x192xf32>
    %66 = arith.mulf %65, %64 : vector<4x192xf32>
    %cst_27 = arith.constant 1.000000e+00 : f32
    %67 = vector.broadcast %cst_27 : f32 to vector<4x192xf32>
    %68 = arith.subf %66, %67 : vector<4x192xf32>
    %69 = arith.truncf %68 : vector<4x192xf32> to vector<4x192xbf16>
    %c0_28 = arith.constant 0 : index
    %c0_29 = arith.constant 0 : index
    %70 = vector.load %arg9[%c0_28, %c0_29] : memref<192x256xbf16, #tpu.memory_space<vmem>>, vector<192x256xbf16>
    %cst_30 = arith.constant dense<0.000000e+00> : vector<4x256xf32>
    %71 = tpu.matmul %69, %70, %cst_30 {dimension_numbers = #tpu.dot_dimension_numbers<[1], [0], [0], [1], [0, 0, 1, 1], [], []>} : vector<4x192xbf16>, vector<192x256xbf16>, vector<4x256xf32> -> vector<4x256xf32>
    %72 = vector.extract_strided_slice %3 {offsets = [6, 0], sizes = [1, 256], strides = [1, 1]} : vector<16x512xf32> to vector<1x256xf32>
    %73 = vector.broadcast %72 : vector<1x256xf32> to vector<4x256xf32>
    %74 = arith.addf %71, %73 : vector<4x256xf32>
    %c0_31 = arith.constant 0 : index
    %c0_32 = arith.constant 0 : index
    %75 = vector.load %arg10[%c0_31, %c0_32] : memref<4x256xf32, #tpu.memory_space<vmem>>, vector<4x256xf32>
    %76 = arith.addf %74, %75 : vector<4x256xf32>
    %77 = vector.extract_strided_slice %3 {offsets = [7, 0], sizes = [1, 256], strides = [1, 1]} : vector<16x512xf32> to vector<1x256xf32>
    %78 = vector.extract_strided_slice %3 {offsets = [8, 0], sizes = [1, 256], strides = [1, 1]} : vector<16x512xf32> to vector<1x256xf32>
    %c0_33 = arith.constant 0 : index
    %c0_34 = arith.constant 0 : index
    %79 = vector.load %arg11[%c0_33, %c0_34] : memref<256x512xbf16, #tpu.memory_space<vmem>>, vector<256x512xbf16>
    %80 = vector.extract_strided_slice %3 {offsets = [9, 0], sizes = [1, 512], strides = [1, 1]} : vector<16x512xf32> to vector<1x512xf32>
    %c0_35 = arith.constant 0 : index
    %c0_36 = arith.constant 0 : index
    %81 = vector.load %arg12[%c0_35, %c0_36] : memref<512x256xbf16, #tpu.memory_space<vmem>>, vector<512x256xbf16>
    %82 = vector.extract_strided_slice %3 {offsets = [10, 0], sizes = [1, 256], strides = [1, 1]} : vector<16x512xf32> to vector<1x256xf32>
    %cst_37 = arith.constant dense<0.000000e+00> : vector<4xf32>
    %83 = vector.multi_reduction <add>, %76, %cst_37 [1] : vector<4x256xf32> to vector<4xf32>
    %84 = vector.shape_cast %83 : vector<4xf32> to vector<4x1xf32>
    %cst_38 = arith.constant 2.560000e+02 : f32
    %85 = vector.broadcast %cst_38 : f32 to vector<4x1xf32>
    %86 = arith.divf %84, %85 : vector<4x1xf32>
    %87 = vector.broadcast %86 : vector<4x1xf32> to vector<4x256xf32>
    %88 = arith.subf %76, %87 : vector<4x256xf32>
    %89 = arith.mulf %88, %88 : vector<4x256xf32>
    %cst_39 = arith.constant dense<0.000000e+00> : vector<4xf32>
    %90 = vector.multi_reduction <add>, %89, %cst_39 [1] : vector<4x256xf32> to vector<4xf32>
    %91 = vector.shape_cast %90 : vector<4xf32> to vector<4x1xf32>
    %cst_40 = arith.constant 2.560000e+02 : f32
    %92 = vector.broadcast %cst_40 : f32 to vector<4x1xf32>
    %93 = arith.divf %91, %92 : vector<4x1xf32>
    %94 = vector.broadcast %86 : vector<4x1xf32> to vector<4x256xf32>
    %95 = arith.subf %76, %94 : vector<4x256xf32>
    %cst_41 = arith.constant 9.99999997E-7 : f32
    %96 = vector.broadcast %cst_41 : f32 to vector<4x1xf32>
    %97 = arith.addf %93, %96 : vector<4x1xf32>
    %98 = math.rsqrt %97 : vector<4x1xf32>
    %99 = vector.broadcast %98 : vector<4x1xf32> to vector<4x256xf32>
    %100 = arith.mulf %95, %99 : vector<4x256xf32>
    %101 = vector.broadcast %77 : vector<1x256xf32> to vector<4x256xf32>
    %102 = arith.mulf %100, %101 : vector<4x256xf32>
    %103 = vector.broadcast %78 : vector<1x256xf32> to vector<4x256xf32>
    %104 = arith.addf %102, %103 : vector<4x256xf32>
    %105 = arith.truncf %104 : vector<4x256xf32> to vector<4x256xbf16>
    %cst_42 = arith.constant dense<0.000000e+00> : vector<4x512xf32>
    %106 = tpu.matmul %105, %79, %cst_42 {dimension_numbers = #tpu.dot_dimension_numbers<[1], [0], [0], [1], [0, 0, 1, 1], [], []>} : vector<4x256xbf16>, vector<256x512xbf16>, vector<4x512xf32> -> vector<4x512xf32>
    %107 = vector.broadcast %80 : vector<1x512xf32> to vector<4x512xf32>
    %108 = arith.addf %106, %107 : vector<4x512xf32>
    %cst_43 = arith.constant 5.000000e-01 : f32
    %109 = vector.broadcast %cst_43 : f32 to vector<4x512xf32>
    %110 = arith.mulf %109, %108 : vector<4x512xf32>
    %cst_44 = arith.constant 5.000000e-01 : f32
    %111 = vector.broadcast %cst_44 : f32 to vector<4x512xf32>
    %112 = arith.mulf %111, %108 : vector<4x512xf32>
    %113 = math.tanh %112 : vector<4x512xf32>
    %cst_45 = arith.constant 1.000000e+00 : f32
    %114 = vector.broadcast %cst_45 : f32 to vector<4x512xf32>
    %115 = arith.addf %114, %113 : vector<4x512xf32>
    %116 = arith.mulf %110, %115 : vector<4x512xf32>
    %117 = arith.truncf %116 : vector<4x512xf32> to vector<4x512xbf16>
    %cst_46 = arith.constant dense<0.000000e+00> : vector<4x256xf32>
    %118 = tpu.matmul %117, %81, %cst_46 {dimension_numbers = #tpu.dot_dimension_numbers<[1], [0], [0], [1], [0, 0, 1, 1], [], []>} : vector<4x512xbf16>, vector<512x256xbf16>, vector<4x256xf32> -> vector<4x256xf32>
    %119 = vector.broadcast %82 : vector<1x256xf32> to vector<4x256xf32>
    %120 = arith.addf %118, %119 : vector<4x256xf32>
    %121 = arith.addf %76, %120 : vector<4x256xf32>
    %c0_47 = arith.constant 0 : index
    %c0_48 = arith.constant 0 : index
    %122 = vector.load %arg15[%c0_47, %c0_48] : memref<1x256xf32, #tpu.memory_space<vmem>>, vector<1x256xf32>
    %cst_49 = arith.constant dense<0.000000e+00> : vector<256xf32>
    %123 = vector.multi_reduction <add>, %121, %cst_49 [0] : vector<4x256xf32> to vector<256xf32>
    %124 = vector.shape_cast %123 : vector<256xf32> to vector<1x256xf32>
    %125 = arith.addf %122, %124 : vector<1x256xf32>
    %c0_50 = arith.constant 0 : index
    %c0_51 = arith.constant 0 : index
    %126 = vector.load %arg15[%c0_50, %c0_51] : memref<1x256xf32, #tpu.memory_space<vmem>>, vector<1x256xf32>
    tpu.vector_store %arg15[%c0_50, %c0_51], %125 {strides = array<i32>} : memref<1x256xf32, #tpu.memory_space<vmem>>, vector<1x256xf32>,
    %c0_i32_52 = arith.constant 0 : i32
    %127 = arith.cmpi eq, %arg1, %c0_i32_52 : i32
    %128 = arith.extui %127 : i1 to i32
    %c0_i32_53 = arith.constant 0 : i32
    %129 = arith.cmpi ne, %128, %c0_i32_53 : i32
    scf.if %129 {
      %c0_54 = arith.constant 0 : index
      %c0_55 = arith.constant 0 : index
      %130 = vector.load %arg15[%c0_54, %c0_55] : memref<1x256xf32, #tpu.memory_space<vmem>>, vector<1x256xf32>
      %131 = vector.extract_strided_slice %3 {offsets = [11, 0], sizes = [1, 256], strides = [1, 1]} : vector<16x512xf32> to vector<1x256xf32>
      %132 = arith.addf %130, %131 : vector<1x256xf32>
      %cst_56 = arith.constant 2.000000e-01 : f32
      %133 = vector.broadcast %cst_56 : f32 to vector<1x256xf32>
      %134 = arith.mulf %132, %133 : vector<1x256xf32>
      %135 = arith.truncf %134 : vector<1x256xf32> to vector<1x256xbf16>
      %c0_57 = arith.constant 0 : index
      %c0_58 = arith.constant 0 : index
      %136 = vector.load %arg13[%c0_57, %c0_58] : memref<256x512xbf16, #tpu.memory_space<vmem>>, vector<256x512xbf16>
      %cst_59 = arith.constant dense<0.000000e+00> : vector<1x512xf32>
      %137 = tpu.matmul %135, %136, %cst_59 {dimension_numbers = #tpu.dot_dimension_numbers<[1], [0], [0], [1], [0, 0, 1, 1], [], []>} : vector<1x256xbf16>, vector<256x512xbf16>, vector<1x512xf32> -> vector<1x512xf32>
      %138 = vector.extract_strided_slice %3 {offsets = [12, 0], sizes = [1, 512], strides = [1, 1]} : vector<16x512xf32> to vector<1x512xf32>
      %139 = arith.addf %137, %138 : vector<1x512xf32>
      %cst_60 = arith.constant 0.000000e+00 : f32
      %140 = vector.broadcast %cst_60 : f32 to vector<1x512xf32>
      %141 = arith.maximumf %139, %140 : vector<1x512xf32>
      %142 = vector.extract_strided_slice %3 {offsets = [13, 0], sizes = [1, 512], strides = [1, 1]} : vector<16x512xf32> to vector<1x512xf32>
      %143 = arith.mulf %141, %142 : vector<1x512xf32>
      %cst_61 = arith.constant dense<0.000000e+00> : vector<1xf32>
      %144 = vector.multi_reduction <add>, %143, %cst_61 [1] : vector<1x512xf32> to vector<1xf32>
      %145 = vector.shape_cast %144 : vector<1xf32> to vector<1x1xf32>
      %146 = vector.extract_strided_slice %3 {offsets = [14, 0], sizes = [1, 1], strides = [1, 1]} : vector<16x512xf32> to vector<1x1xf32>
      %147 = arith.addf %145, %146 : vector<1x1xf32>
      %148 = arith.negf %147 : vector<1x1xf32>
      %149 = math.exp %148 : vector<1x1xf32>
      %cst_62 = arith.constant 1.000000e+00 : f32
      %150 = vector.broadcast %cst_62 : f32 to vector<1x1xf32>
      %151 = arith.addf %150, %149 : vector<1x1xf32>
      %152 = arith.divf %150, %151 : vector<1x1xf32>
      %c0_63 = arith.constant 0 : index
      %c0_64 = arith.constant 0 : index
      %c0_65 = arith.constant 0 : index
      %153 = vector.load %arg14[%c0_63, %c0_64, %c0_65] : memref<1x1x1xf32, #tpu.memory_space<vmem>>, vector<1x1x1xf32>
      %154 = vector.shape_cast %153 : vector<1x1x1xf32> to vector<1x1xf32>
      %155 = vector.shape_cast %152 : vector<1x1xf32> to vector<1x1x1xf32>
      tpu.vector_store %arg14[%c0_63, %c0_64, %c0_65], %155 {strides = array<i32>} : memref<1x1x1xf32, #tpu.memory_space<vmem>>, vector<1x1x1xf32>,
    } else {
    }
    return
  }
  func.func @transform_0(%arg0: i32, %arg1: i32) -> (i32, i32, i32) {
    %c0_i32 = arith.constant 0 : i32
    %c0_i32_0 = arith.constant 0 : i32
    return %arg0, %arg1, %c0_i32 : i32, i32, i32
  }
  func.func @transform_1(%arg0: i32, %arg1: i32) -> (i32, i32) {
    %c0_i32 = arith.constant 0 : i32
    %c0_i32_0 = arith.constant 0 : i32
    %c0_i32_1 = arith.constant 0 : i32
    return %c0_i32, %c0_i32_0 : i32, i32
  }
  func.func @transform_2(%arg0: i32, %arg1: i32) -> (i32, i32) {
    %c0_i32 = arith.constant 0 : i32
    %c0_i32_0 = arith.constant 0 : i32
    %c0_i32_1 = arith.constant 0 : i32
    return %c0_i32, %c0_i32_0 : i32, i32
  }
  func.func @transform_3(%arg0: i32, %arg1: i32) -> (i32, i32) {
    %c0_i32 = arith.constant 0 : i32
    %c0_i32_0 = arith.constant 0 : i32
    return %arg1, %c0_i32 : i32, i32
  }
  func.func @transform_4(%arg0: i32, %arg1: i32) -> (i32, i32) {
    %c0_i32 = arith.constant 0 : i32
    %c0_i32_0 = arith.constant 0 : i32
    %c0_i32_1 = arith.constant 0 : i32
    return %c0_i32, %c0_i32_0 : i32, i32
  }
  func.func @transform_5(%arg0: i32, %arg1: i32) -> (i32, i32) {
    %c0_i32 = arith.constant 0 : i32
    %c0_i32_0 = arith.constant 0 : i32
    %c0_i32_1 = arith.constant 0 : i32
    return %c0_i32, %c0_i32_0 : i32, i32
  }
  func.func @transform_6(%arg0: i32, %arg1: i32) -> (i32, i32) {
    %c0_i32 = arith.constant 0 : i32
    %c0_i32_0 = arith.constant 0 : i32
    %c0_i32_1 = arith.constant 0 : i32
    return %c0_i32, %c0_i32_0 : i32, i32
  }
  func.func @transform_7(%arg0: i32, %arg1: i32) -> (i32, i32) {
    %c0_i32 = arith.constant 0 : i32
    %c0_i32_0 = arith.constant 0 : i32
    %c0_i32_1 = arith.constant 0 : i32
    return %c0_i32, %c0_i32_0 : i32, i32
  }
  func.func @transform_8(%arg0: i32, %arg1: i32) -> (i32, i32) {
    %c0_i32 = arith.constant 0 : i32
    %c0_i32_0 = arith.constant 0 : i32
    return %arg1, %c0_i32 : i32, i32
  }
  func.func @transform_9(%arg0: i32, %arg1: i32) -> (i32, i32) {
    %c0_i32 = arith.constant 0 : i32
    %c0_i32_0 = arith.constant 0 : i32
    %c0_i32_1 = arith.constant 0 : i32
    return %c0_i32, %c0_i32_0 : i32, i32
  }
  func.func @transform_10(%arg0: i32, %arg1: i32) -> (i32, i32) {
    %c0_i32 = arith.constant 0 : i32
    %c0_i32_0 = arith.constant 0 : i32
    %c0_i32_1 = arith.constant 0 : i32
    return %c0_i32, %c0_i32_0 : i32, i32
  }
  func.func @transform_11(%arg0: i32, %arg1: i32) -> (i32, i32) {
    %c0_i32 = arith.constant 0 : i32
    %c0_i32_0 = arith.constant 0 : i32
    %c0_i32_1 = arith.constant 0 : i32
    return %c0_i32, %c0_i32_0 : i32, i32
  }
  func.func @transform_12(%arg0: i32, %arg1: i32) -> (i32, i32, i32) {
    %c0_i32 = arith.constant 0 : i32
    %c0_i32_0 = arith.constant 0 : i32
    %c0_i32_1 = arith.constant 0 : i32
    return %arg0, %c0_i32, %c0_i32_0 : i32, i32, i32
  }
}

</mosaic_0001>

<llo_original>
// kernel: generator_forward.1
$region0: #{generator_forward.1}
  #allocation0 [shape = 'u32[]', space=smem, size = 0x4, offset = 0x4, fixed_abs, tag = 'smem constant byte address 0x4 - core index']
  #allocation1 [shape = 'u32[72,128]{1,0:T(1,128)}', space=vmem, size = 0x9000, scoped, tag = 'internal scratch']
  #allocation2 [shape = 'f32[1,256]{1,0:T(1,128)}', space=vmem, size = 0x400, scoped, tag = 'scratch operand']
  %s0 = inlined_call_operand.vmem [shape: f32[2,4,192], index: 0, kind: input, shape index: {}]
  %s1 = inlined_call_operand.vmem [shape: f32[16,512], index: 1, kind: input, shape index: {}]
  %s2 = inlined_call_operand.vmem [shape: bf16[192,256], index: 2, kind: input, shape index: {}]
  %s3 = inlined_call_operand.vmem [shape: f32[4,256], index: 3, kind: input, shape index: {}]
  %s4 = inlined_call_operand.vmem [shape: bf16[256,512], index: 4, kind: input, shape index: {}]
  %s5 = inlined_call_operand.hbm [shape: bf16[512,256], index: 5, kind: input, shape index: {}]
  %s6 = inlined_call_operand.vmem [shape: bf16[256,192], index: 6, kind: input, shape index: {}]
  %s7 = inlined_call_operand.vmem [shape: bf16[192,256], index: 7, kind: input, shape index: {}]
  %s8 = inlined_call_operand.vmem [shape: f32[4,256], index: 8, kind: input, shape index: {}]
  %s9 = inlined_call_operand.hbm [shape: bf16[256,512], index: 9, kind: input, shape index: {}]
  %s10 = inlined_call_operand.hbm [shape: bf16[512,256], index: 10, kind: input, shape index: {}]
  %s11 = inlined_call_operand.hbm [shape: bf16[256,512], index: 11, kind: input, shape index: {}]
  %s12 = inlined_call_operand.vmem [shape: f32[2,1,1], index: 12, kind: output, shape index: {}]
  %s13 = sld [smem:[#allocation0]]
  $region105: #{generator_forward.1} parent=0
    _
  %s15 = ssub.s32 1, %s13
  %s16 = scalar_select 0, %s15, %s13
  $region1: #{generator_forward.1} parent=0
    #allocation3 [shape = 'u8[262144]{0}', space=vmem, size = 0x40000, scoped, tag = 'input window, operand 5, single buffered']
    #allocation4 [shape = 's32[2]{0}', space=sflag, size = 0x8, scoped, tag = 'scoped memory for generator_forward.1']
    #allocation5 [shape = 'u8[262144]{0}', space=vmem, size = 0x40000, scoped, tag = 'input window, operand 9, single buffered']
    #allocation6 [shape = 's32[1]{0}', space=sflag, size = 0x4, scoped, tag = 'scoped memory for generator_forward.1']
    #allocation7 [shape = 'u8[262144]{0}', space=vmem, size = 0x40000, scoped, tag = 'input window, operand 10, single buffered']
    #allocation8 [shape = 'u8[262144]{0}', space=vmem, size = 0x40000, scoped, tag = 'input window, operand 11, single buffered']
    #allocation9 [shape = 's32[1]{0}', space=sflag, size = 0x4, scoped, tag = 'scoped memory for generator_forward.1']
    %17 = vsyncpa [#allocation4], 0
    %18 = vsyncpa [#allocation6], 0
    %19 = vsyncpa [#allocation9], 0
    loop: start=0, step=1, limit=4
    $region2: #{generator_forward.1} parent=1 // loop_pre_header
      _
    $region3: #{generator_forward.1} parent=1 // loop_header
      %s21 = sphi 0, %s25
      %p22 = scmp.ge.s32.totalorder %s21, 4
      %s28 = sphi 0, %s40
      %s29 = sphi 0, %s36
      %s30 = sphi 0, %s28
      %s31 = sphi 0, %s29
      %s32 = sphi 0, %s30
      %s33 = sphi 0, %s31
      %s45 = sphi 0, %s47
      %s48 = sphi 0, %s45
      %s49 = sphi 0, %s48
      %s65 = sphi 0, %s49
      %s69 = sphi 0, %s69
      %s71 = sphi 0, %s69
      %s72 = sphi 0, %s71
      %s86 = sphi 0, %s72
      %s90 = sphi 0, %s90
      %s92 = sphi 0, %s90
      %s93 = sphi 0, %s92
      %s107 = sphi 0, %s93
      %s113 = sphi 0, %s115
      %s116 = sphi 0, %s113
      %s117 = sphi 0, %s116
      %s133 = sphi 0, %s117
      %s137 = sphi 0, %s137
      %s139 = sphi 0, %s137
      %s140 = sphi 0, %s139
      %s154 = sphi 0, %s140
      %s158 = sphi 0, %s158
      %s160 = sphi 0, %s158
      %s161 = sphi 0, %s160
      %s175 = sphi 0, %s161
      %s179 = sphi 0, %s179
      %s181 = sphi 0, %s179
      %s182 = sphi 0, %s181
      %s196 = sphi 0, %s182
      %s200 = sphi 0, %s200
      %s202 = sphi 0, %s200
      %s203 = sphi 0, %s202
      %s217 = sphi 0, %s203
      %s223 = sphi 0, %s225
      %s226 = sphi 0, %s223
      %s227 = sphi 0, %s226
      %s243 = sphi 0, %s227
      %s247 = sphi 0, %s247
      %s249 = sphi 0, %s247
      %s250 = sphi 0, %s249
      %s264 = sphi 0, %s250
      %s268 = sphi 0, %s268
      %s270 = sphi 0, %s268
      %s271 = sphi 0, %s270
      %s285 = sphi 0, %s271
      %s289 = sphi 0, %s289
      %s291 = sphi 0, %s289
      %s292 = sphi 0, %s291
      %s306 = sphi 0, %s292
      %s312 = sphi 0, %s314
      %s315 = sphi 0, %s312
      %s316 = sphi 0, %s315
      %s332 = sphi 0, %s316
    $region4: #{generator_forward.1} parent=1 // loop_header_branch
      %24 = sbr.rel (%p22) target = $region8
    $region5: #{generator_forward.1} parent=1 // loop_body
      %s26 = ssub.s32 %s21, 1
      %s27 = ssub.s32 %s21, 2
      %s34 = sadd.s32 1, %s29
      %p35 = scmp.ge.s32.totalorder %s34, 1
      %s36 = scalar_select %p35, 0, %s34
      %s37 = sadd.s32 1, %s28
      %s38 = scalar_select %p35, %s37, %s28
      %p39 = scmp.ge.s32.totalorder %s38, 2
      %s40 = scalar_select %p39, 0, %s38
      %s41 = ssub.s32 %s28, %s40
      %s42 = ssub.s32 %s29, %s36
      %s43 = sor.u32 %s41, %s42
      %p44 = scmp.eq.s32.totalorder %s43, 0
      %s46 = sadd.s32 %s45, 1
      %s47 = scalar_select %p44, %s45, %s46
      %p50 = pneg %p44
      %p51 = scmp.eq.s32.totalorder %s21, 1
      %p52 = por %p50, %p51
      %p53 = scmp.ne.s32.totalorder %s45, %s48
      %p54 = scmp.eq.s32.totalorder %s21, 0
      %p55 = por %p53, %p54
      %p56 = scmp.ne.s32.totalorder %s45, %s48
      %p57 = scmp.eq.s32.totalorder %s26, 1
      %p58 = por %p56, %p57
      %p59 = scmp.ne.s32.totalorder %s48, %s49
      %p60 = scmp.eq.s32.totalorder %s26, 0
      %p61 = por %p59, %p60
      %p62 = scmp.ne.s32.totalorder %s48, %s49
      %p63 = scmp.eq.s32.totalorder %s27, 1
      %p64 = por %p62, %p63
      %p66 = scmp.ne.s32.totalorder %s49, %s65
      %p67 = scmp.eq.s32.totalorder %s27, 0
      %p68 = por %p66, %p67
      %s70 = sadd.s32 %s69, 1
      %p73 = scmp.eq.s32.totalorder %s21, 1
      %p74 = scmp.ne.s32.totalorder %s69, %s71
      %p75 = scmp.eq.s32.totalorder %s21, 0
      %p76 = por %p74, %p75
      %p77 = scmp.ne.s32.totalorder %s69, %s71
      %p78 = scmp.eq.s32.totalorder %s26, 1
      %p79 = por %p77, %p78
      %p80 = scmp.ne.s32.totalorder %s71, %s72
      %p81 = scmp.eq.s32.totalorder %s26, 0
      %p82 = por %p80, %p81
      %p83 = scmp.ne.s32.totalorder %s71, %s72
      %p84 = scmp.eq.s32.totalorder %s27, 1
      %p85 = por %p83, %p84
      %p87 = scmp.ne.s32.totalorder %s72, %s86
      %p88 = scmp.eq.s32.totalorder %s27, 0
      %p89 = por %p87, %p88
      %s91 = sadd.s32 %s90, 1
      %p94 = scmp.eq.s32.totalorder %s21, 1
      %p95 = scmp.ne.s32.totalorder %s90, %s92
      %p96 = scmp.eq.s32.totalorder %s21, 0
      %p97 = por %p95, %p96
      %p98 = scmp.ne.s32.totalorder %s90, %s92
      %p99 = scmp.eq.s32.totalorder %s26, 1
      %p100 = por %p98, %p99
      %p101 = scmp.ne.s32.totalorder %s92, %s93
      %p102 = scmp.eq.s32.totalorder %s26, 0
      %p103 = por %p101, %p102
      %p104 = scmp.ne.s32.totalorder %s92, %s93
      %p105 = scmp.eq.s32.totalorder %s27, 1
      %p106 = por %p104, %p105
      %p108 = scmp.ne.s32.totalorder %s93, %s107
      %p109 = scmp.eq.s32.totalorder %s27, 0
      %p110 = por %p108, %p109
      %s111 = ssub.s32 %s29, %s36
      %p112 = scmp.eq.s32.totalorder %s111, 0
      %s114 = sadd.s32 %s113, 1
      %s115 = scalar_select %p112, %s113, %s114
      %p118 = pneg %p112
      %p119 = scmp.eq.s32.totalorder %s21, 1
      %p120 = por %p118, %p119
      %p121 = scmp.ne.s32.totalorder %s113, %s116
      %p122 = scmp.eq.s32.totalorder %s21, 0
      %p123 = por %p121, %p122
      %p124 = scmp.ne.s32.totalorder %s113, %s116
      %p125 = scmp.eq.s32.totalorder %s26, 1
      %p126 = por %p124, %p125
      %p127 = scmp.ne.s32.totalorder %s116, %s117
      %p128 = scmp.eq.s32.totalorder %s26, 0
      %p129 = por %p127, %p128
      %p130 = scmp.ne.s32.totalorder %s116, %s117
      %p131 = scmp.eq.s32.totalorder %s27, 1
      %p132 = por %p130, %p131
      %p134 = scmp.ne.s32.totalorder %s117, %s133
      %p135 = scmp.eq.s32.totalorder %s27, 0
      %p136 = por %p134, %p135
      %s138 = sadd.s32 %s137, 1
      %p141 = scmp.eq.s32.totalorder %s21, 1
      %p142 = scmp.ne.s32.totalorder %s137, %s139
      %p143 = scmp.eq.s32.totalorder %s21, 0
      %p144 = por %p142, %p143
      %p145 = scmp.ne.s32.totalorder %s137, %s139
      %p146 = scmp.eq.s32.totalorder %s26, 1
      %p147 = por %p145, %p146
      %p148 = scmp.ne.s32.totalorder %s139, %s140
      %p149 = scmp.eq.s32.totalorder %s26, 0
      %p150 = por %p148, %p149
      %p151 = scmp.ne.s32.totalorder %s139, %s140
      %p152 = scmp.eq.s32.totalorder %s27, 1
      %p153 = por %p151, %p152
      %p155 = scmp.ne.s32.totalorder %s140, %s154
      %p156 = scmp.eq.s32.totalorder %s27, 0
      %p157 = por %p155, %p156
      %s159 = sadd.s32 %s158, 1
      %p162 = scmp.eq.s32.totalorder %s21, 1
      %p163 = scmp.ne.s32.totalorder %s158, %s160
      %p164 = scmp.eq.s32.totalorder %s21, 0
      %p165 = por %p163, %p164
      %p166 = scmp.ne.s32.totalorder %s158, %s160
      %p167 = scmp.eq.s32.totalorder %s26, 1
      %p168 = por %p166, %p167
      %p169 = scmp.ne.s32.totalorder %s160, %s161
      %p170 = scmp.eq.s32.totalorder %s26, 0
      %p171 = por %p169, %p170
      %p172 = scmp.ne.s32.totalorder %s160, %s161
      %p173 = scmp.eq.s32.totalorder %s27, 1
      %p174 = por %p172, %p173
      %p176 = scmp.ne.s32.totalorder %s161, %s175
      %p177 = scmp.eq.s32.totalorder %s27, 0
      %p178 = por %p176, %p177
      %s180 = sadd.s32 %s179, 1
      %p183 = scmp.eq.s32.totalorder %s21, 1
      %p184 = scmp.ne.s32.totalorder %s179, %s181
      %p185 = scmp.eq.s32.totalorder %s21, 0
      %p186 = por %p184, %p185
      %p187 = scmp.ne.s32.totalorder %s179, %s181
      %p188 = scmp.eq.s32.totalorder %s26, 1
      %p189 = por %p187, %p188
      %p190 = scmp.ne.s32.totalorder %s181, %s182
      %p191 = scmp.eq.s32.totalorder %s26, 0
      %p192 = por %p190, %p191
      %p193 = scmp.ne.s32.totalorder %s181, %s182
      %p194 = scmp.eq.s32.totalorder %s27, 1
      %p195 = por %p193, %p194
      %p197 = scmp.ne.s32.totalorder %s182, %s196
      %p198 = scmp.eq.s32.totalorder %s27, 0
      %p199 = por %p197, %p198
      %s201 = sadd.s32 %s200, 1
      %p204 = scmp.eq.s32.totalorder %s21, 1
      %p205 = scmp.ne.s32.totalorder %s200, %s202
      %p206 = scmp.eq.s32.totalorder %s21, 0
      %p207 = por %p205, %p206
      %p208 = scmp.ne.s32.totalorder %s200, %s202
      %p209 = scmp.eq.s32.totalorder %s26, 1
      %p210 = por %p208, %p209
      %p211 = scmp.ne.s32.totalorder %s202, %s203
      %p212 = scmp.eq.s32.totalorder %s26, 0
      %p213 = por %p211, %p212
      %p214 = scmp.ne.s32.totalorder %s202, %s203
      %p215 = scmp.eq.s32.totalorder %s27, 1
      %p216 = por %p214, %p215
      %p218 = scmp.ne.s32.totalorder %s203, %s217
      %p219 = scmp.eq.s32.totalorder %s27, 0
      %p220 = por %p218, %p219
      %s221 = ssub.s32 %s29, %s36
      %p222 = scmp.eq.s32.totalorder %s221, 0
      %s224 = sadd.s32 %s223, 1
      %s225 = scalar_select %p222, %s223, %s224
      %p228 = pneg %p222
      %p229 = scmp.eq.s32.totalorder %s21, 1
      %p230 = por %p228, %p229
      %p231 = scmp.ne.s32.totalorder %s223, %s226
      %p232 = scmp.eq.s32.totalorder %s21, 0
      %p233 = por %p231, %p232
      %p234 = scmp.ne.s32.totalorder %s223, %s226
      %p235 = scmp.eq.s32.totalorder %s26, 1
      %p236 = por %p234, %p235
      %p237 = scmp.ne.s32.totalorder %s226, %s227
      %p238 = scmp.eq.s32.totalorder %s26, 0
      %p239 = por %p237, %p238
      %p240 = scmp.ne.s32.totalorder %s226, %s227
      %p241 = scmp.eq.s32.totalorder %s27, 1
      %p242 = por %p240, %p241
      %p244 = scmp.ne.s32.totalorder %s227, %s243
      %p245 = scmp.eq.s32.totalorder %s27, 0
      %p246 = por %p244, %p245
      %s248 = sadd.s32 %s247, 1
      %p251 = scmp.eq.s32.totalorder %s21, 1
      %p252 = scmp.ne.s32.totalorder %s247, %s249
      %p253 = scmp.eq.s32.totalorder %s21, 0
      %p254 = por %p252, %p253
      %p255 = scmp.ne.s32.totalorder %s247, %s249
      %p256 = scmp.eq.s32.totalorder %s26, 1
      %p257 = por %p255, %p256
      %p258 = scmp.ne.s32.totalorder %s249, %s250
      %p259 = scmp.eq.s32.totalorder %s26, 0
      %p260 = por %p258, %p259
      %p261 = scmp.ne.s32.totalorder %s249, %s250
      %p262 = scmp.eq.s32.totalorder %s27, 1
      %p263 = por %p261, %p262
      %p265 = scmp.ne.s32.totalorder %s250, %s264
      %p266 = scmp.eq.s32.totalorder %s27, 0
      %p267 = por %p265, %p266
      %s269 = sadd.s32 %s268, 1
      %p272 = scmp.eq.s32.totalorder %s21, 1
      %p273 = scmp.ne.s32.totalorder %s268, %s270
      %p274 = scmp.eq.s32.totalorder %s21, 0
      %p275 = por %p273, %p274
      %p276 = scmp.ne.s32.totalorder %s268, %s270
      %p277 = scmp.eq.s32.totalorder %s26, 1
      %p278 = por %p276, %p277
      %p279 = scmp.ne.s32.totalorder %s270, %s271
      %p280 = scmp.eq.s32.totalorder %s26, 0
      %p281 = por %p279, %p280
      %p282 = scmp.ne.s32.totalorder %s270, %s271
      %p283 = scmp.eq.s32.totalorder %s27, 1
      %p284 = por %p282, %p283
      %p286 = scmp.ne.s32.totalorder %s271, %s285
      %p287 = scmp.eq.s32.totalorder %s27, 0
      %p288 = por %p286, %p287
      %s290 = sadd.s32 %s289, 1
      %p293 = scmp.eq.s32.totalorder %s21, 1
      %p294 = scmp.ne.s32.totalorder %s289, %s291
      %p295 = scmp.eq.s32.totalorder %s21, 0
      %p296 = por %p294, %p295
      %p297 = scmp.ne.s32.totalorder %s289, %s291
      %p298 = scmp.eq.s32.totalorder %s26, 1
      %p299 = por %p297, %p298
      %p300 = scmp.ne.s32.totalorder %s291, %s292
      %p301 = scmp.eq.s32.totalorder %s26, 0
      %p302 = por %p300, %p301
      %p303 = scmp.ne.s32.totalorder %s291, %s292
      %p304 = scmp.eq.s32.totalorder %s27, 1
      %p305 = por %p303, %p304
      %p307 = scmp.ne.s32.totalorder %s292, %s306
      %p308 = scmp.eq.s32.totalorder %s27, 0
      %p309 = por %p307, %p308
      %s310 = ssub.s32 %s28, %s40
      %p311 = scmp.eq.s32.totalorder %s310, 0
      %s313 = sadd.s32 %s312, 1
      %s314 = scalar_select %p311, %s312, %s313
      %p317 = pneg %p311
      %p318 = scmp.eq.s32.totalorder %s21, 1
      %p319 = por %p317, %p318
      %p320 = scmp.ne.s32.totalorder %s312, %s315
      %p321 = scmp.eq.s32.totalorder %s21, 0
      %p322 = por %p320, %p321
      %p323 = scmp.ne.s32.totalorder %s312, %s315
      %p324 = scmp.eq.s32.totalorder %s26, 1
      %p325 = por %p323, %p324
      %p326 = scmp.ne.s32.totalorder %s315, %s316
      %p327 = scmp.eq.s32.totalorder %s26, 0
      %p328 = por %p326, %p327
      %p329 = scmp.ne.s32.totalorder %s315, %s316
      %p330 = scmp.eq.s32.totalorder %s27, 1
      %p331 = por %p329, %p330
      %p333 = scmp.ne.s32.totalorder %s316, %s332
      %p334 = scmp.eq.s32.totalorder %s27, 0
      %p335 = por %p333, %p334
      %p336 = scmp.le.s32.totalorder 1, %s21
      %p337 = scmp.lt.s32.totalorder %s21, 3
      %p338 = pnand %p336, %p337
      %p339 = pneg %p338
      // Predicated region
      $region9: #{generator_forward.1} parent=5 // pred_check
        _
      $region10: #{generator_forward.1} parent=5 // pred_check_branch
        %341 = sbr.rel (%p338) target = $region12
      $region11: #{generator_forward.1} parent=5 // pred_region
        %s342 = ssub.s32 %s21, 1
        // Predicated region
        $region13: #{generator_forward.1} parent=11 // pred_check
          %p343 = pneg %p82
        $region14: #{generator_forward.1} parent=11 // pred_check_branch
          %345 = sbr.rel (%p343) target = $region16
        $region15: #{generator_forward.1} parent=11 // pred_region
          _
        $region16: #{generator_forward.1} parent=11 // pred_fallthru
          _
        // Predicated region
        $region17: #{generator_forward.1} parent=11 // pred_check
          %p346 = pneg %p103
        $region18: #{generator_forward.1} parent=11 // pred_check_branch
          %348 = sbr.rel (%p346) target = $region20
        $region19: #{generator_forward.1} parent=11 // pred_region
          _
        $region20: #{generator_forward.1} parent=11 // pred_fallthru
          _
        // Predicated region
        $region21: #{generator_forward.1} parent=11 // pred_check
          %p349 = pneg %p129
        $region22: #{generator_forward.1} parent=11 // pred_check_branch
          %351 = sbr.rel (%p349) target = $region24
        $region23: #{generator_forward.1} parent=11 // pred_region
          %p352 = scmp.lt.s32.totalorder %s31, 0
          %s353 = scalar_select %p352, %s31, 0
          %s354 = smul.addr %s353, 2
          %s355 = smul.addr %s354, 4
          %s356 = scalar_lea.vmem %s3, %s355
        $region24: #{generator_forward.1} parent=11 // pred_fallthru
          _
        // Predicated region
        $region25: #{generator_forward.1} parent=11 // pred_check
          %p357 = pneg %p150
        $region26: #{generator_forward.1} parent=11 // pred_check_branch
          %359 = sbr.rel (%p357) target = $region28
        $region27: #{generator_forward.1} parent=11 // pred_region
          _
        $region28: #{generator_forward.1} parent=11 // pred_fallthru
          _
        // Predicated region
        $region29: #{generator_forward.1} parent=11 // pred_check
          %p360 = pneg %p171
        $region30: #{generator_forward.1} parent=11 // pred_check_branch
          %362 = sbr.rel (%p360) target = $region32
        $region31: #{generator_forward.1} parent=11 // pred_region
          %364 = vsyncadd [#allocation4], 0
          %s365 = sshll.u32 %s5, 4
          %s366 = int_to_ptr.hbm [resolvable:$true] %s365
          %s367 = sshll.u32 [#allocation3], 4
          %s368 = int_to_ptr.vmem [resolvable:$true] %s367
          %373 = dma.hbm_to_vmem [thread:$0]  %s366, 8192, %s368, [#allocation4], 128, 128, 8
        $region32: #{generator_forward.1} parent=11 // pred_fallthru
          _
        // Predicated region
        $region33: #{generator_forward.1} parent=11 // pred_check
          %p374 = pneg %p192
        $region34: #{generator_forward.1} parent=11 // pred_check_branch
          %376 = sbr.rel (%p374) target = $region36
        $region35: #{generator_forward.1} parent=11 // pred_region
          _
        $region36: #{generator_forward.1} parent=11 // pred_fallthru
          _
        // Predicated region
        $region37: #{generator_forward.1} parent=11 // pred_check
          %p377 = pneg %p213
        $region38: #{generator_forward.1} parent=11 // pred_check_branch
          %379 = sbr.rel (%p377) target = $region40
        $region39: #{generator_forward.1} parent=11 // pred_region
          _
        $region40: #{generator_forward.1} parent=11 // pred_fallthru
          _
        // Predicated region
        $region41: #{generator_forward.1} parent=11 // pred_check
          %p380 = pneg %p239
        $region42: #{generator_forward.1} parent=11 // pred_check_branch
          %382 = sbr.rel (%p380) target = $region44
        $region43: #{generator_forward.1} parent=11 // pred_region
          %p383 = scmp.lt.s32.totalorder %s31, 0
          %s384 = scalar_select %p383, %s31, 0
          %s385 = smul.addr %s384, 2
          %s386 = smul.addr %s385, 4
          %s387 = scalar_lea.vmem %s8, %s386
        $region44: #{generator_forward.1} parent=11 // pred_fallthru
          _
        // Predicated region
        $region45: #{generator_forward.1} parent=11 // pred_check
          %p388 = pneg %p260
        $region46: #{generator_forward.1} parent=11 // pred_check_branch
          %390 = sbr.rel (%p388) target = $region48
        $region47: #{generator_forward.1} parent=11 // pred_region
          %392 = vsyncadd [#allocation6], 0
          %s393 = sshll.u32 %s9, 4
          %s394 = int_to_ptr.hbm [resolvable:$true] %s393
          %s395 = sshll.u32 [#allocation5], 4
          %s396 = int_to_ptr.vmem [resolvable:$true] %s395
          %401 = dma.hbm_to_vmem [thread:$0]  %s394, 8192, %s396, [#allocation6], 256, 256, 16
        $region48: #{generator_forward.1} parent=11 // pred_fallthru
          _
        // Predicated region
        $region49: #{generator_forward.1} parent=11 // pred_check
          %p402 = pneg %p281
        $region50: #{generator_forward.1} parent=11 // pred_check_branch
          %404 = sbr.rel (%p402) target = $region52
        $region51: #{generator_forward.1} parent=11 // pred_region
          %406 = vsyncadd [#allocation6], 0
          %s407 = sshll.u32 %s10, 4
          %s408 = int_to_ptr.hbm [resolvable:$true] %s407
          %s409 = sshll.u32 [#allocation7], 4
          %s410 = int_to_ptr.vmem [resolvable:$true] %s409
          %415 = dma.hbm_to_vmem [thread:$0]  %s408, 8192, %s410, [#allocation6], 128, 128, 8
        $region52: #{generator_forward.1} parent=11 // pred_fallthru
          _
        // Predicated region
        $region53: #{generator_forward.1} parent=11 // pred_check
          %p416 = pneg %p302
        $region54: #{generator_forward.1} parent=11 // pred_check_branch
          %418 = sbr.rel (%p416) target = $region56
        $region55: #{generator_forward.1} parent=11 // pred_region
          %420 = vsyncadd [#allocation9], 0
          %s421 = sshll.u32 %s11, 4
          %s422 = int_to_ptr.hbm [resolvable:$true] %s421
          %s423 = sshll.u32 [#allocation8], 4
          %s424 = int_to_ptr.vmem [resolvable:$true] %s423
          %429 = dma.hbm_to_vmem [thread:$0]  %s422, 8192, %s424, [#allocation9], 256, 256, 16
        $region56: #{generator_forward.1} parent=11 // pred_fallthru
          _
      $region12: #{generator_forward.1} parent=5 // pred_fallthru
        _
      %p430 = scmp.lt.s32.totalorder %s21, 2
      // Predicated region
      $region57: #{generator_forward.1} parent=5 // pred_check
        %p431 = pneg %p430
      $region58: #{generator_forward.1} parent=5 // pred_check_branch
        %433 = sbr.rel (%p431) target = $region60
      $region59: #{generator_forward.1} parent=5 // pred_region
        // Predicated region
        $region61: #{generator_forward.1} parent=59 // pred_check
          %p434 = pneg %p55
        $region62: #{generator_forward.1} parent=59 // pred_check_branch
          %436 = sbr.rel (%p434) target = $region64
        $region63: #{generator_forward.1} parent=59 // pred_region
          %p437 = scmp.lt.s32.totalorder %s28, 1
          %s438 = scalar_select %p437, %s28, 1
          %p439 = scmp.lt.s32.totalorder %s29, 0
          %s440 = scalar_select %p439, %s29, 0
          %s441 = smul.addr %s440, 2
          %s442 = smul.addr %s438, 2
          %s443 = sadd.s32 %s441, %s442
          %s444 = smul.addr %s443, 4
          %s445 = scalar_lea.vmem %s0, %s444
        $region64: #{generator_forward.1} parent=59 // pred_fallthru
          _
      $region60: #{generator_forward.1} parent=5 // pred_fallthru
        _
      %p446 = scmp.le.s32.totalorder 1, %s21
      %p447 = scmp.lt.s32.totalorder %s21, 3
      %p448 = pnand %p446, %p447
      %p449 = pneg %p448
      // Predicated region
      $region65: #{generator_forward.1} parent=5 // pred_check
        _
      $region66: #{generator_forward.1} parent=5 // pred_check_branch
        %451 = sbr.rel (%p448) target = $region68
      $region67: #{generator_forward.1} parent=5 // pred_region
        %s452 = ssub.s32 %s21, 1
        // Predicated region
        $region69: #{generator_forward.1} parent=67 // pred_check
          %p453 = pneg %p171
        $region70: #{generator_forward.1} parent=67 // pred_check_branch
          %455 = sbr.rel (%p453) target = $region72
        $region71: #{generator_forward.1} parent=67 // pred_region
          %457 = dma.done [#allocation4], 8192
        $region72: #{generator_forward.1} parent=67 // pred_fallthru
          _
        // Predicated region
        $region73: #{generator_forward.1} parent=67 // pred_check
          %p458 = pneg %p260
        $region74: #{generator_forward.1} parent=67 // pred_check_branch
          %460 = sbr.rel (%p458) target = $region76
        $region75: #{generator_forward.1} parent=67 // pred_region
          %462 = dma.done [#allocation6], 8192
        $region76: #{generator_forward.1} parent=67 // pred_fallthru
          _
        // Predicated region
        $region77: #{generator_forward.1} parent=67 // pred_check
          %p463 = pneg %p281
        $region78: #{generator_forward.1} parent=67 // pred_check_branch
          %465 = sbr.rel (%p463) target = $region80
        $region79: #{generator_forward.1} parent=67 // pred_region
          %467 = dma.done [#allocation6], 8192
        $region80: #{generator_forward.1} parent=67 // pred_fallthru
          _
        // Predicated region
        $region81: #{generator_forward.1} parent=67 // pred_check
          %p468 = pneg %p302
        $region82: #{generator_forward.1} parent=67 // pred_check_branch
          %470 = sbr.rel (%p468) target = $region84
        $region83: #{generator_forward.1} parent=67 // pred_region
          %472 = dma.done [#allocation9], 8192
        $region84: #{generator_forward.1} parent=67 // pred_fallthru
          _
        %p473 = scmp.lt.s32.totalorder %s30, 1
        %s474 = scalar_select %p473, %s30, 1
        %p475 = scmp.lt.s32.totalorder %s31, 0
        %s476 = scalar_select %p475, %s31, 0
        %s477 = smul.addr %s476, 2
        %s478 = smul.addr %s474, 2
        %s479 = sadd.s32 %s477, %s478
        %s480 = smul.addr %s479, 4
        %s481 = scalar_lea.vmem %s0, %s480
        %p482 = pneg %p61
        %p483 = pneg %p58
        %p484 = pneg %p82
        %p485 = pneg %p79
        %p486 = pneg %p103
        %p487 = pneg %p100
        %p488 = scmp.lt.s32.totalorder %s31, 0
        %s489 = scalar_select %p488, %s31, 0
        %s490 = smul.addr %s489, 2
        %s491 = smul.addr %s490, 4
        %s492 = scalar_lea.vmem %s3, %s491
        %p493 = pneg %p129
        %p494 = pneg %p126
        %p495 = pneg %p150
        %p496 = pneg %p147
        %p497 = pneg %p171
        %p498 = pneg %p168
        %p499 = pneg %p192
        %p500 = pneg %p189
        %p501 = pneg %p213
        %p502 = pneg %p210
        %p503 = scmp.lt.s32.totalorder %s31, 0
        %s504 = scalar_select %p503, %s31, 0
        %s505 = smul.addr %s504, 2
        %s506 = smul.addr %s505, 4
        %s507 = scalar_lea.vmem %s8, %s506
        %p508 = pneg %p239
        %p509 = pneg %p236
        %p510 = pneg %p260
        %p511 = pneg %p257
        %p512 = pneg %p281
        %p513 = pneg %p278
        %p514 = pneg %p302
        %p515 = pneg %p299
        %p516 = pneg %p328
        %p517 = pneg %p325
        %p518 = scmp.lt.s32.totalorder %s30, 1
        %s519 = scalar_select %p518, %s30, 1
        %s520 = scalar_lea.vmem %s12, %s519
        %p521 = scmp.lt.s32.totalorder %s30, 1
        %s522 = scalar_select %p521, %s30, 1
        %p523 = scmp.lt.s32.totalorder %s31, 0
        %s524 = scalar_select %p523, %s31, 0
        %s525 = smul.addr %s524, 2
        %s526 = smul.addr %s522, 2
        %s527 = sadd.s32 %s525, %s526
        %s528 = smul.addr %s527, 4
        %s529 = scalar_lea.vmem %s0, %s528
        %p530 = scmp.lt.s32.totalorder %s31, 0
        %s531 = scalar_select %p530, %s31, 0
        %s532 = smul.addr %s531, 2
        %s533 = smul.addr %s532, 4
        %s534 = scalar_lea.vmem %s3, %s533
        %p535 = scmp.lt.s32.totalorder %s31, 0
        %s536 = scalar_select %p535, %s31, 0
        %s537 = smul.addr %s536, 2
        %s538 = smul.addr %s537, 4
        %s539 = scalar_lea.vmem %s8, %s538
        %p540 = scmp.lt.s32.totalorder %s30, 1
        %s541 = scalar_select %p540, %s30, 1
        %s542 = scalar_lea.vmem %s12, %s541
        %p544 = scmp.eq.s32.totalorder %s31, 0
        // Predicated region
        $region85: #{generator_forward.1} parent=67 // pred_check
          %p545 = pneg %p544
        $region86: #{generator_forward.1} parent=67 // pred_check_branch
          %547 = sbr.rel (%p545) target = $region88
        $region87: #{generator_forward.1} parent=67 // pred_region
          %v548 = vlaneseq
          %vm549 = vcmp.ge.s32.totalorder %v548, 0
          %vm550 = vcmp.lt.s32.totalorder %v548, 256
          %vm551 = vmand %vm549, %vm550
          %552 = vst.msk [vmem:[#allocation2] sm:$0x3] %vm551, 0.0
        $region88: #{generator_forward.1} parent=67 // pred_fallthru
          _
        %v553 = vld [vmem:[%s1] sm:$0xff]
        %v554 = vld [vmem:[%s1 + $0x8] sm:$0xff]
        %v555 = vld [vmem:[%s1 + $0x10] sm:$0xff]
        %v556 = vld [vmem:[%s1 + $0x18] sm:$0xff]
        %v557 = vld [vmem:[%s1 + $0x20] sm:$0xff]
        %v558 = vld [vmem:[%s1 + $0x28] sm:$0xff]
        %v559 = vld [vmem:[%s1 + $0x30] sm:$0xff]
        %v560 = vld [vmem:[%s1 + $0x38] sm:$0xff]
        %v561 = vld [vmem:[%s529] sm:$0xff]
        %563 = vst [vmem:[#allocation1] ss:$2 sm:$0xff] %v561
        %v564 = vld.sshfl [vmem:[#allocation1] sm:$0xff pattern:$0x75316420]
        %v565 = vld.sshfl [vmem:[#allocation1 + $0x8] sm:$0xff pattern:$0x75316420]
        %v568 = vpack.c.bf16 %v564, %v564
        %v569 = vpack.c.bf16 %v565, %v565
        %v570 = vld [vmem:[%s2] sm:$0xff]
        %v571 = vld [vmem:[%s2 + $0x8] sm:$0xff]
        %v572 = vld [vmem:[%s2 + $0x10] sm:$0xff]
        %v573 = vld [vmem:[%s2 + $0x18] sm:$0xff]
        %v574 = vld [vmem:[%s2 + $0x20] sm:$0xff]
        %v575 = vld [vmem:[%s2 + $0x28] sm:$0xff]
        %v576 = vld [vmem:[%s2 + $0x30] sm:$0xff]
        %v577 = vld [vmem:[%s2 + $0x38] sm:$0xff]
        %v578 = vld [vmem:[%s2 + $0x40] sm:$0xff]
        %v579 = vld [vmem:[%s2 + $0x48] sm:$0xff]
        %v580 = vld [vmem:[%s2 + $0x50] sm:$0xff]
        %v581 = vld [vmem:[%s2 + $0x58] sm:$0xff]
        %v582 = vld [vmem:[%s2 + $0x60] sm:$0xff]
        %v583 = vld [vmem:[%s2 + $0x68] sm:$0xff]
        %v584 = vld [vmem:[%s2 + $0x70] sm:$0xff]
        %v585 = vld [vmem:[%s2 + $0x78] sm:$0xff]
        %v586 = vld [vmem:[%s2 + $0x80] sm:$0xff]
        %v587 = vld [vmem:[%s2 + $0x88] sm:$0xff]
        %v588 = vld [vmem:[%s2 + $0x90] sm:$0xff]
        %v589 = vld [vmem:[%s2 + $0x98] sm:$0xff]
        %v590 = vld [vmem:[%s2 + $0xa0] sm:$0xff]
        %v591 = vld [vmem:[%s2 + $0xa8] sm:$0xff]
        %v592 = vld [vmem:[%s2 + $0xb0] sm:$0xff]
        %v593 = vld [vmem:[%s2 + $0xb8] sm:$0xff]
        %v594 = vperm.slane %v553, 0
        %v595 = vperm.slane %v554, 0
        %v620 = vunpack.c.l.b16 %v570
        %v621 = vunpack.c.h.b16 %v570
        %v622 = vunpack.c.l.b16 %v571
        %v623 = vunpack.c.h.b16 %v571
        %v624 = vunpack.c.l.b16 %v572
        %v625 = vunpack.c.h.b16 %v572
        %v626 = vunpack.c.l.b16 %v573
        %v627 = vunpack.c.h.b16 %v573
        %v628 = vunpack.c.l.b16 %v574
        %v629 = vunpack.c.h.b16 %v574
        %v630 = vunpack.c.l.b16 %v575
        %v631 = vunpack.c.h.b16 %v575
        %v632 = vunpack.c.l.b16 %v576
        %v633 = vunpack.c.h.b16 %v576
        %v634 = vunpack.c.l.b16 %v577
        %v635 = vunpack.c.h.b16 %v577
        %v636 = vunpack.c.l.b16 %v578
        %v637 = vunpack.c.h.b16 %v578
        %v638 = vunpack.c.l.b16 %v579
        %v639 = vunpack.c.h.b16 %v579
        %v640 = vunpack.c.l.b16 %v580
        %v641 = vunpack.c.h.b16 %v580
        %v642 = vunpack.c.l.b16 %v581
        %v643 = vunpack.c.h.b16 %v581
        %v644 = vunpack.c.l.b16 %v582
        %v645 = vunpack.c.h.b16 %v582
        %v646 = vunpack.c.l.b16 %v583
        %v647 = vunpack.c.h.b16 %v583
        %v648 = vunpack.c.l.b16 %v584
        %v649 = vunpack.c.h.b16 %v584
        %v650 = vunpack.c.l.b16 %v585
        %v651 = vunpack.c.h.b16 %v585
        %v652 = vunpack.c.l.b16 %v586
        %v653 = vunpack.c.h.b16 %v586
        %v654 = vunpack.c.l.b16 %v587
        %v655 = vunpack.c.h.b16 %v587
        %v656 = vunpack.c.l.b16 %v588
        %v657 = vunpack.c.h.b16 %v588
        %v658 = vunpack.c.l.b16 %v589
        %v659 = vunpack.c.h.b16 %v589
        %v660 = vunpack.c.l.b16 %v590
        %v661 = vunpack.c.h.b16 %v590
        %v662 = vunpack.c.l.b16 %v591
        %v663 = vunpack.c.h.b16 %v591
        %v664 = vunpack.c.l.b16 %v592
        %v665 = vunpack.c.h.b16 %v592
        %v666 = vunpack.c.l.b16 %v593
        %v667 = vunpack.c.h.b16 %v593
        %v668 = vpack.c.b16 %v622, %v620
        %v669 = vpack.c.b16 %v623, %v621
        %v670 = vpack.c.b16 %v626, %v624
        %v671 = vpack.c.b16 %v627, %v625
        %v672 = vpack.c.b16 %v630, %v628
        %v673 = vpack.c.b16 %v631, %v629
        %v674 = vpack.c.b16 %v634, %v632
        %v675 = vpack.c.b16 %v635, %v633
        %v676 = vpack.c.b16 %v638, %v636
        %v677 = vpack.c.b16 %v639, %v637
        %v678 = vpack.c.b16 %v642, %v640
        %v679 = vpack.c.b16 %v643, %v641
        %v680 = vpack.c.b16 %v646, %v644
        %v681 = vpack.c.b16 %v647, %v645
        %v682 = vpack.c.b16 %v650, %v648
        %v683 = vpack.c.b16 %v651, %v649
        %v684 = vpack.c.b16 %v654, %v652
        %v685 = vpack.c.b16 %v655, %v653
        %v686 = vpack.c.b16 %v658, %v656
        %v687 = vpack.c.b16 %v659, %v657
        %v688 = vpack.c.b16 %v662, %v660
        %v689 = vpack.c.b16 %v663, %v661
        %v690 = vpack.c.b16 %v666, %v664
        %v691 = vpack.c.b16 %v667, %v665
        %vm716 = vcmask 523264
        %v718 = vsel %vm716, %v569, 0
        %720 = vmatpush.bf16.msra.mxu0 %v682
        %721 = vmatpush.bf16.msra.mxu0 %v680
        %722 = vmatpush.bf16.msra.mxu0 %v678
        %723 = vmatpush.bf16.msra.mxu0 %v676
        %724 = vmatpush.bf16.msra.mxu0 %v674
        %725 = vmatpush.bf16.msra.mxu0 %v672
        %726 = vmatpush.bf16.msra.mxu0 %v670
        %727 = vmatpush.bf16.msra.mxu0 %v668
        %728 = vmatmul.bf16.gmra.mxu0 %v568
        %v729 = vpop.f32.mrf.mxu0
        %v730 = vadd.f32 %v594, %v729
        %v731 = vpop.f32.mrf.mxu0
        %732 = vdwg.mxu0
        %733 = vmatpush.bf16.msra.mxu0 0
        %734 = vmatpush.bf16.msra.mxu0 0
        %735 = vmatpush.bf16.msra.mxu0 0
        %736 = vmatpush.bf16.msra.mxu0 0
        %737 = vmatpush.bf16.msra.mxu0 %v690
        %738 = vmatpush.bf16.msra.mxu0 %v688
        %739 = vmatpush.bf16.msra.mxu0 %v686
        %740 = vmatpush.bf16.msra.mxu0 %v684
        %741 = vmatmul.bf16.gmra.mxu0 %v718
        %v742 = vpop.f32.mrf.mxu0
        %v743 = vadd.f32 %v730, %v742
        %v744 = vpop.f32.mrf.mxu0
        %745 = vdwg.mxu0
        %746 = vmatpush.bf16.msra.mxu0 %v683
        %747 = vmatpush.bf16.msra.mxu0 %v681
        %748 = vmatpush.bf16.msra.mxu0 %v679
        %749 = vmatpush.bf16.msra.mxu0 %v677
        %750 = vmatpush.bf16.msra.mxu0 %v675
        %751 = vmatpush.bf16.msra.mxu0 %v673
        %752 = vmatpush.bf16.msra.mxu0 %v671
        %753 = vmatpush.bf16.msra.mxu0 %v669
        %754 = vmatmul.bf16.gmra.mxu0 %v568
        %v755 = vpop.f32.mrf.mxu0
        %v756 = vadd.f32 %v595, %v755
        %v757 = vpop.f32.mrf.mxu0
        %758 = vdwg.mxu0
        %759 = vmatpush.bf16.msra.mxu0 0
        %760 = vmatpush.bf16.msra.mxu0 0
        %761 = vmatpush.bf16.msra.mxu0 0
        %762 = vmatpush.bf16.msra.mxu0 0
        %763 = vmatpush.bf16.msra.mxu0 %v691
        %764 = vmatpush.bf16.msra.mxu0 %v689
        %765 = vmatpush.bf16.msra.mxu0 %v687
        %766 = vmatpush.bf16.msra.mxu0 %v685
        %767 = vmatmul.bf16.gmra.mxu0 %v718
        %v768 = vpop.f32.mrf.mxu0
        %v769 = vadd.f32 %v756, %v768
        %v770 = vpop.f32.mrf.mxu0
        %771 = vdwg.mxu0
        %v772 = vld [vmem:[%s534] sm:$0xff]
        %774 = vst [vmem:[#allocation1] ss:$2 sm:$0xff] %v772
        %v775 = vld.sshfl [vmem:[#allocation1] sm:$0xff pattern:$0x75316420]
        %v776 = vld.sshfl [vmem:[#allocation1 + $0x8] sm:$0xff pattern:$0x75316420]
        %v779 = vadd.f32 %v743, %v775
        %v780 = vadd.f32 %v769, %v776
        %v781 = vld [vmem:[%s4] sm:$0xff]
        %v782 = vld [vmem:[%s4 + $0x8] sm:$0xff]
        %v783 = vld [vmem:[%s4 + $0x10] sm:$0xff]
        %v784 = vld [vmem:[%s4 + $0x18] sm:$0xff]
        %v785 = vld [vmem:[%s4 + $0x20] sm:$0xff]
        %v786 = vld [vmem:[%s4 + $0x28] sm:$0xff]
        %v787 = vld [vmem:[%s4 + $0x30] sm:$0xff]
        %v788 = vld [vmem:[%s4 + $0x38] sm:$0xff]
        %v789 = vld [vmem:[%s4 + $0x40] sm:$0xff]
        %v790 = vld [vmem:[%s4 + $0x48] sm:$0xff]
        %v791 = vld [vmem:[%s4 + $0x50] sm:$0xff]
        %v792 = vld [vmem:[%s4 + $0x58] sm:$0xff]
        %v793 = vld [vmem:[%s4 + $0x60] sm:$0xff]
        %v794 = vld [vmem:[%s4 + $0x68] sm:$0xff]
        %v795 = vld [vmem:[%s4 + $0x70] sm:$0xff]
        %v796 = vld [vmem:[%s4 + $0x78] sm:$0xff]
        %v797 = vld [vmem:[%s4 + $0x80] sm:$0xff]
        %v798 = vld [vmem:[%s4 + $0x88] sm:$0xff]
        %v799 = vld [vmem:[%s4 + $0x90] sm:$0xff]
        %v800 = vld [vmem:[%s4 + $0x98] sm:$0xff]
        %v801 = vld [vmem:[%s4 + $0xa0] sm:$0xff]
        %v802 = vld [vmem:[%s4 + $0xa8] sm:$0xff]
        %v803 = vld [vmem:[%s4 + $0xb0] sm:$0xff]
        %v804 = vld [vmem:[%s4 + $0xb8] sm:$0xff]
        %v805 = vld [vmem:[%s4 + $0xc0] sm:$0xff]
        %v806 = vld [vmem:[%s4 + $0xc8] sm:$0xff]
        %v807 = vld [vmem:[%s4 + $0xd0] sm:$0xff]
        %v808 = vld [vmem:[%s4 + $0xd8] sm:$0xff]
        %v809 = vld [vmem:[%s4 + $0xe0] sm:$0xff]
        %v810 = vld [vmem:[%s4 + $0xe8] sm:$0xff]
        %v811 = vld [vmem:[%s4 + $0xf0] sm:$0xff]
        %v812 = vld [vmem:[%s4 + $0xf8] sm:$0xff]
        %v813 = vld [vmem:[%s4 + $0x100] sm:$0xff]
        %v814 = vld [vmem:[%s4 + $0x108] sm:$0xff]
        %v815 = vld [vmem:[%s4 + $0x110] sm:$0xff]
        %v816 = vld [vmem:[%s4 + $0x118] sm:$0xff]
        %v817 = vld [vmem:[%s4 + $0x120] sm:$0xff]
        %v818 = vld [vmem:[%s4 + $0x128] sm:$0xff]
        %v819 = vld [vmem:[%s4 + $0x130] sm:$0xff]
        %v820 = vld [vmem:[%s4 + $0x138] sm:$0xff]
        %v821 = vld [vmem:[%s4 + $0x140] sm:$0xff]
        %v822 = vld [vmem:[%s4 + $0x148] sm:$0xff]
        %v823 = vld [vmem:[%s4 + $0x150] sm:$0xff]
        %v824 = vld [vmem:[%s4 + $0x158] sm:$0xff]
        %v825 = vld [vmem:[%s4 + $0x160] sm:$0xff]
        %v826 = vld [vmem:[%s4 + $0x168] sm:$0xff]
        %v827 = vld [vmem:[%s4 + $0x170] sm:$0xff]
        %v828 = vld [vmem:[%s4 + $0x178] sm:$0xff]
        %v829 = vld [vmem:[%s4 + $0x180] sm:$0xff]
        %v830 = vld [vmem:[%s4 + $0x188] sm:$0xff]
        %v831 = vld [vmem:[%s4 + $0x190] sm:$0xff]
        %v832 = vld [vmem:[%s4 + $0x198] sm:$0xff]
        %v833 = vld [vmem:[%s4 + $0x1a0] sm:$0xff]
        %v834 = vld [vmem:[%s4 + $0x1a8] sm:$0xff]
        %v835 = vld [vmem:[%s4 + $0x1b0] sm:$0xff]
        %v836 = vld [vmem:[%s4 + $0x1b8] sm:$0xff]
        %v837 = vld [vmem:[%s4 + $0x1c0] sm:$0xff]
        %v838 = vld [vmem:[%s4 + $0x1c8] sm:$0xff]
        %v839 = vld [vmem:[%s4 + $0x1d0] sm:$0xff]
        %v840 = vld [vmem:[%s4 + $0x1d8] sm:$0xff]
        %v841 = vld [vmem:[%s4 + $0x1e0] sm:$0xff]
        %v842 = vld [vmem:[%s4 + $0x1e8] sm:$0xff]
        %v843 = vld [vmem:[%s4 + $0x1f0] sm:$0xff]
        %v844 = vld [vmem:[%s4 + $0x1f8] sm:$0xff]
        %v845 = vld [vmem:[#allocation3] sm:$0xff]
        %v846 = vld [vmem:[#allocation3 + $0x8] sm:$0xff]
        %v847 = vld [vmem:[#allocation3 + $0x10] sm:$0xff]
        %v848 = vld [vmem:[#allocation3 + $0x18] sm:$0xff]
        %v849 = vld [vmem:[#allocation3 + $0x20] sm:$0xff]
        %v850 = vld [vmem:[#allocation3 + $0x28] sm:$0xff]
        %v851 = vld [vmem:[#allocation3 + $0x30] sm:$0xff]
        %v852 = vld [vmem:[#allocation3 + $0x38] sm:$0xff]
        %v853 = vld [vmem:[#allocation3 + $0x40] sm:$0xff]
        %v854 = vld [vmem:[#allocation3 + $0x48] sm:$0xff]
        %v855 = vld [vmem:[#allocation3 + $0x50] sm:$0xff]
        %v856 = vld [vmem:[#allocation3 + $0x58] sm:$0xff]
        %v857 = vld [vmem:[#allocation3 + $0x60] sm:$0xff]
        %v858 = vld [vmem:[#allocation3 + $0x68] sm:$0xff]
        %v859 = vld [vmem:[#allocation3 + $0x70] sm:$0xff]
        %v860 = vld [vmem:[#allocation3 + $0x78] sm:$0xff]
        %v861 = vld [vmem:[#allocation3 + $0x80] sm:$0xff]
        %v862 = vld [vmem:[#allocation3 + $0x88] sm:$0xff]
        %v863 = vld [vmem:[#allocation3 + $0x90] sm:$0xff]
        %v864 = vld [vmem:[#allocation3 + $0x98] sm:$0xff]
        %v865 = vld [vmem:[#allocation3 + $0xa0] sm:$0xff]
        %v866 = vld [vmem:[#allocation3 + $0xa8] sm:$0xff]
        %v867 = vld [vmem:[#allocation3 + $0xb0] sm:$0xff]
        %v868 = vld [vmem:[#allocation3 + $0xb8] sm:$0xff]
        %v869 = vld [vmem:[#allocation3 + $0xc0] sm:$0xff]
        %v870 = vld [vmem:[#allocation3 + $0xc8] sm:$0xff]
        %v871 = vld [vmem:[#allocation3 + $0xd0] sm:$0xff]
        %v872 = vld [vmem:[#allocation3 + $0xd8] sm:$0xff]
        %v873 = vld [vmem:[#allocation3 + $0xe0] sm:$0xff]
        %v874 = vld [vmem:[#allocation3 + $0xe8] sm:$0xff]
        %v875 = vld [vmem:[#allocation3 + $0xf0] sm:$0xff]
        %v876 = vld [vmem:[#allocation3 + $0xf8] sm:$0xff]
        %v877 = vld [vmem:[#allocation3 + $0x100] sm:$0xff]
        %v878 = vld [vmem:[#allocation3 + $0x108] sm:$0xff]
        %v879 = vld [vmem:[#allocation3 + $0x110] sm:$0xff]
        %v880 = vld [vmem:[#allocation3 + $0x118] sm:$0xff]
        %v881 = vld [vmem:[#allocation3 + $0x120] sm:$0xff]
        %v882 = vld [vmem:[#allocation3 + $0x128] sm:$0xff]
        %v883 = vld [vmem:[#allocation3 + $0x130] sm:$0xff]
        %v884 = vld [vmem:[#allocation3 + $0x138] sm:$0xff]
        %v885 = vld [vmem:[#allocation3 + $0x140] sm:$0xff]
        %v886 = vld [vmem:[#allocation3 + $0x148] sm:$0xff]
        %v887 = vld [vmem:[#allocation3 + $0x150] sm:$0xff]
        %v888 = vld [vmem:[#allocation3 + $0x158] sm:$0xff]
        %v889 = vld [vmem:[#allocation3 + $0x160] sm:$0xff]
        %v890 = vld [vmem:[#allocation3 + $0x168] sm:$0xff]
        %v891 = vld [vmem:[#allocation3 + $0x170] sm:$0xff]
        %v892 = vld [vmem:[#allocation3 + $0x178] sm:$0xff]
        %v893 = vld [vmem:[#allocation3 + $0x180] sm:$0xff]
        %v894 = vld [vmem:[#allocation3 + $0x188] sm:$0xff]
        %v895 = vld [vmem:[#allocation3 + $0x190] sm:$0xff]
        %v896 = vld [vmem:[#allocation3 + $0x198] sm:$0xff]
        %v897 = vld [vmem:[#allocation3 + $0x1a0] sm:$0xff]
        %v898 = vld [vmem:[#allocation3 + $0x1a8] sm:$0xff]
        %v899 = vld [vmem:[#allocation3 + $0x1b0] sm:$0xff]
        %v900 = vld [vmem:[#allocation3 + $0x1b8] sm:$0xff]
        %v901 = vld [vmem:[#allocation3 + $0x1c0] sm:$0xff]
        %v902 = vld [vmem:[#allocation3 + $0x1c8] sm:$0xff]
        %v903 = vld [vmem:[#allocation3 + $0x1d0] sm:$0xff]
        %v904 = vld [vmem:[#allocation3 + $0x1d8] sm:$0xff]
        %v905 = vld [vmem:[#allocation3 + $0x1e0] sm:$0xff]
        %v906 = vld [vmem:[#allocation3 + $0x1e8] sm:$0xff]
        %v907 = vld [vmem:[#allocation3 + $0x1f0] sm:$0xff]
        %v908 = vld [vmem:[#allocation3 + $0x1f8] sm:$0xff]
        %vm909 = vcmask 1043456
        %v910 = vsel %vm909, %v779, 0.0
        %v911 = vsel %vm909, %v780, 0.0
        %v912 = vadd.f32 %v910, %v911
        %913 = vadd.xlane.f32.xlu0 %v912
        %v914 = vpop.xlane.xlu0 %913
        %v915 = vrcp.pop 256.0
        %v916 = vmul.f32 256.0, %v915
        %v917 = vsub.f32 1.0, %v916
        %v918 = vmul.f32 %v915, %v917
        %v919 = vadd.f32 %v915, %v918
        %vm920 = vweird.f32 %v915
        %v921 = vsel %vm920, %v915, %v919
        %v922 = vmul.f32 %v914, %v921
        %v923 = vsub.f32 %v779, %v922
        %v924 = vsub.f32 %v780, %v922
        %v925 = vmul.f32 %v923, %v923
        %v926 = vmul.f32 %v924, %v924
        %v927 = vsel %vm909, %v925, 0.0
        %v928 = vsel %vm909, %v926, 0.0
        %v929 = vadd.f32 %v927, %v928
        %930 = vadd.xlane.f32.xlu0 %v929
        %v931 = vpop.xlane.xlu0 %930
        %v932 = vmul.f32 %v931, %v921
        %v933 = vadd.f32 %v932, 1e-06
        %v934 = vrsqrt.pop %v933
        %v935 = vmul.f32 %v934, %v933
        %v936 = vmul.f32 %v935, %v934
        %v937 = vmul.f32 0.5, %v936
        %v938 = vsub.f32 1.5, %v937
        %v939 = vmul.f32 %v934, %v938
        %vm940 = vweird.f32 %v933
        %vm941 = vweird.f32 %v934
        %vm942 = vmor %vm940, %vm941
        %v943 = vsel %vm942, %v934, %v939
        %v944 = vmul.f32 %v923, %v943
        %v945 = vmul.f32 %v924, %v943
        %v946 = vperm.slane %v553, 1
        %v947 = vperm.slane %v554, 1
        %v948 = vmul.f32 %v944, %v946
        %v949 = vmul.f32 %v945, %v947
        %v950 = vperm.slane %v553, 2
        %v951 = vperm.slane %v554, 2
        %v952 = vadd.f32 %v948, %v950
        %v953 = vadd.f32 %v949, %v951
        %v954 = vpack.c.bf16 %v952, %v952
        %v955 = vpack.c.bf16 %v953, %v953
        %v956 = vperm.slane %v553, 3
        %v957 = vperm.slane %v554, 3
        %v958 = vperm.slane %v555, 3
        %v959 = vperm.slane %v556, 3
        %v1024 = vunpack.c.l.b16 %v781
        %v1025 = vunpack.c.h.b16 %v781
        %v1026 = vunpack.c.l.b16 %v782
        %v1027 = vunpack.c.h.b16 %v782
        %v1028 = vunpack.c.l.b16 %v783
        %v1029 = vunpack.c.h.b16 %v783
        %v1030 = vunpack.c.l.b16 %v784
        %v1031 = vunpack.c.h.b16 %v784
        %v1032 = vunpack.c.l.b16 %v785
        %v1033 = vunpack.c.h.b16 %v785
        %v1034 = vunpack.c.l.b16 %v786
        %v1035 = vunpack.c.h.b16 %v786
        %v1036 = vunpack.c.l.b16 %v787
        %v1037 = vunpack.c.h.b16 %v787
        %v1038 = vunpack.c.l.b16 %v788
        %v1039 = vunpack.c.h.b16 %v788
        %v1040 = vunpack.c.l.b16 %v789
        %v1041 = vunpack.c.h.b16 %v789
        %v1042 = vunpack.c.l.b16 %v790
        %v1043 = vunpack.c.h.b16 %v790
        %v1044 = vunpack.c.l.b16 %v791
        %v1045 = vunpack.c.h.b16 %v791
        %v1046 = vunpack.c.l.b16 %v792
        %v1047 = vunpack.c.h.b16 %v792
        %v1048 = vunpack.c.l.b16 %v793
        %v1049 = vunpack.c.h.b16 %v793
        %v1050 = vunpack.c.l.b16 %v794
        %v1051 = vunpack.c.h.b16 %v794
        %v1052 = vunpack.c.l.b16 %v795
        %v1053 = vunpack.c.h.b16 %v795
        %v1054 = vunpack.c.l.b16 %v796
        %v1055 = vunpack.c.h.b16 %v796
        %v1056 = vunpack.c.l.b16 %v797
        %v1057 = vunpack.c.h.b16 %v797
        %v1058 = vunpack.c.l.b16 %v798
        %v1059 = vunpack.c.h.b16 %v798
        %v1060 = vunpack.c.l.b16 %v799
        %v1061 = vunpack.c.h.b16 %v799
        %v1062 = vunpack.c.l.b16 %v800
        %v1063 = vunpack.c.h.b16 %v800
        %v1064 = vunpack.c.l.b16 %v801
        %v1065 = vunpack.c.h.b16 %v801
        %v1066 = vunpack.c.l.b16 %v802
        %v1067 = vunpack.c.h.b16 %v802
        %v1068 = vunpack.c.l.b16 %v803
        %v1069 = vunpack.c.h.b16 %v803
        %v1070 = vunpack.c.l.b16 %v804
        %v1071 = vunpack.c.h.b16 %v804
        %v1072 = vunpack.c.l.b16 %v805
        %v1073 = vunpack.c.h.b16 %v805
        %v1074 = vunpack.c.l.b16 %v806
        %v1075 = vunpack.c.h.b16 %v806
        %v1076 = vunpack.c.l.b16 %v807
        %v1077 = vunpack.c.h.b16 %v807
        %v1078 = vunpack.c.l.b16 %v808
        %v1079 = vunpack.c.h.b16 %v808
        %v1080 = vunpack.c.l.b16 %v809
        %v1081 = vunpack.c.h.b16 %v809
        %v1082 = vunpack.c.l.b16 %v810
        %v1083 = vunpack.c.h.b16 %v810
        %v1084 = vunpack.c.l.b16 %v811
        %v1085 = vunpack.c.h.b16 %v811
        %v1086 = vunpack.c.l.b16 %v812
        %v1087 = vunpack.c.h.b16 %v812
        %v1088 = vunpack.c.l.b16 %v813
        %v1089 = vunpack.c.h.b16 %v813
        %v1090 = vunpack.c.l.b16 %v814
        %v1091 = vunpack.c.h.b16 %v814
        %v1092 = vunpack.c.l.b16 %v815
        %v1093 = vunpack.c.h.b16 %v815
        %v1094 = vunpack.c.l.b16 %v816
        %v1095 = vunpack.c.h.b16 %v816
        %v1096 = vunpack.c.l.b16 %v817
        %v1097 = vunpack.c.h.b16 %v817
        %v1098 = vunpack.c.l.b16 %v818
        %v1099 = vunpack.c.h.b16 %v818
        %v1100 = vunpack.c.l.b16 %v819
        %v1101 = vunpack.c.h.b16 %v819
        %v1102 = vunpack.c.l.b16 %v820
        %v1103 = vunpack.c.h.b16 %v820
        %v1104 = vunpack.c.l.b16 %v821
        %v1105 = vunpack.c.h.b16 %v821
        %v1106 = vunpack.c.l.b16 %v822
        %v1107 = vunpack.c.h.b16 %v822
        %v1108 = vunpack.c.l.b16 %v823
        %v1109 = vunpack.c.h.b16 %v823
        %v1110 = vunpack.c.l.b16 %v824
        %v1111 = vunpack.c.h.b16 %v824
        %v1112 = vunpack.c.l.b16 %v825
        %v1113 = vunpack.c.h.b16 %v825
        %v1114 = vunpack.c.l.b16 %v826
        %v1115 = vunpack.c.h.b16 %v826
        %v1116 = vunpack.c.l.b16 %v827
        %v1117 = vunpack.c.h.b16 %v827
        %v1118 = vunpack.c.l.b16 %v828
        %v1119 = vunpack.c.h.b16 %v828
        %v1120 = vunpack.c.l.b16 %v829
        %v1121 = vunpack.c.h.b16 %v829
        %v1122 = vunpack.c.l.b16 %v830
        %v1123 = vunpack.c.h.b16 %v830
        %v1124 = vunpack.c.l.b16 %v831
        %v1125 = vunpack.c.h.b16 %v831
        %v1126 = vunpack.c.l.b16 %v832
        %v1127 = vunpack.c.h.b16 %v832
        %v1128 = vunpack.c.l.b16 %v833
        %v1129 = vunpack.c.h.b16 %v833
        %v1130 = vunpack.c.l.b16 %v834
        %v1131 = vunpack.c.h.b16 %v834
        %v1132 = vunpack.c.l.b16 %v835
        %v1133 = vunpack.c.h.b16 %v835
        %v1134 = vunpack.c.l.b16 %v836
        %v1135 = vunpack.c.h.b16 %v836
        %v1136 = vunpack.c.l.b16 %v837
        %v1137 = vunpack.c.h.b16 %v837
        %v1138 = vunpack.c.l.b16 %v838
        %v1139 = vunpack.c.h.b16 %v838
        %v1140 = vunpack.c.l.b16 %v839
        %v1141 = vunpack.c.h.b16 %v839
        %v1142 = vunpack.c.l.b16 %v840
        %v1143 = vunpack.c.h.b16 %v840
        %v1144 = vunpack.c.l.b16 %v841
        %v1145 = vunpack.c.h.b16 %v841
        %v1146 = vunpack.c.l.b16 %v842
        %v1147 = vunpack.c.h.b16 %v842
        %v1148 = vunpack.c.l.b16 %v843
        %v1149 = vunpack.c.h.b16 %v843
        %v1150 = vunpack.c.l.b16 %v844
        %v1151 = vunpack.c.h.b16 %v844
        %v1152 = vpack.c.b16 %v1028, %v1024
        %v1153 = vpack.c.b16 %v1029, %v1025
        %v1154 = vpack.c.b16 %v1030, %v1026
        %v1155 = vpack.c.b16 %v1031, %v1027
        %v1156 = vpack.c.b16 %v1036, %v1032
        %v1157 = vpack.c.b16 %v1037, %v1033
        %v1158 = vpack.c.b16 %v1038, %v1034
        %v1159 = vpack.c.b16 %v1039, %v1035
        %v1160 = vpack.c.b16 %v1044, %v1040
        %v1161 = vpack.c.b16 %v1045, %v1041
        %v1162 = vpack.c.b16 %v1046, %v1042
        %v1163 = vpack.c.b16 %v1047, %v1043
        %v1164 = vpack.c.b16 %v1052, %v1048
        %v1165 = vpack.c.b16 %v1053, %v1049
        %v1166 = vpack.c.b16 %v1054, %v1050
        %v1167 = vpack.c.b16 %v1055, %v1051
        %v1168 = vpack.c.b16 %v1060, %v1056
        %v1169 = vpack.c.b16 %v1061, %v1057
        %v1170 = vpack.c.b16 %v1062, %v1058
        %v1171 = vpack.c.b16 %v1063, %v1059
        %v1172 = vpack.c.b16 %v1068, %v1064
        %v1173 = vpack.c.b16 %v1069, %v1065
        %v1174 = vpack.c.b16 %v1070, %v1066
        %v1175 = vpack.c.b16 %v1071, %v1067
        %v1176 = vpack.c.b16 %v1076, %v1072
        %v1177 = vpack.c.b16 %v1077, %v1073
        %v1178 = vpack.c.b16 %v1078, %v1074
        %v1179 = vpack.c.b16 %v1079, %v1075
        %v1180 = vpack.c.b16 %v1084, %v1080
        %v1181 = vpack.c.b16 %v1085, %v1081
        %v1182 = vpack.c.b16 %v1086, %v1082
        %v1183 = vpack.c.b16 %v1087, %v1083
        %v1184 = vpack.c.b16 %v1092, %v1088
        %v1185 = vpack.c.b16 %v1093, %v1089
        %v1186 = vpack.c.b16 %v1094, %v1090
        %v1187 = vpack.c.b16 %v1095, %v1091
        %v1188 = vpack.c.b16 %v1100, %v1096
        %v1189 = vpack.c.b16 %v1101, %v1097
        %v1190 = vpack.c.b16 %v1102, %v1098
        %v1191 = vpack.c.b16 %v1103, %v1099
        %v1192 = vpack.c.b16 %v1108, %v1104
        %v1193 = vpack.c.b16 %v1109, %v1105
        %v1194 = vpack.c.b16 %v1110, %v1106
        %v1195 = vpack.c.b16 %v1111, %v1107
        %v1196 = vpack.c.b16 %v1116, %v1112
        %v1197 = vpack.c.b16 %v1117, %v1113
        %v1198 = vpack.c.b16 %v1118, %v1114
        %v1199 = vpack.c.b16 %v1119, %v1115
        %v1200 = vpack.c.b16 %v1124, %v1120
        %v1201 = vpack.c.b16 %v1125, %v1121
        %v1202 = vpack.c.b16 %v1126, %v1122
        %v1203 = vpack.c.b16 %v1127, %v1123
        %v1204 = vpack.c.b16 %v1132, %v1128
        %v1205 = vpack.c.b16 %v1133, %v1129
        %v1206 = vpack.c.b16 %v1134, %v1130
        %v1207 = vpack.c.b16 %v1135, %v1131
        %v1208 = vpack.c.b16 %v1140, %v1136
        %v1209 = vpack.c.b16 %v1141, %v1137
        %v1210 = vpack.c.b16 %v1142, %v1138
        %v1211 = vpack.c.b16 %v1143, %v1139
        %v1212 = vpack.c.b16 %v1148, %v1144
        %v1213 = vpack.c.b16 %v1149, %v1145
        %v1214 = vpack.c.b16 %v1150, %v1146
        %v1215 = vpack.c.b16 %v1151, %v1147
        %1280 = vmatpush.bf16.msra.mxu0 %v1180
        %1281 = vmatpush.bf16.msra.mxu0 %v1176
        %1282 = vmatpush.bf16.msra.mxu0 %v1172
        %1283 = vmatpush.bf16.msra.mxu0 %v1168
        %1284 = vmatpush.bf16.msra.mxu0 %v1164
        %1285 = vmatpush.bf16.msra.mxu0 %v1160
        %1286 = vmatpush.bf16.msra.mxu0 %v1156
        %1287 = vmatpush.bf16.msra.mxu0 %v1152
        %1288 = vmatmul.bf16.gmra.mxu0 %v954
        %v1289 = vpop.f32.mrf.mxu0
        %v1290 = vadd.f32 %v956, %v1289
        %v1291 = vpop.f32.mrf.mxu0
        %1292 = vdwg.mxu0
        %1293 = vmatpush.bf16.msra.mxu0 %v1212
        %1294 = vmatpush.bf16.msra.mxu0 %v1208
        %1295 = vmatpush.bf16.msra.mxu0 %v1204
        %1296 = vmatpush.bf16.msra.mxu0 %v1200
        %1297 = vmatpush.bf16.msra.mxu0 %v1196
        %1298 = vmatpush.bf16.msra.mxu0 %v1192
        %1299 = vmatpush.bf16.msra.mxu0 %v1188
        %1300 = vmatpush.bf16.msra.mxu0 %v1184
        %1301 = vmatmul.bf16.gmra.mxu0 %v955
        %v1302 = vpop.f32.mrf.mxu0
        %v1303 = vadd.f32 %v1290, %v1302
        %v1304 = vpop.f32.mrf.mxu0
        %1305 = vdwg.mxu0
        %1306 = vmatpush.bf16.msra.mxu0 %v1181
        %1307 = vmatpush.bf16.msra.mxu0 %v1177
        %1308 = vmatpush.bf16.msra.mxu0 %v1173
        %1309 = vmatpush.bf16.msra.mxu0 %v1169
        %1310 = vmatpush.bf16.msra.mxu0 %v1165
        %1311 = vmatpush.bf16.msra.mxu0 %v1161
        %1312 = vmatpush.bf16.msra.mxu0 %v1157
        %1313 = vmatpush.bf16.msra.mxu0 %v1153
        %1314 = vmatmul.bf16.gmra.mxu0 %v954
        %v1315 = vpop.f32.mrf.mxu0
        %v1316 = vadd.f32 %v957, %v1315
        %v1317 = vpop.f32.mrf.mxu0
        %1318 = vdwg.mxu0
        %1319 = vmatpush.bf16.msra.mxu0 %v1213
        %1320 = vmatpush.bf16.msra.mxu0 %v1209
        %1321 = vmatpush.bf16.msra.mxu0 %v1205
        %1322 = vmatpush.bf16.msra.mxu0 %v1201
        %1323 = vmatpush.bf16.msra.mxu0 %v1197
        %1324 = vmatpush.bf16.msra.mxu0 %v1193
        %1325 = vmatpush.bf16.msra.mxu0 %v1189
        %1326 = vmatpush.bf16.msra.mxu0 %v1185
        %1327 = vmatmul.bf16.gmra.mxu0 %v955
        %v1328 = vpop.f32.mrf.mxu0
        %v1329 = vadd.f32 %v1316, %v1328
        %v1330 = vpop.f32.mrf.mxu0
        %1331 = vdwg.mxu0
        %1332 = vmatpush.bf16.msra.mxu0 %v1182
        %1333 = vmatpush.bf16.msra.mxu0 %v1178
        %1334 = vmatpush.bf16.msra.mxu0 %v1174
        %1335 = vmatpush.bf16.msra.mxu0 %v1170
        %1336 = vmatpush.bf16.msra.mxu0 %v1166
        %1337 = vmatpush.bf16.msra.mxu0 %v1162
        %1338 = vmatpush.bf16.msra.mxu0 %v1158
        %1339 = vmatpush.bf16.msra.mxu0 %v1154
        %1340 = vmatmul.bf16.gmra.mxu0 %v954
        %v1341 = vpop.f32.mrf.mxu0
        %v1342 = vadd.f32 %v958, %v1341
        %v1343 = vpop.f32.mrf.mxu0
        %1344 = vdwg.mxu0
        %1345 = vmatpush.bf16.msra.mxu0 %v1214
        %1346 = vmatpush.bf16.msra.mxu0 %v1210
        %1347 = vmatpush.bf16.msra.mxu0 %v1206
        %1348 = vmatpush.bf16.msra.mxu0 %v1202
        %1349 = vmatpush.bf16.msra.mxu0 %v1198
        %1350 = vmatpush.bf16.msra.mxu0 %v1194
        %1351 = vmatpush.bf16.msra.mxu0 %v1190
        %1352 = vmatpush.bf16.msra.mxu0 %v1186
        %1353 = vmatmul.bf16.gmra.mxu0 %v955
        %v1354 = vpop.f32.mrf.mxu0
        %v1355 = vadd.f32 %v1342, %v1354
        %v1356 = vpop.f32.mrf.mxu0
        %1357 = vdwg.mxu0
        %1358 = vmatpush.bf16.msra.mxu0 %v1183
        %1359 = vmatpush.bf16.msra.mxu0 %v1179
        %1360 = vmatpush.bf16.msra.mxu0 %v1175
        %1361 = vmatpush.bf16.msra.mxu0 %v1171
        %1362 = vmatpush.bf16.msra.mxu0 %v1167
        %1363 = vmatpush.bf16.msra.mxu0 %v1163
        %1364 = vmatpush.bf16.msra.mxu0 %v1159
        %1365 = vmatpush.bf16.msra.mxu0 %v1155
        %1366 = vmatmul.bf16.gmra.mxu0 %v954
        %v1367 = vpop.f32.mrf.mxu0
        %v1368 = vadd.f32 %v959, %v1367
        %v1369 = vpop.f32.mrf.mxu0
        %1370 = vdwg.mxu0
        %1371 = vmatpush.bf16.msra.mxu0 %v1215
        %1372 = vmatpush.bf16.msra.mxu0 %v1211
        %1373 = vmatpush.bf16.msra.mxu0 %v1207
        %1374 = vmatpush.bf16.msra.mxu0 %v1203
        %1375 = vmatpush.bf16.msra.mxu0 %v1199
        %1376 = vmatpush.bf16.msra.mxu0 %v1195
        %1377 = vmatpush.bf16.msra.mxu0 %v1191
        %1378 = vmatpush.bf16.msra.mxu0 %v1187
        %1379 = vmatmul.bf16.gmra.mxu0 %v955
        %v1380 = vpop.f32.mrf.mxu0
        %v1381 = vadd.f32 %v1368, %v1380
        %v1382 = vpop.f32.mrf.mxu0
        %1383 = vdwg.mxu0
        %v1384 = vmul.f32 %v1303, 0.5
        %v1385 = vmul.f32 %v1329, 0.5
        %v1386 = vmul.f32 %v1355, 0.5
        %v1387 = vmul.f32 %v1381, 0.5
        %v1388 = vtanh.pop %v1384
        %v1389 = vtanh.pop %v1385
        %v1390 = vtanh.pop %v1386
        %v1391 = vtanh.pop %v1387
        %v1392 = vadd.f32 %v1388, 1.0
        %v1393 = vadd.f32 %v1389, 1.0
        %v1394 = vadd.f32 %v1390, 1.0
        %v1395 = vadd.f32 %v1391, 1.0
        %v1396 = vmul.f32 %v1384, %v1392
        %v1397 = vmul.f32 %v1385, %v1393
        %v1398 = vmul.f32 %v1386, %v1394
        %v1399 = vmul.f32 %v1387, %v1395
        %v1400 = vpack.c.bf16 %v1396, %v1396
        %v1401 = vpack.c.bf16 %v1397, %v1397
        %v1402 = vpack.c.bf16 %v1398, %v1398
        %v1403 = vpack.c.bf16 %v1399, %v1399
        %v1404 = vperm.slane %v553, 4
        %v1405 = vperm.slane %v554, 4
        %v1470 = vunpack.c.l.b16 %v845
        %v1471 = vunpack.c.h.b16 %v845
        %v1472 = vunpack.c.l.b16 %v846
        %v1473 = vunpack.c.h.b16 %v846
        %v1474 = vunpack.c.l.b16 %v847
        %v1475 = vunpack.c.h.b16 %v847
        %v1476 = vunpack.c.l.b16 %v848
        %v1477 = vunpack.c.h.b16 %v848
        %v1478 = vunpack.c.l.b16 %v849
        %v1479 = vunpack.c.h.b16 %v849
        %v1480 = vunpack.c.l.b16 %v850
        %v1481 = vunpack.c.h.b16 %v850
        %v1482 = vunpack.c.l.b16 %v851
        %v1483 = vunpack.c.h.b16 %v851
        %v1484 = vunpack.c.l.b16 %v852
        %v1485 = vunpack.c.h.b16 %v852
        %v1486 = vunpack.c.l.b16 %v853
        %v1487 = vunpack.c.h.b16 %v853
        %v1488 = vunpack.c.l.b16 %v854
        %v1489 = vunpack.c.h.b16 %v854
        %v1490 = vunpack.c.l.b16 %v855
        %v1491 = vunpack.c.h.b16 %v855
        %v1492 = vunpack.c.l.b16 %v856
        %v1493 = vunpack.c.h.b16 %v856
        %v1494 = vunpack.c.l.b16 %v857
        %v1495 = vunpack.c.h.b16 %v857
        %v1496 = vunpack.c.l.b16 %v858
        %v1497 = vunpack.c.h.b16 %v858
        %v1498 = vunpack.c.l.b16 %v859
        %v1499 = vunpack.c.h.b16 %v859
        %v1500 = vunpack.c.l.b16 %v860
        %v1501 = vunpack.c.h.b16 %v860
        %v1502 = vunpack.c.l.b16 %v861
        %v1503 = vunpack.c.h.b16 %v861
        %v1504 = vunpack.c.l.b16 %v862
        %v1505 = vunpack.c.h.b16 %v862
        %v1506 = vunpack.c.l.b16 %v863
        %v1507 = vunpack.c.h.b16 %v863
        %v1508 = vunpack.c.l.b16 %v864
        %v1509 = vunpack.c.h.b16 %v864
        %v1510 = vunpack.c.l.b16 %v865
        %v1511 = vunpack.c.h.b16 %v865
        %v1512 = vunpack.c.l.b16 %v866
        %v1513 = vunpack.c.h.b16 %v866
        %v1514 = vunpack.c.l.b16 %v867
        %v1515 = vunpack.c.h.b16 %v867
        %v1516 = vunpack.c.l.b16 %v868
        %v1517 = vunpack.c.h.b16 %v868
        %v1518 = vunpack.c.l.b16 %v869
        %v1519 = vunpack.c.h.b16 %v869
        %v1520 = vunpack.c.l.b16 %v870
        %v1521 = vunpack.c.h.b16 %v870
        %v1522 = vunpack.c.l.b16 %v871
        %v1523 = vunpack.c.h.b16 %v871
        %v1524 = vunpack.c.l.b16 %v872
        %v1525 = vunpack.c.h.b16 %v872
        %v1526 = vunpack.c.l.b16 %v873
        %v1527 = vunpack.c.h.b16 %v873
        %v1528 = vunpack.c.l.b16 %v874
        %v1529 = vunpack.c.h.b16 %v874
        %v1530 = vunpack.c.l.b16 %v875
        %v1531 = vunpack.c.h.b16 %v875
        %v1532 = vunpack.c.l.b16 %v876
        %v1533 = vunpack.c.h.b16 %v876
        %v1534 = vunpack.c.l.b16 %v877
        %v1535 = vunpack.c.h.b16 %v877
        %v1536 = vunpack.c.l.b16 %v878
        %v1537 = vunpack.c.h.b16 %v878
        %v1538 = vunpack.c.l.b16 %v879
        %v1539 = vunpack.c.h.b16 %v879
        %v1540 = vunpack.c.l.b16 %v880
        %v1541 = vunpack.c.h.b16 %v880
        %v1542 = vunpack.c.l.b16 %v881
        %v1543 = vunpack.c.h.b16 %v881
        %v1544 = vunpack.c.l.b16 %v882
        %v1545 = vunpack.c.h.b16 %v882
        %v1546 = vunpack.c.l.b16 %v883
        %v1547 = vunpack.c.h.b16 %v883
        %v1548 = vunpack.c.l.b16 %v884
        %v1549 = vunpack.c.h.b16 %v884
        %v1550 = vunpack.c.l.b16 %v885
        %v1551 = vunpack.c.h.b16 %v885
        %v1552 = vunpack.c.l.b16 %v886
        %v1553 = vunpack.c.h.b16 %v886
        %v1554 = vunpack.c.l.b16 %v887
        %v1555 = vunpack.c.h.b16 %v887
        %v1556 = vunpack.c.l.b16 %v888
        %v1557 = vunpack.c.h.b16 %v888
        %v1558 = vunpack.c.l.b16 %v889
        %v1559 = vunpack.c.h.b16 %v889
        %v1560 = vunpack.c.l.b16 %v890
        %v1561 = vunpack.c.h.b16 %v890
        %v1562 = vunpack.c.l.b16 %v891
        %v1563 = vunpack.c.h.b16 %v891
        %v1564 = vunpack.c.l.b16 %v892
        %v1565 = vunpack.c.h.b16 %v892
        %v1566 = vunpack.c.l.b16 %v893
        %v1567 = vunpack.c.h.b16 %v893
        %v1568 = vunpack.c.l.b16 %v894
        %v1569 = vunpack.c.h.b16 %v894
        %v1570 = vunpack.c.l.b16 %v895
        %v1571 = vunpack.c.h.b16 %v895
        %v1572 = vunpack.c.l.b16 %v896
        %v1573 = vunpack.c.h.b16 %v896
        %v1574 = vunpack.c.l.b16 %v897
        %v1575 = vunpack.c.h.b16 %v897
        %v1576 = vunpack.c.l.b16 %v898
        %v1577 = vunpack.c.h.b16 %v898
        %v1578 = vunpack.c.l.b16 %v899
        %v1579 = vunpack.c.h.b16 %v899
        %v1580 = vunpack.c.l.b16 %v900
        %v1581 = vunpack.c.h.b16 %v900
        %v1582 = vunpack.c.l.b16 %v901
        %v1583 = vunpack.c.h.b16 %v901
        %v1584 = vunpack.c.l.b16 %v902
        %v1585 = vunpack.c.h.b16 %v902
        %v1586 = vunpack.c.l.b16 %v903
        %v1587 = vunpack.c.h.b16 %v903
        %v1588 = vunpack.c.l.b16 %v904
        %v1589 = vunpack.c.h.b16 %v904
        %v1590 = vunpack.c.l.b16 %v905
        %v1591 = vunpack.c.h.b16 %v905
        %v1592 = vunpack.c.l.b16 %v906
        %v1593 = vunpack.c.h.b16 %v906
        %v1594 = vunpack.c.l.b16 %v907
        %v1595 = vunpack.c.h.b16 %v907
        %v1596 = vunpack.c.l.b16 %v908
        %v1597 = vunpack.c.h.b16 %v908
        %v1598 = vpack.c.b16 %v1472, %v1470
        %v1599 = vpack.c.b16 %v1473, %v1471
        %v1600 = vpack.c.b16 %v1476, %v1474
        %v1601 = vpack.c.b16 %v1477, %v1475
        %v1602 = vpack.c.b16 %v1480, %v1478
        %v1603 = vpack.c.b16 %v1481, %v1479
        %v1604 = vpack.c.b16 %v1484, %v1482
        %v1605 = vpack.c.b16 %v1485, %v1483
        %v1606 = vpack.c.b16 %v1488, %v1486
        %v1607 = vpack.c.b16 %v1489, %v1487
        %v1608 = vpack.c.b16 %v1492, %v1490
        %v1609 = vpack.c.b16 %v1493, %v1491
        %v1610 = vpack.c.b16 %v1496, %v1494
        %v1611 = vpack.c.b16 %v1497, %v1495
        %v1612 = vpack.c.b16 %v1500, %v1498
        %v1613 = vpack.c.b16 %v1501, %v1499
        %v1614 = vpack.c.b16 %v1504, %v1502
        %v1615 = vpack.c.b16 %v1505, %v1503
        %v1616 = vpack.c.b16 %v1508, %v1506
        %v1617 = vpack.c.b16 %v1509, %v1507
        %v1618 = vpack.c.b16 %v1512, %v1510
        %v1619 = vpack.c.b16 %v1513, %v1511
        %v1620 = vpack.c.b16 %v1516, %v1514
        %v1621 = vpack.c.b16 %v1517, %v1515
        %v1622 = vpack.c.b16 %v1520, %v1518
        %v1623 = vpack.c.b16 %v1521, %v1519
        %v1624 = vpack.c.b16 %v1524, %v1522
        %v1625 = vpack.c.b16 %v1525, %v1523
        %v1626 = vpack.c.b16 %v1528, %v1526
        %v1627 = vpack.c.b16 %v1529, %v1527
        %v1628 = vpack.c.b16 %v1532, %v1530
        %v1629 = vpack.c.b16 %v1533, %v1531
        %v1630 = vpack.c.b16 %v1536, %v1534
        %v1631 = vpack.c.b16 %v1537, %v1535
        %v1632 = vpack.c.b16 %v1540, %v1538
        %v1633 = vpack.c.b16 %v1541, %v1539
        %v1634 = vpack.c.b16 %v1544, %v1542
        %v1635 = vpack.c.b16 %v1545, %v1543
        %v1636 = vpack.c.b16 %v1548, %v1546
        %v1637 = vpack.c.b16 %v1549, %v1547
        %v1638 = vpack.c.b16 %v1552, %v1550
        %v1639 = vpack.c.b16 %v1553, %v1551
        %v1640 = vpack.c.b16 %v1556, %v1554
        %v1641 = vpack.c.b16 %v1557, %v1555
        %v1642 = vpack.c.b16 %v1560, %v1558
        %v1643 = vpack.c.b16 %v1561, %v1559
        %v1644 = vpack.c.b16 %v1564, %v1562
        %v1645 = vpack.c.b16 %v1565, %v1563
        %v1646 = vpack.c.b16 %v1568, %v1566
        %v1647 = vpack.c.b16 %v1569, %v1567
        %v1648 = vpack.c.b16 %v1572, %v1570
        %v1649 = vpack.c.b16 %v1573, %v1571
        %v1650 = vpack.c.b16 %v1576, %v1574
        %v1651 = vpack.c.b16 %v1577, %v1575
        %v1652 = vpack.c.b16 %v1580, %v1578
        %v1653 = vpack.c.b16 %v1581, %v1579
        %v1654 = vpack.c.b16 %v1584, %v1582
        %v1655 = vpack.c.b16 %v1585, %v1583
        %v1656 = vpack.c.b16 %v1588, %v1586
        %v1657 = vpack.c.b16 %v1589, %v1587
        %v1658 = vpack.c.b16 %v1592, %v1590
        %v1659 = vpack.c.b16 %v1593, %v1591
        %v1660 = vpack.c.b16 %v1596, %v1594
        %v1661 = vpack.c.b16 %v1597, %v1595
        %1726 = vmatpush.bf16.msra.mxu0 %v1612
        %1727 = vmatpush.bf16.msra.mxu0 %v1610
        %1728 = vmatpush.bf16.msra.mxu0 %v1608
        %1729 = vmatpush.bf16.msra.mxu0 %v1606
        %1730 = vmatpush.bf16.msra.mxu0 %v1604
        %1731 = vmatpush.bf16.msra.mxu0 %v1602
        %1732 = vmatpush.bf16.msra.mxu0 %v1600
        %1733 = vmatpush.bf16.msra.mxu0 %v1598
        %1734 = vmatmul.bf16.gmra.mxu0 %v1400
        %v1735 = vpop.f32.mrf.mxu0
        %v1736 = vadd.f32 %v1404, %v1735
        %v1737 = vpop.f32.mrf.mxu0
        %1738 = vdwg.mxu0
        %1739 = vmatpush.bf16.msra.mxu0 %v1628
        %1740 = vmatpush.bf16.msra.mxu0 %v1626
        %1741 = vmatpush.bf16.msra.mxu0 %v1624
        %1742 = vmatpush.bf16.msra.mxu0 %v1622
        %1743 = vmatpush.bf16.msra.mxu0 %v1620
        %1744 = vmatpush.bf16.msra.mxu0 %v1618
        %1745 = vmatpush.bf16.msra.mxu0 %v1616
        %1746 = vmatpush.bf16.msra.mxu0 %v1614
        %1747 = vmatmul.bf16.gmra.mxu0 %v1401
        %v1748 = vpop.f32.mrf.mxu0
        %v1749 = vadd.f32 %v1736, %v1748
        %v1750 = vpop.f32.mrf.mxu0
        %1751 = vdwg.mxu0
        %1752 = vmatpush.bf16.msra.mxu0 %v1644
        %1753 = vmatpush.bf16.msra.mxu0 %v1642
        %1754 = vmatpush.bf16.msra.mxu0 %v1640
        %1755 = vmatpush.bf16.msra.mxu0 %v1638
        %1756 = vmatpush.bf16.msra.mxu0 %v1636
        %1757 = vmatpush.bf16.msra.mxu0 %v1634
        %1758 = vmatpush.bf16.msra.mxu0 %v1632
        %1759 = vmatpush.bf16.msra.mxu0 %v1630
        %1760 = vmatmul.bf16.gmra.mxu0 %v1402
        %v1761 = vpop.f32.mrf.mxu0
        %v1762 = vadd.f32 %v1749, %v1761
        %v1763 = vpop.f32.mrf.mxu0
        %1764 = vdwg.mxu0
        %1765 = vmatpush.bf16.msra.mxu0 %v1660
        %1766 = vmatpush.bf16.msra.mxu0 %v1658
        %1767 = vmatpush.bf16.msra.mxu0 %v1656
        %1768 = vmatpush.bf16.msra.mxu0 %v1654
        %1769 = vmatpush.bf16.msra.mxu0 %v1652
        %1770 = vmatpush.bf16.msra.mxu0 %v1650
        %1771 = vmatpush.bf16.msra.mxu0 %v1648
        %1772 = vmatpush.bf16.msra.mxu0 %v1646
        %1773 = vmatmul.bf16.gmra.mxu0 %v1403
        %v1774 = vpop.f32.mrf.mxu0
        %v1775 = vadd.f32 %v1762, %v1774
        %v1776 = vpop.f32.mrf.mxu0
        %1777 = vdwg.mxu0
        %1778 = vmatpush.bf16.msra.mxu0 %v1613
        %1779 = vmatpush.bf16.msra.mxu0 %v1611
        %1780 = vmatpush.bf16.msra.mxu0 %v1609
        %1781 = vmatpush.bf16.msra.mxu0 %v1607
        %1782 = vmatpush.bf16.msra.mxu0 %v1605
        %1783 = vmatpush.bf16.msra.mxu0 %v1603
        %1784 = vmatpush.bf16.msra.mxu0 %v1601
        %1785 = vmatpush.bf16.msra.mxu0 %v1599
        %1786 = vmatmul.bf16.gmra.mxu0 %v1400
        %v1787 = vpop.f32.mrf.mxu0
        %v1788 = vadd.f32 %v1405, %v1787
        %v1789 = vpop.f32.mrf.mxu0
        %1790 = vdwg.mxu0
        %1791 = vmatpush.bf16.msra.mxu0 %v1629
        %1792 = vmatpush.bf16.msra.mxu0 %v1627
        %1793 = vmatpush.bf16.msra.mxu0 %v1625
        %1794 = vmatpush.bf16.msra.mxu0 %v1623
        %1795 = vmatpush.bf16.msra.mxu0 %v1621
        %1796 = vmatpush.bf16.msra.mxu0 %v1619
        %1797 = vmatpush.bf16.msra.mxu0 %v1617
        %1798 = vmatpush.bf16.msra.mxu0 %v1615
        %1799 = vmatmul.bf16.gmra.mxu0 %v1401
        %v1800 = vpop.f32.mrf.mxu0
        %v1801 = vadd.f32 %v1788, %v1800
        %v1802 = vpop.f32.mrf.mxu0
        %1803 = vdwg.mxu0
        %1804 = vmatpush.bf16.msra.mxu0 %v1645
        %1805 = vmatpush.bf16.msra.mxu0 %v1643
        %1806 = vmatpush.bf16.msra.mxu0 %v1641
        %1807 = vmatpush.bf16.msra.mxu0 %v1639
        %1808 = vmatpush.bf16.msra.mxu0 %v1637
        %1809 = vmatpush.bf16.msra.mxu0 %v1635
        %1810 = vmatpush.bf16.msra.mxu0 %v1633
        %1811 = vmatpush.bf16.msra.mxu0 %v1631
        %1812 = vmatmul.bf16.gmra.mxu0 %v1402
        %v1813 = vpop.f32.mrf.mxu0
        %v1814 = vadd.f32 %v1801, %v1813
        %v1815 = vpop.f32.mrf.mxu0
        %1816 = vdwg.mxu0
        %1817 = vmatpush.bf16.msra.mxu0 %v1661
        %1818 = vmatpush.bf16.msra.mxu0 %v1659
        %1819 = vmatpush.bf16.msra.mxu0 %v1657
        %1820 = vmatpush.bf16.msra.mxu0 %v1655
        %1821 = vmatpush.bf16.msra.mxu0 %v1653
        %1822 = vmatpush.bf16.msra.mxu0 %v1651
        %1823 = vmatpush.bf16.msra.mxu0 %v1649
        %1824 = vmatpush.bf16.msra.mxu0 %v1647
        %1825 = vmatmul.bf16.gmra.mxu0 %v1403
        %v1826 = vpop.f32.mrf.mxu0
        %v1827 = vadd.f32 %v1814, %v1826
        %v1828 = vpop.f32.mrf.mxu0
        %1829 = vdwg.mxu0
        %v1830 = vadd.f32 %v779, %v1775
        %v1831 = vadd.f32 %v780, %v1827
        %v1832 = vpack.c.bf16 %v1830, %v1830
        %v1833 = vpack.c.bf16 %v1831, %v1831
        %v1834 = vld [vmem:[%s6] sm:$0xff]
        %v1835 = vld [vmem:[%s6 + $0x8] sm:$0xff]
        %v1836 = vld [vmem:[%s6 + $0x10] sm:$0xff]
        %v1837 = vld [vmem:[%s6 + $0x18] sm:$0xff]
        %v1838 = vld [vmem:[%s6 + $0x20] sm:$0xff]
        %v1839 = vld [vmem:[%s6 + $0x28] sm:$0xff]
        %v1840 = vld [vmem:[%s6 + $0x30] sm:$0xff]
        %v1841 = vld [vmem:[%s6 + $0x38] sm:$0xff]
        %v1842 = vld [vmem:[%s6 + $0x40] sm:$0xff]
        %v1843 = vld [vmem:[%s6 + $0x48] sm:$0xff]
        %v1844 = vld [vmem:[%s6 + $0x50] sm:$0xff]
        %v1845 = vld [vmem:[%s6 + $0x58] sm:$0xff]
        %v1846 = vld [vmem:[%s6 + $0x60] sm:$0xff]
        %v1847 = vld [vmem:[%s6 + $0x68] sm:$0xff]
        %v1848 = vld [vmem:[%s6 + $0x70] sm:$0xff]
        %v1849 = vld [vmem:[%s6 + $0x78] sm:$0xff]
        %v1850 = vld [vmem:[%s6 + $0x80] sm:$0xff]
        %v1851 = vld [vmem:[%s6 + $0x88] sm:$0xff]
        %v1852 = vld [vmem:[%s6 + $0x90] sm:$0xff]
        %v1853 = vld [vmem:[%s6 + $0x98] sm:$0xff]
        %v1854 = vld [vmem:[%s6 + $0xa0] sm:$0xff]
        %v1855 = vld [vmem:[%s6 + $0xa8] sm:$0xff]
        %v1856 = vld [vmem:[%s6 + $0xb0] sm:$0xff]
        %v1857 = vld [vmem:[%s6 + $0xb8] sm:$0xff]
        %v1858 = vld [vmem:[%s6 + $0xc0] sm:$0xff]
        %v1859 = vld [vmem:[%s6 + $0xc8] sm:$0xff]
        %v1860 = vld [vmem:[%s6 + $0xd0] sm:$0xff]
        %v1861 = vld [vmem:[%s6 + $0xd8] sm:$0xff]
        %v1862 = vld [vmem:[%s6 + $0xe0] sm:$0xff]
        %v1863 = vld [vmem:[%s6 + $0xe8] sm:$0xff]
        %v1864 = vld [vmem:[%s6 + $0xf0] sm:$0xff]
        %v1865 = vld [vmem:[%s6 + $0xf8] sm:$0xff]
        %v1866 = vperm.slane %v553, 5
        %v1867 = vperm.slane %v554, 5
        %v1900 = vunpack.c.l.b16 %v1834
        %v1901 = vunpack.c.h.b16 %v1834
        %v1902 = vunpack.c.l.b16 %v1835
        %v1903 = vunpack.c.h.b16 %v1835
        %v1904 = vunpack.c.l.b16 %v1836
        %v1905 = vunpack.c.h.b16 %v1836
        %v1906 = vunpack.c.l.b16 %v1837
        %v1907 = vunpack.c.h.b16 %v1837
        %v1908 = vunpack.c.l.b16 %v1838
        %v1909 = vunpack.c.h.b16 %v1838
        %v1910 = vunpack.c.l.b16 %v1839
        %v1911 = vunpack.c.h.b16 %v1839
        %v1912 = vunpack.c.l.b16 %v1840
        %v1913 = vunpack.c.h.b16 %v1840
        %v1914 = vunpack.c.l.b16 %v1841
        %v1915 = vunpack.c.h.b16 %v1841
        %v1916 = vunpack.c.l.b16 %v1842
        %v1917 = vunpack.c.h.b16 %v1842
        %v1918 = vunpack.c.l.b16 %v1843
        %v1919 = vunpack.c.h.b16 %v1843
        %v1920 = vunpack.c.l.b16 %v1844
        %v1921 = vunpack.c.h.b16 %v1844
        %v1922 = vunpack.c.l.b16 %v1845
        %v1923 = vunpack.c.h.b16 %v1845
        %v1924 = vunpack.c.l.b16 %v1846
        %v1925 = vunpack.c.h.b16 %v1846
        %v1926 = vunpack.c.l.b16 %v1847
        %v1927 = vunpack.c.h.b16 %v1847
        %v1928 = vunpack.c.l.b16 %v1848
        %v1929 = vunpack.c.h.b16 %v1848
        %v1930 = vunpack.c.l.b16 %v1849
        %v1931 = vunpack.c.h.b16 %v1849
        %v1932 = vunpack.c.l.b16 %v1850
        %v1933 = vunpack.c.h.b16 %v1850
        %v1934 = vunpack.c.l.b16 %v1851
        %v1935 = vunpack.c.h.b16 %v1851
        %v1936 = vunpack.c.l.b16 %v1852
        %v1937 = vunpack.c.h.b16 %v1852
        %v1938 = vunpack.c.l.b16 %v1853
        %v1939 = vunpack.c.h.b16 %v1853
        %v1940 = vunpack.c.l.b16 %v1854
        %v1941 = vunpack.c.h.b16 %v1854
        %v1942 = vunpack.c.l.b16 %v1855
        %v1943 = vunpack.c.h.b16 %v1855
        %v1944 = vunpack.c.l.b16 %v1856
        %v1945 = vunpack.c.h.b16 %v1856
        %v1946 = vunpack.c.l.b16 %v1857
        %v1947 = vunpack.c.h.b16 %v1857
        %v1948 = vunpack.c.l.b16 %v1858
        %v1949 = vunpack.c.h.b16 %v1858
        %v1950 = vunpack.c.l.b16 %v1859
        %v1951 = vunpack.c.h.b16 %v1859
        %v1952 = vunpack.c.l.b16 %v1860
        %v1953 = vunpack.c.h.b16 %v1860
        %v1954 = vunpack.c.l.b16 %v1861
        %v1955 = vunpack.c.h.b16 %v1861
        %v1956 = vunpack.c.l.b16 %v1862
        %v1957 = vunpack.c.h.b16 %v1862
        %v1958 = vunpack.c.l.b16 %v1863
        %v1959 = vunpack.c.h.b16 %v1863
        %v1960 = vunpack.c.l.b16 %v1864
        %v1961 = vunpack.c.h.b16 %v1864
        %v1962 = vunpack.c.l.b16 %v1865
        %v1963 = vunpack.c.h.b16 %v1865
        %v1964 = vpack.c.b16 %v1902, %v1900
        %v1965 = vpack.c.b16 %v1903, %v1901
        %v1966 = vpack.c.b16 %v1906, %v1904
        %v1967 = vpack.c.b16 %v1907, %v1905
        %v1968 = vpack.c.b16 %v1910, %v1908
        %v1969 = vpack.c.b16 %v1911, %v1909
        %v1970 = vpack.c.b16 %v1914, %v1912
        %v1971 = vpack.c.b16 %v1915, %v1913
        %v1972 = vpack.c.b16 %v1918, %v1916
        %v1973 = vpack.c.b16 %v1919, %v1917
        %v1974 = vpack.c.b16 %v1922, %v1920
        %v1975 = vpack.c.b16 %v1923, %v1921
        %v1976 = vpack.c.b16 %v1926, %v1924
        %v1977 = vpack.c.b16 %v1927, %v1925
        %v1978 = vpack.c.b16 %v1930, %v1928
        %v1979 = vpack.c.b16 %v1931, %v1929
        %v1980 = vpack.c.b16 %v1934, %v1932
        %v1981 = vpack.c.b16 %v1935, %v1933
        %v1982 = vpack.c.b16 %v1938, %v1936
        %v1983 = vpack.c.b16 %v1939, %v1937
        %v1984 = vpack.c.b16 %v1942, %v1940
        %v1985 = vpack.c.b16 %v1943, %v1941
        %v1986 = vpack.c.b16 %v1946, %v1944
        %v1987 = vpack.c.b16 %v1947, %v1945
        %v1988 = vpack.c.b16 %v1950, %v1948
        %v1989 = vpack.c.b16 %v1951, %v1949
        %v1990 = vpack.c.b16 %v1954, %v1952
        %v1991 = vpack.c.b16 %v1955, %v1953
        %v1992 = vpack.c.b16 %v1958, %v1956
        %v1993 = vpack.c.b16 %v1959, %v1957
        %v1994 = vpack.c.b16 %v1962, %v1960
        %v1995 = vpack.c.b16 %v1963, %v1961
        %2028 = vmatpush.bf16.msra.mxu0 %v1978
        %2029 = vmatpush.bf16.msra.mxu0 %v1976
        %2030 = vmatpush.bf16.msra.mxu0 %v1974
        %2031 = vmatpush.bf16.msra.mxu0 %v1972
        %2032 = vmatpush.bf16.msra.mxu0 %v1970
        %2033 = vmatpush.bf16.msra.mxu0 %v1968
        %2034 = vmatpush.bf16.msra.mxu0 %v1966
        %2035 = vmatpush.bf16.msra.mxu0 %v1964
        %2036 = vmatmul.bf16.gmra.mxu0 %v1832
        %v2037 = vpop.f32.mrf.mxu0
        %v2038 = vadd.f32 %v1866, %v2037
        %v2039 = vpop.f32.mrf.mxu0
        %2040 = vdwg.mxu0
        %2041 = vmatpush.bf16.msra.mxu0 %v1994
        %2042 = vmatpush.bf16.msra.mxu0 %v1992
        %2043 = vmatpush.bf16.msra.mxu0 %v1990
        %2044 = vmatpush.bf16.msra.mxu0 %v1988
        %2045 = vmatpush.bf16.msra.mxu0 %v1986
        %2046 = vmatpush.bf16.msra.mxu0 %v1984
        %2047 = vmatpush.bf16.msra.mxu0 %v1982
        %2048 = vmatpush.bf16.msra.mxu0 %v1980
        %2049 = vmatmul.bf16.gmra.mxu0 %v1833
        %v2050 = vpop.f32.mrf.mxu0
        %v2051 = vadd.f32 %v2038, %v2050
        %v2052 = vpop.f32.mrf.mxu0
        %2053 = vdwg.mxu0
        %2054 = vmatpush.bf16.msra.mxu0 %v1979
        %2055 = vmatpush.bf16.msra.mxu0 %v1977
        %2056 = vmatpush.bf16.msra.mxu0 %v1975
        %2057 = vmatpush.bf16.msra.mxu0 %v1973
        %2058 = vmatpush.bf16.msra.mxu0 %v1971
        %2059 = vmatpush.bf16.msra.mxu0 %v1969
        %2060 = vmatpush.bf16.msra.mxu0 %v1967
        %2061 = vmatpush.bf16.msra.mxu0 %v1965
        %2062 = vmatmul.bf16.gmra.mxu0 %v1832
        %v2063 = vpop.f32.mrf.mxu0
        %v2064 = vadd.f32 %v1867, %v2063
        %v2065 = vpop.f32.mrf.mxu0
        %2066 = vdwg.mxu0
        %2067 = vmatpush.bf16.msra.mxu0 %v1995
        %2068 = vmatpush.bf16.msra.mxu0 %v1993
        %2069 = vmatpush.bf16.msra.mxu0 %v1991
        %2070 = vmatpush.bf16.msra.mxu0 %v1989
        %2071 = vmatpush.bf16.msra.mxu0 %v1987
        %2072 = vmatpush.bf16.msra.mxu0 %v1985
        %2073 = vmatpush.bf16.msra.mxu0 %v1983
        %2074 = vmatpush.bf16.msra.mxu0 %v1981
        %2075 = vmatmul.bf16.gmra.mxu0 %v1833
        %v2076 = vpop.f32.mrf.mxu0
        %v2077 = vadd.f32 %v2064, %v2076
        %v2078 = vpop.f32.mrf.mxu0
        %2079 = vdwg.mxu0
        %v2080 = vmul.f32 %v2051, 2.0
        %v2081 = vmul.f32 %v2077, 2.0
        %v2082 = vsub.f32 %v2080, 1.0
        %v2083 = vsub.f32 %v2081, 1.0
        %v2084 = vpack.c.bf16 %v2082, %v2082
        %v2085 = vpack.c.bf16 %v2083, %v2083
        %v2086 = vld [vmem:[%s7] sm:$0xff]
        %v2087 = vld [vmem:[%s7 + $0x8] sm:$0xff]
        %v2088 = vld [vmem:[%s7 + $0x10] sm:$0xff]
        %v2089 = vld [vmem:[%s7 + $0x18] sm:$0xff]
        %v2090 = vld [vmem:[%s7 + $0x20] sm:$0xff]
        %v2091 = vld [vmem:[%s7 + $0x28] sm:$0xff]
        %v2092 = vld [vmem:[%s7 + $0x30] sm:$0xff]
        %v2093 = vld [vmem:[%s7 + $0x38] sm:$0xff]
        %v2094 = vld [vmem:[%s7 + $0x40] sm:$0xff]
        %v2095 = vld [vmem:[%s7 + $0x48] sm:$0xff]
        %v2096 = vld [vmem:[%s7 + $0x50] sm:$0xff]
        %v2097 = vld [vmem:[%s7 + $0x58] sm:$0xff]
        %v2098 = vld [vmem:[%s7 + $0x60] sm:$0xff]
        %v2099 = vld [vmem:[%s7 + $0x68] sm:$0xff]
        %v2100 = vld [vmem:[%s7 + $0x70] sm:$0xff]
        %v2101 = vld [vmem:[%s7 + $0x78] sm:$0xff]
        %v2102 = vld [vmem:[%s7 + $0x80] sm:$0xff]
        %v2103 = vld [vmem:[%s7 + $0x88] sm:$0xff]
        %v2104 = vld [vmem:[%s7 + $0x90] sm:$0xff]
        %v2105 = vld [vmem:[%s7 + $0x98] sm:$0xff]
        %v2106 = vld [vmem:[%s7 + $0xa0] sm:$0xff]
        %v2107 = vld [vmem:[%s7 + $0xa8] sm:$0xff]
        %v2108 = vld [vmem:[%s7 + $0xb0] sm:$0xff]
        %v2109 = vld [vmem:[%s7 + $0xb8] sm:$0xff]
        %v2110 = vperm.slane %v553, 6
        %v2111 = vperm.slane %v554, 6
        %v2136 = vunpack.c.l.b16 %v2086
        %v2137 = vunpack.c.h.b16 %v2086
        %v2138 = vunpack.c.l.b16 %v2087
        %v2139 = vunpack.c.h.b16 %v2087
        %v2140 = vunpack.c.l.b16 %v2088
        %v2141 = vunpack.c.h.b16 %v2088
        %v2142 = vunpack.c.l.b16 %v2089
        %v2143 = vunpack.c.h.b16 %v2089
        %v2144 = vunpack.c.l.b16 %v2090
        %v2145 = vunpack.c.h.b16 %v2090
        %v2146 = vunpack.c.l.b16 %v2091
        %v2147 = vunpack.c.h.b16 %v2091
        %v2148 = vunpack.c.l.b16 %v2092
        %v2149 = vunpack.c.h.b16 %v2092
        %v2150 = vunpack.c.l.b16 %v2093
        %v2151 = vunpack.c.h.b16 %v2093
        %v2152 = vunpack.c.l.b16 %v2094
        %v2153 = vunpack.c.h.b16 %v2094
        %v2154 = vunpack.c.l.b16 %v2095
        %v2155 = vunpack.c.h.b16 %v2095
        %v2156 = vunpack.c.l.b16 %v2096
        %v2157 = vunpack.c.h.b16 %v2096
        %v2158 = vunpack.c.l.b16 %v2097
        %v2159 = vunpack.c.h.b16 %v2097
        %v2160 = vunpack.c.l.b16 %v2098
        %v2161 = vunpack.c.h.b16 %v2098
        %v2162 = vunpack.c.l.b16 %v2099
        %v2163 = vunpack.c.h.b16 %v2099
        %v2164 = vunpack.c.l.b16 %v2100
        %v2165 = vunpack.c.h.b16 %v2100
        %v2166 = vunpack.c.l.b16 %v2101
        %v2167 = vunpack.c.h.b16 %v2101
        %v2168 = vunpack.c.l.b16 %v2102
        %v2169 = vunpack.c.h.b16 %v2102
        %v2170 = vunpack.c.l.b16 %v2103
        %v2171 = vunpack.c.h.b16 %v2103
        %v2172 = vunpack.c.l.b16 %v2104
        %v2173 = vunpack.c.h.b16 %v2104
        %v2174 = vunpack.c.l.b16 %v2105
        %v2175 = vunpack.c.h.b16 %v2105
        %v2176 = vunpack.c.l.b16 %v2106
        %v2177 = vunpack.c.h.b16 %v2106
        %v2178 = vunpack.c.l.b16 %v2107
        %v2179 = vunpack.c.h.b16 %v2107
        %v2180 = vunpack.c.l.b16 %v2108
        %v2181 = vunpack.c.h.b16 %v2108
        %v2182 = vunpack.c.l.b16 %v2109
        %v2183 = vunpack.c.h.b16 %v2109
        %v2184 = vpack.c.b16 %v2138, %v2136
        %v2185 = vpack.c.b16 %v2139, %v2137
        %v2186 = vpack.c.b16 %v2142, %v2140
        %v2187 = vpack.c.b16 %v2143, %v2141
        %v2188 = vpack.c.b16 %v2146, %v2144
        %v2189 = vpack.c.b16 %v2147, %v2145
        %v2190 = vpack.c.b16 %v2150, %v2148
        %v2191 = vpack.c.b16 %v2151, %v2149
        %v2192 = vpack.c.b16 %v2154, %v2152
        %v2193 = vpack.c.b16 %v2155, %v2153
        %v2194 = vpack.c.b16 %v2158, %v2156
        %v2195 = vpack.c.b16 %v2159, %v2157
        %v2196 = vpack.c.b16 %v2162, %v2160
        %v2197 = vpack.c.b16 %v2163, %v2161
        %v2198 = vpack.c.b16 %v2166, %v2164
        %v2199 = vpack.c.b16 %v2167, %v2165
        %v2200 = vpack.c.b16 %v2170, %v2168
        %v2201 = vpack.c.b16 %v2171, %v2169
        %v2202 = vpack.c.b16 %v2174, %v2172
        %v2203 = vpack.c.b16 %v2175, %v2173
        %v2204 = vpack.c.b16 %v2178, %v2176
        %v2205 = vpack.c.b16 %v2179, %v2177
        %v2206 = vpack.c.b16 %v2182, %v2180
        %v2207 = vpack.c.b16 %v2183, %v2181
        %v2233 = vsel %vm716, %v2085, 0
        %2235 = vmatpush.bf16.msra.mxu0 %v2198
        %2236 = vmatpush.bf16.msra.mxu0 %v2196
        %2237 = vmatpush.bf16.msra.mxu0 %v2194
        %2238 = vmatpush.bf16.msra.mxu0 %v2192
        %2239 = vmatpush.bf16.msra.mxu0 %v2190
        %2240 = vmatpush.bf16.msra.mxu0 %v2188
        %2241 = vmatpush.bf16.msra.mxu0 %v2186
        %2242 = vmatpush.bf16.msra.mxu0 %v2184
        %2243 = vmatmul.bf16.gmra.mxu0 %v2084
        %v2244 = vpop.f32.mrf.mxu0
        %v2245 = vadd.f32 %v2110, %v2244
        %v2246 = vpop.f32.mrf.mxu0
        %2247 = vdwg.mxu0
        %2248 = vmatpush.bf16.msra.mxu0 0
        %2249 = vmatpush.bf16.msra.mxu0 0
        %2250 = vmatpush.bf16.msra.mxu0 0
        %2251 = vmatpush.bf16.msra.mxu0 0
        %2252 = vmatpush.bf16.msra.mxu0 %v2206
        %2253 = vmatpush.bf16.msra.mxu0 %v2204
        %2254 = vmatpush.bf16.msra.mxu0 %v2202
        %2255 = vmatpush.bf16.msra.mxu0 %v2200
        %2256 = vmatmul.bf16.gmra.mxu0 %v2233
        %v2257 = vpop.f32.mrf.mxu0
        %v2258 = vadd.f32 %v2245, %v2257
        %v2259 = vpop.f32.mrf.mxu0
        %2260 = vdwg.mxu0
        %2261 = vmatpush.bf16.msra.mxu0 %v2199
        %2262 = vmatpush.bf16.msra.mxu0 %v2197
        %2263 = vmatpush.bf16.msra.mxu0 %v2195
        %2264 = vmatpush.bf16.msra.mxu0 %v2193
        %2265 = vmatpush.bf16.msra.mxu0 %v2191
        %2266 = vmatpush.bf16.msra.mxu0 %v2189
        %2267 = vmatpush.bf16.msra.mxu0 %v2187
        %2268 = vmatpush.bf16.msra.mxu0 %v2185
        %2269 = vmatmul.bf16.gmra.mxu0 %v2084
        %v2270 = vpop.f32.mrf.mxu0
        %v2271 = vadd.f32 %v2111, %v2270
        %v2272 = vpop.f32.mrf.mxu0
        %2273 = vdwg.mxu0
        %2274 = vmatpush.bf16.msra.mxu0 0
        %2275 = vmatpush.bf16.msra.mxu0 0
        %2276 = vmatpush.bf16.msra.mxu0 0
        %2277 = vmatpush.bf16.msra.mxu0 0
        %2278 = vmatpush.bf16.msra.mxu0 %v2207
        %2279 = vmatpush.bf16.msra.mxu0 %v2205
        %2280 = vmatpush.bf16.msra.mxu0 %v2203
        %2281 = vmatpush.bf16.msra.mxu0 %v2201
        %2282 = vmatmul.bf16.gmra.mxu0 %v2233
        %v2283 = vpop.f32.mrf.mxu0
        %v2284 = vadd.f32 %v2271, %v2283
        %v2285 = vpop.f32.mrf.mxu0
        %2286 = vdwg.mxu0
        %v2287 = vld [vmem:[%s539] sm:$0xff]
        %2289 = vst [vmem:[#allocation1] ss:$2 sm:$0xff] %v2287
        %v2290 = vld.sshfl [vmem:[#allocation1] sm:$0xff pattern:$0x75316420]
        %v2291 = vld.sshfl [vmem:[#allocation1 + $0x8] sm:$0xff pattern:$0x75316420]
        %v2294 = vadd.f32 %v2258, %v2290
        %v2295 = vadd.f32 %v2284, %v2291
        %v2296 = vld [vmem:[#allocation5] sm:$0xff]
        %v2297 = vld [vmem:[#allocation5 + $0x8] sm:$0xff]
        %v2298 = vld [vmem:[#allocation5 + $0x10] sm:$0xff]
        %v2299 = vld [vmem:[#allocation5 + $0x18] sm:$0xff]
        %v2300 = vld [vmem:[#allocation5 + $0x20] sm:$0xff]
        %v2301 = vld [vmem:[#allocation5 + $0x28] sm:$0xff]
        %v2302 = vld [vmem:[#allocation5 + $0x30] sm:$0xff]
        %v2303 = vld [vmem:[#allocation5 + $0x38] sm:$0xff]
        %v2304 = vld [vmem:[#allocation5 + $0x40] sm:$0xff]
        %v2305 = vld [vmem:[#allocation5 + $0x48] sm:$0xff]
        %v2306 = vld [vmem:[#allocation5 + $0x50] sm:$0xff]
        %v2307 = vld [vmem:[#allocation5 + $0x58] sm:$0xff]
        %v2308 = vld [vmem:[#allocation5 + $0x60] sm:$0xff]
        %v2309 = vld [vmem:[#allocation5 + $0x68] sm:$0xff]
        %v2310 = vld [vmem:[#allocation5 + $0x70] sm:$0xff]
        %v2311 = vld [vmem:[#allocation5 + $0x78] sm:$0xff]
        %v2312 = vld [vmem:[#allocation5 + $0x80] sm:$0xff]
        %v2313 = vld [vmem:[#allocation5 + $0x88] sm:$0xff]
        %v2314 = vld [vmem:[#allocation5 + $0x90] sm:$0xff]
        %v2315 = vld [vmem:[#allocation5 + $0x98] sm:$0xff]
        %v2316 = vld [vmem:[#allocation5 + $0xa0] sm:$0xff]
        %v2317 = vld [vmem:[#allocation5 + $0xa8] sm:$0xff]
        %v2318 = vld [vmem:[#allocation5 + $0xb0] sm:$0xff]
        %v2319 = vld [vmem:[#allocation5 + $0xb8] sm:$0xff]
        %v2320 = vld [vmem:[#allocation5 + $0xc0] sm:$0xff]
        %v2321 = vld [vmem:[#allocation5 + $0xc8] sm:$0xff]
        %v2322 = vld [vmem:[#allocation5 + $0xd0] sm:$0xff]
        %v2323 = vld [vmem:[#allocation5 + $0xd8] sm:$0xff]
        %v2324 = vld [vmem:[#allocation5 + $0xe0] sm:$0xff]
        %v2325 = vld [vmem:[#allocation5 + $0xe8] sm:$0xff]
        %v2326 = vld [vmem:[#allocation5 + $0xf0] sm:$0xff]
        %v2327 = vld [vmem:[#allocation5 + $0xf8] sm:$0xff]
        %v2328 = vld [vmem:[#allocation5 + $0x100] sm:$0xff]
        %v2329 = vld [vmem:[#allocation5 + $0x108] sm:$0xff]
        %v2330 = vld [vmem:[#allocation5 + $0x110] sm:$0xff]
        %v2331 = vld [vmem:[#allocation5 + $0x118] sm:$0xff]
        %v2332 = vld [vmem:[#allocation5 + $0x120] sm:$0xff]
        %v2333 = vld [vmem:[#allocation5 + $0x128] sm:$0xff]
        %v2334 = vld [vmem:[#allocation5 + $0x130] sm:$0xff]
        %v2335 = vld [vmem:[#allocation5 + $0x138] sm:$0xff]
        %v2336 = vld [vmem:[#allocation5 + $0x140] sm:$0xff]
        %v2337 = vld [vmem:[#allocation5 + $0x148] sm:$0xff]
        %v2338 = vld [vmem:[#allocation5 + $0x150] sm:$0xff]
        %v2339 = vld [vmem:[#allocation5 + $0x158] sm:$0xff]
        %v2340 = vld [vmem:[#allocation5 + $0x160] sm:$0xff]
        %v2341 = vld [vmem:[#allocation5 + $0x168] sm:$0xff]
        %v2342 = vld [vmem:[#allocation5 + $0x170] sm:$0xff]
        %v2343 = vld [vmem:[#allocation5 + $0x178] sm:$0xff]
        %v2344 = vld [vmem:[#allocation5 + $0x180] sm:$0xff]
        %v2345 = vld [vmem:[#allocation5 + $0x188] sm:$0xff]
        %v2346 = vld [vmem:[#allocation5 + $0x190] sm:$0xff]
        %v2347 = vld [vmem:[#allocation5 + $0x198] sm:$0xff]
        %v2348 = vld [vmem:[#allocation5 + $0x1a0] sm:$0xff]
        %v2349 = vld [vmem:[#allocation5 + $0x1a8] sm:$0xff]
        %v2350 = vld [vmem:[#allocation5 + $0x1b0] sm:$0xff]
        %v2351 = vld [vmem:[#allocation5 + $0x1b8] sm:$0xff]
        %v2352 = vld [vmem:[#allocation5 + $0x1c0] sm:$0xff]
        %v2353 = vld [vmem:[#allocation5 + $0x1c8] sm:$0xff]
        %v2354 = vld [vmem:[#allocation5 + $0x1d0] sm:$0xff]
        %v2355 = vld [vmem:[#allocation5 + $0x1d8] sm:$0xff]
        %v2356 = vld [vmem:[#allocation5 + $0x1e0] sm:$0xff]
        %v2357 = vld [vmem:[#allocation5 + $0x1e8] sm:$0xff]
        %v2358 = vld [vmem:[#allocation5 + $0x1f0] sm:$0xff]
        %v2359 = vld [vmem:[#allocation5 + $0x1f8] sm:$0xff]
        %v2360 = vld [vmem:[#allocation7] sm:$0xff]
        %v2361 = vld [vmem:[#allocation7 + $0x8] sm:$0xff]
        %v2362 = vld [vmem:[#allocation7 + $0x10] sm:$0xff]
        %v2363 = vld [vmem:[#allocation7 + $0x18] sm:$0xff]
        %v2364 = vld [vmem:[#allocation7 + $0x20] sm:$0xff]
        %v2365 = vld [vmem:[#allocation7 + $0x28] sm:$0xff]
        %v2366 = vld [vmem:[#allocation7 + $0x30] sm:$0xff]
        %v2367 = vld [vmem:[#allocation7 + $0x38] sm:$0xff]
        %v2368 = vld [vmem:[#allocation7 + $0x40] sm:$0xff]
        %v2369 = vld [vmem:[#allocation7 + $0x48] sm:$0xff]
        %v2370 = vld [vmem:[#allocation7 + $0x50] sm:$0xff]
        %v2371 = vld [vmem:[#allocation7 + $0x58] sm:$0xff]
        %v2372 = vld [vmem:[#allocation7 + $0x60] sm:$0xff]
        %v2373 = vld [vmem:[#allocation7 + $0x68] sm:$0xff]
        %v2374 = vld [vmem:[#allocation7 + $0x70] sm:$0xff]
        %v2375 = vld [vmem:[#allocation7 + $0x78] sm:$0xff]
        %v2376 = vld [vmem:[#allocation7 + $0x80] sm:$0xff]
        %v2377 = vld [vmem:[#allocation7 + $0x88] sm:$0xff]
        %v2378 = vld [vmem:[#allocation7 + $0x90] sm:$0xff]
        %v2379 = vld [vmem:[#allocation7 + $0x98] sm:$0xff]
        %v2380 = vld [vmem:[#allocation7 + $0xa0] sm:$0xff]
        %v2381 = vld [vmem:[#allocation7 + $0xa8] sm:$0xff]
        %v2382 = vld [vmem:[#allocation7 + $0xb0] sm:$0xff]
        %v2383 = vld [vmem:[#allocation7 + $0xb8] sm:$0xff]
        %v2384 = vld [vmem:[#allocation7 + $0xc0] sm:$0xff]
        %v2385 = vld [vmem:[#allocation7 + $0xc8] sm:$0xff]
        %v2386 = vld [vmem:[#allocation7 + $0xd0] sm:$0xff]
        %v2387 = vld [vmem:[#allocation7 + $0xd8] sm:$0xff]
        %v2388 = vld [vmem:[#allocation7 + $0xe0] sm:$0xff]
        %v2389 = vld [vmem:[#allocation7 + $0xe8] sm:$0xff]
        %v2390 = vld [vmem:[#allocation7 + $0xf0] sm:$0xff]
        %v2391 = vld [vmem:[#allocation7 + $0xf8] sm:$0xff]
        %v2392 = vld [vmem:[#allocation7 + $0x100] sm:$0xff]
        %v2393 = vld [vmem:[#allocation7 + $0x108] sm:$0xff]
        %v2394 = vld [vmem:[#allocation7 + $0x110] sm:$0xff]
        %v2395 = vld [vmem:[#allocation7 + $0x118] sm:$0xff]
        %v2396 = vld [vmem:[#allocation7 + $0x120] sm:$0xff]
        %v2397 = vld [vmem:[#allocation7 + $0x128] sm:$0xff]
        %v2398 = vld [vmem:[#allocation7 + $0x130] sm:$0xff]
        %v2399 = vld [vmem:[#allocation7 + $0x138] sm:$0xff]
        %v2400 = vld [vmem:[#allocation7 + $0x140] sm:$0xff]
        %v2401 = vld [vmem:[#allocation7 + $0x148] sm:$0xff]
        %v2402 = vld [vmem:[#allocation7 + $0x150] sm:$0xff]
        %v2403 = vld [vmem:[#allocation7 + $0x158] sm:$0xff]
        %v2404 = vld [vmem:[#allocation7 + $0x160] sm:$0xff]
        %v2405 = vld [vmem:[#allocation7 + $0x168] sm:$0xff]
        %v2406 = vld [vmem:[#allocation7 + $0x170] sm:$0xff]
        %v2407 = vld [vmem:[#allocation7 + $0x178] sm:$0xff]
        %v2408 = vld [vmem:[#allocation7 + $0x180] sm:$0xff]
        %v2409 = vld [vmem:[#allocation7 + $0x188] sm:$0xff]
        %v2410 = vld [vmem:[#allocation7 + $0x190] sm:$0xff]
        %v2411 = vld [vmem:[#allocation7 + $0x198] sm:$0xff]
        %v2412 = vld [vmem:[#allocation7 + $0x1a0] sm:$0xff]
        %v2413 = vld [vmem:[#allocation7 + $0x1a8] sm:$0xff]
        %v2414 = vld [vmem:[#allocation7 + $0x1b0] sm:$0xff]
        %v2415 = vld [vmem:[#allocation7 + $0x1b8] sm:$0xff]
        %v2416 = vld [vmem:[#allocation7 + $0x1c0] sm:$0xff]
        %v2417 = vld [vmem:[#allocation7 + $0x1c8] sm:$0xff]
        %v2418 = vld [vmem:[#allocation7 + $0x1d0] sm:$0xff]
        %v2419 = vld [vmem:[#allocation7 + $0x1d8] sm:$0xff]
        %v2420 = vld [vmem:[#allocation7 + $0x1e0] sm:$0xff]
        %v2421 = vld [vmem:[#allocation7 + $0x1e8] sm:$0xff]
        %v2422 = vld [vmem:[#allocation7 + $0x1f0] sm:$0xff]
        %v2423 = vld [vmem:[#allocation7 + $0x1f8] sm:$0xff]
        %v2424 = vsel %vm909, %v2294, 0.0
        %v2425 = vsel %vm909, %v2295, 0.0
        %v2426 = vadd.f32 %v2424, %v2425
        %2427 = vadd.xlane.f32.xlu0 %v2426
        %v2428 = vpop.xlane.xlu0 %2427
        %v2429 = vmul.f32 %v2428, %v921
        %v2430 = vsub.f32 %v2294, %v2429
        %v2431 = vsub.f32 %v2295, %v2429
        %v2432 = vmul.f32 %v2430, %v2430
        %v2433 = vmul.f32 %v2431, %v2431
        %v2434 = vsel %vm909, %v2432, 0.0
        %v2435 = vsel %vm909, %v2433, 0.0
        %v2436 = vadd.f32 %v2434, %v2435
        %2437 = vadd.xlane.f32.xlu0 %v2436
        %v2438 = vpop.xlane.xlu0 %2437
        %v2439 = vmul.f32 %v2438, %v921
        %v2440 = vadd.f32 %v2439, 1e-06
        %v2441 = vrsqrt.pop %v2440
        %v2442 = vmul.f32 %v2441, %v2440
        %v2443 = vmul.f32 %v2442, %v2441
        %v2444 = vmul.f32 0.5, %v2443
        %v2445 = vsub.f32 1.5, %v2444
        %v2446 = vmul.f32 %v2441, %v2445
        %vm2447 = vweird.f32 %v2440
        %vm2448 = vweird.f32 %v2441
        %vm2449 = vmor %vm2447, %vm2448
        %v2450 = vsel %vm2449, %v2441, %v2446
        %v2451 = vmul.f32 %v2430, %v2450
        %v2452 = vmul.f32 %v2431, %v2450
        %v2453 = vperm.slane %v553, 7
        %v2454 = vperm.slane %v554, 7
        %v2455 = vmul.f32 %v2451, %v2453
        %v2456 = vmul.f32 %v2452, %v2454
        %v2457 = vperm.slane %v557, 0
        %v2458 = vperm.slane %v558, 0
        %v2459 = vadd.f32 %v2455, %v2457
        %v2460 = vadd.f32 %v2456, %v2458
        %v2461 = vpack.c.bf16 %v2459, %v2459
        %v2462 = vpack.c.bf16 %v2460, %v2460
        %v2463 = vperm.slane %v557, 1
        %v2464 = vperm.slane %v558, 1
        %v2465 = vperm.slane %v559, 1
        %v2466 = vperm.slane %v560, 1
        %v2531 = vunpack.c.l.b16 %v2296
        %v2532 = vunpack.c.h.b16 %v2296
        %v2533 = vunpack.c.l.b16 %v2297
        %v2534 = vunpack.c.h.b16 %v2297
        %v2535 = vunpack.c.l.b16 %v2298
        %v2536 = vunpack.c.h.b16 %v2298
        %v2537 = vunpack.c.l.b16 %v2299
        %v2538 = vunpack.c.h.b16 %v2299
        %v2539 = vunpack.c.l.b16 %v2300
        %v2540 = vunpack.c.h.b16 %v2300
        %v2541 = vunpack.c.l.b16 %v2301
        %v2542 = vunpack.c.h.b16 %v2301
        %v2543 = vunpack.c.l.b16 %v2302
        %v2544 = vunpack.c.h.b16 %v2302
        %v2545 = vunpack.c.l.b16 %v2303
        %v2546 = vunpack.c.h.b16 %v2303
        %v2547 = vunpack.c.l.b16 %v2304
        %v2548 = vunpack.c.h.b16 %v2304
        %v2549 = vunpack.c.l.b16 %v2305
        %v2550 = vunpack.c.h.b16 %v2305
        %v2551 = vunpack.c.l.b16 %v2306
        %v2552 = vunpack.c.h.b16 %v2306
        %v2553 = vunpack.c.l.b16 %v2307
        %v2554 = vunpack.c.h.b16 %v2307
        %v2555 = vunpack.c.l.b16 %v2308
        %v2556 = vunpack.c.h.b16 %v2308
        %v2557 = vunpack.c.l.b16 %v2309
        %v2558 = vunpack.c.h.b16 %v2309
        %v2559 = vunpack.c.l.b16 %v2310
        %v2560 = vunpack.c.h.b16 %v2310
        %v2561 = vunpack.c.l.b16 %v2311
        %v2562 = vunpack.c.h.b16 %v2311
        %v2563 = vunpack.c.l.b16 %v2312
        %v2564 = vunpack.c.h.b16 %v2312
        %v2565 = vunpack.c.l.b16 %v2313
        %v2566 = vunpack.c.h.b16 %v2313
        %v2567 = vunpack.c.l.b16 %v2314
        %v2568 = vunpack.c.h.b16 %v2314
        %v2569 = vunpack.c.l.b16 %v2315
        %v2570 = vunpack.c.h.b16 %v2315
        %v2571 = vunpack.c.l.b16 %v2316
        %v2572 = vunpack.c.h.b16 %v2316
        %v2573 = vunpack.c.l.b16 %v2317
        %v2574 = vunpack.c.h.b16 %v2317
        %v2575 = vunpack.c.l.b16 %v2318
        %v2576 = vunpack.c.h.b16 %v2318
        %v2577 = vunpack.c.l.b16 %v2319
        %v2578 = vunpack.c.h.b16 %v2319
        %v2579 = vunpack.c.l.b16 %v2320
        %v2580 = vunpack.c.h.b16 %v2320
        %v2581 = vunpack.c.l.b16 %v2321
        %v2582 = vunpack.c.h.b16 %v2321
        %v2583 = vunpack.c.l.b16 %v2322
        %v2584 = vunpack.c.h.b16 %v2322
        %v2585 = vunpack.c.l.b16 %v2323
        %v2586 = vunpack.c.h.b16 %v2323
        %v2587 = vunpack.c.l.b16 %v2324
        %v2588 = vunpack.c.h.b16 %v2324
        %v2589 = vunpack.c.l.b16 %v2325
        %v2590 = vunpack.c.h.b16 %v2325
        %v2591 = vunpack.c.l.b16 %v2326
        %v2592 = vunpack.c.h.b16 %v2326
        %v2593 = vunpack.c.l.b16 %v2327
        %v2594 = vunpack.c.h.b16 %v2327
        %v2595 = vunpack.c.l.b16 %v2328
        %v2596 = vunpack.c.h.b16 %v2328
        %v2597 = vunpack.c.l.b16 %v2329
        %v2598 = vunpack.c.h.b16 %v2329
        %v2599 = vunpack.c.l.b16 %v2330
        %v2600 = vunpack.c.h.b16 %v2330
        %v2601 = vunpack.c.l.b16 %v2331
        %v2602 = vunpack.c.h.b16 %v2331
        %v2603 = vunpack.c.l.b16 %v2332
        %v2604 = vunpack.c.h.b16 %v2332
        %v2605 = vunpack.c.l.b16 %v2333
        %v2606 = vunpack.c.h.b16 %v2333
        %v2607 = vunpack.c.l.b16 %v2334
        %v2608 = vunpack.c.h.b16 %v2334
        %v2609 = vunpack.c.l.b16 %v2335
        %v2610 = vunpack.c.h.b16 %v2335
        %v2611 = vunpack.c.l.b16 %v2336
        %v2612 = vunpack.c.h.b16 %v2336
        %v2613 = vunpack.c.l.b16 %v2337
        %v2614 = vunpack.c.h.b16 %v2337
        %v2615 = vunpack.c.l.b16 %v2338
        %v2616 = vunpack.c.h.b16 %v2338
        %v2617 = vunpack.c.l.b16 %v2339
        %v2618 = vunpack.c.h.b16 %v2339
        %v2619 = vunpack.c.l.b16 %v2340
        %v2620 = vunpack.c.h.b16 %v2340
        %v2621 = vunpack.c.l.b16 %v2341
        %v2622 = vunpack.c.h.b16 %v2341
        %v2623 = vunpack.c.l.b16 %v2342
        %v2624 = vunpack.c.h.b16 %v2342
        %v2625 = vunpack.c.l.b16 %v2343
        %v2626 = vunpack.c.h.b16 %v2343
        %v2627 = vunpack.c.l.b16 %v2344
        %v2628 = vunpack.c.h.b16 %v2344
        %v2629 = vunpack.c.l.b16 %v2345
        %v2630 = vunpack.c.h.b16 %v2345
        %v2631 = vunpack.c.l.b16 %v2346
        %v2632 = vunpack.c.h.b16 %v2346
        %v2633 = vunpack.c.l.b16 %v2347
        %v2634 = vunpack.c.h.b16 %v2347
        %v2635 = vunpack.c.l.b16 %v2348
        %v2636 = vunpack.c.h.b16 %v2348
        %v2637 = vunpack.c.l.b16 %v2349
        %v2638 = vunpack.c.h.b16 %v2349
        %v2639 = vunpack.c.l.b16 %v2350
        %v2640 = vunpack.c.h.b16 %v2350
        %v2641 = vunpack.c.l.b16 %v2351
        %v2642 = vunpack.c.h.b16 %v2351
        %v2643 = vunpack.c.l.b16 %v2352
        %v2644 = vunpack.c.h.b16 %v2352
        %v2645 = vunpack.c.l.b16 %v2353
        %v2646 = vunpack.c.h.b16 %v2353
        %v2647 = vunpack.c.l.b16 %v2354
        %v2648 = vunpack.c.h.b16 %v2354
        %v2649 = vunpack.c.l.b16 %v2355
        %v2650 = vunpack.c.h.b16 %v2355
        %v2651 = vunpack.c.l.b16 %v2356
        %v2652 = vunpack.c.h.b16 %v2356
        %v2653 = vunpack.c.l.b16 %v2357
        %v2654 = vunpack.c.h.b16 %v2357
        %v2655 = vunpack.c.l.b16 %v2358
        %v2656 = vunpack.c.h.b16 %v2358
        %v2657 = vunpack.c.l.b16 %v2359
        %v2658 = vunpack.c.h.b16 %v2359
        %v2659 = vpack.c.b16 %v2535, %v2531
        %v2660 = vpack.c.b16 %v2536, %v2532
        %v2661 = vpack.c.b16 %v2537, %v2533
        %v2662 = vpack.c.b16 %v2538, %v2534
        %v2663 = vpack.c.b16 %v2543, %v2539
        %v2664 = vpack.c.b16 %v2544, %v2540
        %v2665 = vpack.c.b16 %v2545, %v2541
        %v2666 = vpack.c.b16 %v2546, %v2542
        %v2667 = vpack.c.b16 %v2551, %v2547
        %v2668 = vpack.c.b16 %v2552, %v2548
        %v2669 = vpack.c.b16 %v2553, %v2549
        %v2670 = vpack.c.b16 %v2554, %v2550
        %v2671 = vpack.c.b16 %v2559, %v2555
        %v2672 = vpack.c.b16 %v2560, %v2556
        %v2673 = vpack.c.b16 %v2561, %v2557
        %v2674 = vpack.c.b16 %v2562, %v2558
        %v2675 = vpack.c.b16 %v2567, %v2563
        %v2676 = vpack.c.b16 %v2568, %v2564
        %v2677 = vpack.c.b16 %v2569, %v2565
        %v2678 = vpack.c.b16 %v2570, %v2566
        %v2679 = vpack.c.b16 %v2575, %v2571
        %v2680 = vpack.c.b16 %v2576, %v2572
        %v2681 = vpack.c.b16 %v2577, %v2573
        %v2682 = vpack.c.b16 %v2578, %v2574
        %v2683 = vpack.c.b16 %v2583, %v2579
        %v2684 = vpack.c.b16 %v2584, %v2580
        %v2685 = vpack.c.b16 %v2585, %v2581
        %v2686 = vpack.c.b16 %v2586, %v2582
        %v2687 = vpack.c.b16 %v2591, %v2587
        %v2688 = vpack.c.b16 %v2592, %v2588
        %v2689 = vpack.c.b16 %v2593, %v2589
        %v2690 = vpack.c.b16 %v2594, %v2590
        %v2691 = vpack.c.b16 %v2599, %v2595
        %v2692 = vpack.c.b16 %v2600, %v2596
        %v2693 = vpack.c.b16 %v2601, %v2597
        %v2694 = vpack.c.b16 %v2602, %v2598
        %v2695 = vpack.c.b16 %v2607, %v2603
        %v2696 = vpack.c.b16 %v2608, %v2604
        %v2697 = vpack.c.b16 %v2609, %v2605
        %v2698 = vpack.c.b16 %v2610, %v2606
        %v2699 = vpack.c.b16 %v2615, %v2611
        %v2700 = vpack.c.b16 %v2616, %v2612
        %v2701 = vpack.c.b16 %v2617, %v2613
        %v2702 = vpack.c.b16 %v2618, %v2614
        %v2703 = vpack.c.b16 %v2623, %v2619
        %v2704 = vpack.c.b16 %v2624, %v2620
        %v2705 = vpack.c.b16 %v2625, %v2621
        %v2706 = vpack.c.b16 %v2626, %v2622
        %v2707 = vpack.c.b16 %v2631, %v2627
        %v2708 = vpack.c.b16 %v2632, %v2628
        %v2709 = vpack.c.b16 %v2633, %v2629
        %v2710 = vpack.c.b16 %v2634, %v2630
        %v2711 = vpack.c.b16 %v2639, %v2635
        %v2712 = vpack.c.b16 %v2640, %v2636
        %v2713 = vpack.c.b16 %v2641, %v2637
        %v2714 = vpack.c.b16 %v2642, %v2638
        %v2715 = vpack.c.b16 %v2647, %v2643
        %v2716 = vpack.c.b16 %v2648, %v2644
        %v2717 = vpack.c.b16 %v2649, %v2645
        %v2718 = vpack.c.b16 %v2650, %v2646
        %v2719 = vpack.c.b16 %v2655, %v2651
        %v2720 = vpack.c.b16 %v2656, %v2652
        %v2721 = vpack.c.b16 %v2657, %v2653
        %v2722 = vpack.c.b16 %v2658, %v2654
        %2787 = vmatpush.bf16.msra.mxu0 %v2687
        %2788 = vmatpush.bf16.msra.mxu0 %v2683
        %2789 = vmatpush.bf16.msra.mxu0 %v2679
        %2790 = vmatpush.bf16.msra.mxu0 %v2675
        %2791 = vmatpush.bf16.msra.mxu0 %v2671
        %2792 = vmatpush.bf16.msra.mxu0 %v2667
        %2793 = vmatpush.bf16.msra.mxu0 %v2663
        %2794 = vmatpush.bf16.msra.mxu0 %v2659
        %2795 = vmatmul.bf16.gmra.mxu0 %v2461
        %v2796 = vpop.f32.mrf.mxu0
        %v2797 = vadd.f32 %v2463, %v2796
        %v2798 = vpop.f32.mrf.mxu0
        %2799 = vdwg.mxu0
        %2800 = vmatpush.bf16.msra.mxu0 %v2719
        %2801 = vmatpush.bf16.msra.mxu0 %v2715
        %2802 = vmatpush.bf16.msra.mxu0 %v2711
        %2803 = vmatpush.bf16.msra.mxu0 %v2707
        %2804 = vmatpush.bf16.msra.mxu0 %v2703
        %2805 = vmatpush.bf16.msra.mxu0 %v2699
        %2806 = vmatpush.bf16.msra.mxu0 %v2695
        %2807 = vmatpush.bf16.msra.mxu0 %v2691
        %2808 = vmatmul.bf16.gmra.mxu0 %v2462
        %v2809 = vpop.f32.mrf.mxu0
        %v2810 = vadd.f32 %v2797, %v2809
        %v2811 = vpop.f32.mrf.mxu0
        %2812 = vdwg.mxu0
        %2813 = vmatpush.bf16.msra.mxu0 %v2688
        %2814 = vmatpush.bf16.msra.mxu0 %v2684
        %2815 = vmatpush.bf16.msra.mxu0 %v2680
        %2816 = vmatpush.bf16.msra.mxu0 %v2676
        %2817 = vmatpush.bf16.msra.mxu0 %v2672
        %2818 = vmatpush.bf16.msra.mxu0 %v2668
        %2819 = vmatpush.bf16.msra.mxu0 %v2664
        %2820 = vmatpush.bf16.msra.mxu0 %v2660
        %2821 = vmatmul.bf16.gmra.mxu0 %v2461
        %v2822 = vpop.f32.mrf.mxu0
        %v2823 = vadd.f32 %v2464, %v2822
        %v2824 = vpop.f32.mrf.mxu0
        %2825 = vdwg.mxu0
        %2826 = vmatpush.bf16.msra.mxu0 %v2720
        %2827 = vmatpush.bf16.msra.mxu0 %v2716
        %2828 = vmatpush.bf16.msra.mxu0 %v2712
        %2829 = vmatpush.bf16.msra.mxu0 %v2708
        %2830 = vmatpush.bf16.msra.mxu0 %v2704
        %2831 = vmatpush.bf16.msra.mxu0 %v2700
        %2832 = vmatpush.bf16.msra.mxu0 %v2696
        %2833 = vmatpush.bf16.msra.mxu0 %v2692
        %2834 = vmatmul.bf16.gmra.mxu0 %v2462
        %v2835 = vpop.f32.mrf.mxu0
        %v2836 = vadd.f32 %v2823, %v2835
        %v2837 = vpop.f32.mrf.mxu0
        %2838 = vdwg.mxu0
        %2839 = vmatpush.bf16.msra.mxu0 %v2689
        %2840 = vmatpush.bf16.msra.mxu0 %v2685
        %2841 = vmatpush.bf16.msra.mxu0 %v2681
        %2842 = vmatpush.bf16.msra.mxu0 %v2677
        %2843 = vmatpush.bf16.msra.mxu0 %v2673
        %2844 = vmatpush.bf16.msra.mxu0 %v2669
        %2845 = vmatpush.bf16.msra.mxu0 %v2665
        %2846 = vmatpush.bf16.msra.mxu0 %v2661
        %2847 = vmatmul.bf16.gmra.mxu0 %v2461
        %v2848 = vpop.f32.mrf.mxu0
        %v2849 = vadd.f32 %v2465, %v2848
        %v2850 = vpop.f32.mrf.mxu0
        %2851 = vdwg.mxu0
        %2852 = vmatpush.bf16.msra.mxu0 %v2721
        %2853 = vmatpush.bf16.msra.mxu0 %v2717
        %2854 = vmatpush.bf16.msra.mxu0 %v2713
        %2855 = vmatpush.bf16.msra.mxu0 %v2709
        %2856 = vmatpush.bf16.msra.mxu0 %v2705
        %2857 = vmatpush.bf16.msra.mxu0 %v2701
        %2858 = vmatpush.bf16.msra.mxu0 %v2697
        %2859 = vmatpush.bf16.msra.mxu0 %v2693
        %2860 = vmatmul.bf16.gmra.mxu0 %v2462
        %v2861 = vpop.f32.mrf.mxu0
        %v2862 = vadd.f32 %v2849, %v2861
        %v2863 = vpop.f32.mrf.mxu0
        %2864 = vdwg.mxu0
        %2865 = vmatpush.bf16.msra.mxu0 %v2690
        %2866 = vmatpush.bf16.msra.mxu0 %v2686
        %2867 = vmatpush.bf16.msra.mxu0 %v2682
        %2868 = vmatpush.bf16.msra.mxu0 %v2678
        %2869 = vmatpush.bf16.msra.mxu0 %v2674
        %2870 = vmatpush.bf16.msra.mxu0 %v2670
        %2871 = vmatpush.bf16.msra.mxu0 %v2666
        %2872 = vmatpush.bf16.msra.mxu0 %v2662
        %2873 = vmatmul.bf16.gmra.mxu0 %v2461
        %v2874 = vpop.f32.mrf.mxu0
        %v2875 = vadd.f32 %v2466, %v2874
        %v2876 = vpop.f32.mrf.mxu0
        %2877 = vdwg.mxu0
        %2878 = vmatpush.bf16.msra.mxu0 %v2722
        %2879 = vmatpush.bf16.msra.mxu0 %v2718
        %2880 = vmatpush.bf16.msra.mxu0 %v2714
        %2881 = vmatpush.bf16.msra.mxu0 %v2710
        %2882 = vmatpush.bf16.msra.mxu0 %v2706
        %2883 = vmatpush.bf16.msra.mxu0 %v2702
        %2884 = vmatpush.bf16.msra.mxu0 %v2698
        %2885 = vmatpush.bf16.msra.mxu0 %v2694
        %2886 = vmatmul.bf16.gmra.mxu0 %v2462
        %v2887 = vpop.f32.mrf.mxu0
        %v2888 = vadd.f32 %v2875, %v2887
        %v2889 = vpop.f32.mrf.mxu0
        %2890 = vdwg.mxu0
        %v2891 = vmul.f32 %v2810, 0.5
        %v2892 = vmul.f32 %v2836, 0.5
        %v2893 = vmul.f32 %v2862, 0.5
        %v2894 = vmul.f32 %v2888, 0.5
        %v2895 = vtanh.pop %v2891
        %v2896 = vtanh.pop %v2892
        %v2897 = vtanh.pop %v2893
        %v2898 = vtanh.pop %v2894
        %v2899 = vadd.f32 %v2895, 1.0
        %v2900 = vadd.f32 %v2896, 1.0
        %v2901 = vadd.f32 %v2897, 1.0
        %v2902 = vadd.f32 %v2898, 1.0
        %v2903 = vmul.f32 %v2891, %v2899
        %v2904 = vmul.f32 %v2892, %v2900
        %v2905 = vmul.f32 %v2893, %v2901
        %v2906 = vmul.f32 %v2894, %v2902
        %v2907 = vpack.c.bf16 %v2903, %v2903
        %v2908 = vpack.c.bf16 %v2904, %v2904
        %v2909 = vpack.c.bf16 %v2905, %v2905
        %v2910 = vpack.c.bf16 %v2906, %v2906
        %v2911 = vperm.slane %v557, 2
        %v2912 = vperm.slane %v558, 2
        %v2977 = vunpack.c.l.b16 %v2360
        %v2978 = vunpack.c.h.b16 %v2360
        %v2979 = vunpack.c.l.b16 %v2361
        %v2980 = vunpack.c.h.b16 %v2361
        %v2981 = vunpack.c.l.b16 %v2362
        %v2982 = vunpack.c.h.b16 %v2362
        %v2983 = vunpack.c.l.b16 %v2363
        %v2984 = vunpack.c.h.b16 %v2363
        %v2985 = vunpack.c.l.b16 %v2364
        %v2986 = vunpack.c.h.b16 %v2364
        %v2987 = vunpack.c.l.b16 %v2365
        %v2988 = vunpack.c.h.b16 %v2365
        %v2989 = vunpack.c.l.b16 %v2366
        %v2990 = vunpack.c.h.b16 %v2366
        %v2991 = vunpack.c.l.b16 %v2367
        %v2992 = vunpack.c.h.b16 %v2367
        %v2993 = vunpack.c.l.b16 %v2368
        %v2994 = vunpack.c.h.b16 %v2368
        %v2995 = vunpack.c.l.b16 %v2369
        %v2996 = vunpack.c.h.b16 %v2369
        %v2997 = vunpack.c.l.b16 %v2370
        %v2998 = vunpack.c.h.b16 %v2370
        %v2999 = vunpack.c.l.b16 %v2371
        %v3000 = vunpack.c.h.b16 %v2371
        %v3001 = vunpack.c.l.b16 %v2372
        %v3002 = vunpack.c.h.b16 %v2372
        %v3003 = vunpack.c.l.b16 %v2373
        %v3004 = vunpack.c.h.b16 %v2373
        %v3005 = vunpack.c.l.b16 %v2374
        %v3006 = vunpack.c.h.b16 %v2374
        %v3007 = vunpack.c.l.b16 %v2375
        %v3008 = vunpack.c.h.b16 %v2375
        %v3009 = vunpack.c.l.b16 %v2376
        %v3010 = vunpack.c.h.b16 %v2376
        %v3011 = vunpack.c.l.b16 %v2377
        %v3012 = vunpack.c.h.b16 %v2377
        %v3013 = vunpack.c.l.b16 %v2378
        %v3014 = vunpack.c.h.b16 %v2378
        %v3015 = vunpack.c.l.b16 %v2379
        %v3016 = vunpack.c.h.b16 %v2379
        %v3017 = vunpack.c.l.b16 %v2380
        %v3018 = vunpack.c.h.b16 %v2380
        %v3019 = vunpack.c.l.b16 %v2381
        %v3020 = vunpack.c.h.b16 %v2381
        %v3021 = vunpack.c.l.b16 %v2382
        %v3022 = vunpack.c.h.b16 %v2382
        %v3023 = vunpack.c.l.b16 %v2383
        %v3024 = vunpack.c.h.b16 %v2383
        %v3025 = vunpack.c.l.b16 %v2384
        %v3026 = vunpack.c.h.b16 %v2384
        %v3027 = vunpack.c.l.b16 %v2385
        %v3028 = vunpack.c.h.b16 %v2385
        %v3029 = vunpack.c.l.b16 %v2386
        %v3030 = vunpack.c.h.b16 %v2386
        %v3031 = vunpack.c.l.b16 %v2387
        %v3032 = vunpack.c.h.b16 %v2387
        %v3033 = vunpack.c.l.b16 %v2388
        %v3034 = vunpack.c.h.b16 %v2388
        %v3035 = vunpack.c.l.b16 %v2389
        %v3036 = vunpack.c.h.b16 %v2389
        %v3037 = vunpack.c.l.b16 %v2390
        %v3038 = vunpack.c.h.b16 %v2390
        %v3039 = vunpack.c.l.b16 %v2391
        %v3040 = vunpack.c.h.b16 %v2391
        %v3041 = vunpack.c.l.b16 %v2392
        %v3042 = vunpack.c.h.b16 %v2392
        %v3043 = vunpack.c.l.b16 %v2393
        %v3044 = vunpack.c.h.b16 %v2393
        %v3045 = vunpack.c.l.b16 %v2394
        %v3046 = vunpack.c.h.b16 %v2394
        %v3047 = vunpack.c.l.b16 %v2395
        %v3048 = vunpack.c.h.b16 %v2395
        %v3049 = vunpack.c.l.b16 %v2396
        %v3050 = vunpack.c.h.b16 %v2396
        %v3051 = vunpack.c.l.b16 %v2397
        %v3052 = vunpack.c.h.b16 %v2397
        %v3053 = vunpack.c.l.b16 %v2398
        %v3054 = vunpack.c.h.b16 %v2398
        %v3055 = vunpack.c.l.b16 %v2399
        %v3056 = vunpack.c.h.b16 %v2399
        %v3057 = vunpack.c.l.b16 %v2400
        %v3058 = vunpack.c.h.b16 %v2400
        %v3059 = vunpack.c.l.b16 %v2401
        %v3060 = vunpack.c.h.b16 %v2401
        %v3061 = vunpack.c.l.b16 %v2402
        %v3062 = vunpack.c.h.b16 %v2402
        %v3063 = vunpack.c.l.b16 %v2403
        %v3064 = vunpack.c.h.b16 %v2403
        %v3065 = vunpack.c.l.b16 %v2404
        %v3066 = vunpack.c.h.b16 %v2404
        %v3067 = vunpack.c.l.b16 %v2405
        %v3068 = vunpack.c.h.b16 %v2405
        %v3069 = vunpack.c.l.b16 %v2406
        %v3070 = vunpack.c.h.b16 %v2406
        %v3071 = vunpack.c.l.b16 %v2407
        %v3072 = vunpack.c.h.b16 %v2407
        %v3073 = vunpack.c.l.b16 %v2408
        %v3074 = vunpack.c.h.b16 %v2408
        %v3075 = vunpack.c.l.b16 %v2409
        %v3076 = vunpack.c.h.b16 %v2409
        %v3077 = vunpack.c.l.b16 %v2410
        %v3078 = vunpack.c.h.b16 %v2410
        %v3079 = vunpack.c.l.b16 %v2411
        %v3080 = vunpack.c.h.b16 %v2411
        %v3081 = vunpack.c.l.b16 %v2412
        %v3082 = vunpack.c.h.b16 %v2412
        %v3083 = vunpack.c.l.b16 %v2413
        %v3084 = vunpack.c.h.b16 %v2413
        %v3085 = vunpack.c.l.b16 %v2414
        %v3086 = vunpack.c.h.b16 %v2414
        %v3087 = vunpack.c.l.b16 %v2415
        %v3088 = vunpack.c.h.b16 %v2415
        %v3089 = vunpack.c.l.b16 %v2416
        %v3090 = vunpack.c.h.b16 %v2416
        %v3091 = vunpack.c.l.b16 %v2417
        %v3092 = vunpack.c.h.b16 %v2417
        %v3093 = vunpack.c.l.b16 %v2418
        %v3094 = vunpack.c.h.b16 %v2418
        %v3095 = vunpack.c.l.b16 %v2419
        %v3096 = vunpack.c.h.b16 %v2419
        %v3097 = vunpack.c.l.b16 %v2420
        %v3098 = vunpack.c.h.b16 %v2420
        %v3099 = vunpack.c.l.b16 %v2421
        %v3100 = vunpack.c.h.b16 %v2421
        %v3101 = vunpack.c.l.b16 %v2422
        %v3102 = vunpack.c.h.b16 %v2422
        %v3103 = vunpack.c.l.b16 %v2423
        %v3104 = vunpack.c.h.b16 %v2423
        %v3105 = vpack.c.b16 %v2979, %v2977
        %v3106 = vpack.c.b16 %v2980, %v2978
        %v3107 = vpack.c.b16 %v2983, %v2981
        %v3108 = vpack.c.b16 %v2984, %v2982
        %v3109 = vpack.c.b16 %v2987, %v2985
        %v3110 = vpack.c.b16 %v2988, %v2986
        %v3111 = vpack.c.b16 %v2991, %v2989
        %v3112 = vpack.c.b16 %v2992, %v2990
        %v3113 = vpack.c.b16 %v2995, %v2993
        %v3114 = vpack.c.b16 %v2996, %v2994
        %v3115 = vpack.c.b16 %v2999, %v2997
        %v3116 = vpack.c.b16 %v3000, %v2998
        %v3117 = vpack.c.b16 %v3003, %v3001
        %v3118 = vpack.c.b16 %v3004, %v3002
        %v3119 = vpack.c.b16 %v3007, %v3005
        %v3120 = vpack.c.b16 %v3008, %v3006
        %v3121 = vpack.c.b16 %v3011, %v3009
        %v3122 = vpack.c.b16 %v3012, %v3010
        %v3123 = vpack.c.b16 %v3015, %v3013
        %v3124 = vpack.c.b16 %v3016, %v3014
        %v3125 = vpack.c.b16 %v3019, %v3017
        %v3126 = vpack.c.b16 %v3020, %v3018
        %v3127 = vpack.c.b16 %v3023, %v3021
        %v3128 = vpack.c.b16 %v3024, %v3022
        %v3129 = vpack.c.b16 %v3027, %v3025
        %v3130 = vpack.c.b16 %v3028, %v3026
        %v3131 = vpack.c.b16 %v3031, %v3029
        %v3132 = vpack.c.b16 %v3032, %v3030
        %v3133 = vpack.c.b16 %v3035, %v3033
        %v3134 = vpack.c.b16 %v3036, %v3034
        %v3135 = vpack.c.b16 %v3039, %v3037
        %v3136 = vpack.c.b16 %v3040, %v3038
        %v3137 = vpack.c.b16 %v3043, %v3041
        %v3138 = vpack.c.b16 %v3044, %v3042
        %v3139 = vpack.c.b16 %v3047, %v3045
        %v3140 = vpack.c.b16 %v3048, %v3046
        %v3141 = vpack.c.b16 %v3051, %v3049
        %v3142 = vpack.c.b16 %v3052, %v3050
        %v3143 = vpack.c.b16 %v3055, %v3053
        %v3144 = vpack.c.b16 %v3056, %v3054
        %v3145 = vpack.c.b16 %v3059, %v3057
        %v3146 = vpack.c.b16 %v3060, %v3058
        %v3147 = vpack.c.b16 %v3063, %v3061
        %v3148 = vpack.c.b16 %v3064, %v3062
        %v3149 = vpack.c.b16 %v3067, %v3065
        %v3150 = vpack.c.b16 %v3068, %v3066
        %v3151 = vpack.c.b16 %v3071, %v3069
        %v3152 = vpack.c.b16 %v3072, %v3070
        %v3153 = vpack.c.b16 %v3075, %v3073
        %v3154 = vpack.c.b16 %v3076, %v3074
        %v3155 = vpack.c.b16 %v3079, %v3077
        %v3156 = vpack.c.b16 %v3080, %v3078
        %v3157 = vpack.c.b16 %v3083, %v3081
        %v3158 = vpack.c.b16 %v3084, %v3082
        %v3159 = vpack.c.b16 %v3087, %v3085
        %v3160 = vpack.c.b16 %v3088, %v3086
        %v3161 = vpack.c.b16 %v3091, %v3089
        %v3162 = vpack.c.b16 %v3092, %v3090
        %v3163 = vpack.c.b16 %v3095, %v3093
        %v3164 = vpack.c.b16 %v3096, %v3094
        %v3165 = vpack.c.b16 %v3099, %v3097
        %v3166 = vpack.c.b16 %v3100, %v3098
        %v3167 = vpack.c.b16 %v3103, %v3101
        %v3168 = vpack.c.b16 %v3104, %v3102
        %3233 = vmatpush.bf16.msra.mxu0 %v3119
        %3234 = vmatpush.bf16.msra.mxu0 %v3117
        %3235 = vmatpush.bf16.msra.mxu0 %v3115
        %3236 = vmatpush.bf16.msra.mxu0 %v3113
        %3237 = vmatpush.bf16.msra.mxu0 %v3111
        %3238 = vmatpush.bf16.msra.mxu0 %v3109
        %3239 = vmatpush.bf16.msra.mxu0 %v3107
        %3240 = vmatpush.bf16.msra.mxu0 %v3105
        %3241 = vmatmul.bf16.gmra.mxu0 %v2907
        %v3242 = vpop.f32.mrf.mxu0
        %v3243 = vadd.f32 %v2911, %v3242
        %v3244 = vpop.f32.mrf.mxu0
        %3245 = vdwg.mxu0
        %3246 = vmatpush.bf16.msra.mxu0 %v3135
        %3247 = vmatpush.bf16.msra.mxu0 %v3133
        %3248 = vmatpush.bf16.msra.mxu0 %v3131
        %3249 = vmatpush.bf16.msra.mxu0 %v3129
        %3250 = vmatpush.bf16.msra.mxu0 %v3127
        %3251 = vmatpush.bf16.msra.mxu0 %v3125
        %3252 = vmatpush.bf16.msra.mxu0 %v3123
        %3253 = vmatpush.bf16.msra.mxu0 %v3121
        %3254 = vmatmul.bf16.gmra.mxu0 %v2908
        %v3255 = vpop.f32.mrf.mxu0
        %v3256 = vadd.f32 %v3243, %v3255
        %v3257 = vpop.f32.mrf.mxu0
        %3258 = vdwg.mxu0
        %3259 = vmatpush.bf16.msra.mxu0 %v3151
        %3260 = vmatpush.bf16.msra.mxu0 %v3149
        %3261 = vmatpush.bf16.msra.mxu0 %v3147
        %3262 = vmatpush.bf16.msra.mxu0 %v3145
        %3263 = vmatpush.bf16.msra.mxu0 %v3143
        %3264 = vmatpush.bf16.msra.mxu0 %v3141
        %3265 = vmatpush.bf16.msra.mxu0 %v3139
        %3266 = vmatpush.bf16.msra.mxu0 %v3137
        %3267 = vmatmul.bf16.gmra.mxu0 %v2909
        %v3268 = vpop.f32.mrf.mxu0
        %v3269 = vadd.f32 %v3256, %v3268
        %v3270 = vpop.f32.mrf.mxu0
        %3271 = vdwg.mxu0
        %3272 = vmatpush.bf16.msra.mxu0 %v3167
        %3273 = vmatpush.bf16.msra.mxu0 %v3165
        %3274 = vmatpush.bf16.msra.mxu0 %v3163
        %3275 = vmatpush.bf16.msra.mxu0 %v3161
        %3276 = vmatpush.bf16.msra.mxu0 %v3159
        %3277 = vmatpush.bf16.msra.mxu0 %v3157
        %3278 = vmatpush.bf16.msra.mxu0 %v3155
        %3279 = vmatpush.bf16.msra.mxu0 %v3153
        %3280 = vmatmul.bf16.gmra.mxu0 %v2910
        %v3281 = vpop.f32.mrf.mxu0
        %v3282 = vadd.f32 %v3269, %v3281
        %v3283 = vpop.f32.mrf.mxu0
        %3284 = vdwg.mxu0
        %3285 = vmatpush.bf16.msra.mxu0 %v3120
        %3286 = vmatpush.bf16.msra.mxu0 %v3118
        %3287 = vmatpush.bf16.msra.mxu0 %v3116
        %3288 = vmatpush.bf16.msra.mxu0 %v3114
        %3289 = vmatpush.bf16.msra.mxu0 %v3112
        %3290 = vmatpush.bf16.msra.mxu0 %v3110
        %3291 = vmatpush.bf16.msra.mxu0 %v3108
        %3292 = vmatpush.bf16.msra.mxu0 %v3106
        %3293 = vmatmul.bf16.gmra.mxu0 %v2907
        %v3294 = vpop.f32.mrf.mxu0
        %v3295 = vadd.f32 %v2912, %v3294
        %v3296 = vpop.f32.mrf.mxu0
        %3297 = vdwg.mxu0
        %3298 = vmatpush.bf16.msra.mxu0 %v3136
        %3299 = vmatpush.bf16.msra.mxu0 %v3134
        %3300 = vmatpush.bf16.msra.mxu0 %v3132
        %3301 = vmatpush.bf16.msra.mxu0 %v3130
        %3302 = vmatpush.bf16.msra.mxu0 %v3128
        %3303 = vmatpush.bf16.msra.mxu0 %v3126
        %3304 = vmatpush.bf16.msra.mxu0 %v3124
        %3305 = vmatpush.bf16.msra.mxu0 %v3122
        %3306 = vmatmul.bf16.gmra.mxu0 %v2908
        %v3307 = vpop.f32.mrf.mxu0
        %v3308 = vadd.f32 %v3295, %v3307
        %v3309 = vpop.f32.mrf.mxu0
        %3310 = vdwg.mxu0
        %3311 = vmatpush.bf16.msra.mxu0 %v3152
        %3312 = vmatpush.bf16.msra.mxu0 %v3150
        %3313 = vmatpush.bf16.msra.mxu0 %v3148
        %3314 = vmatpush.bf16.msra.mxu0 %v3146
        %3315 = vmatpush.bf16.msra.mxu0 %v3144
        %3316 = vmatpush.bf16.msra.mxu0 %v3142
        %3317 = vmatpush.bf16.msra.mxu0 %v3140
        %3318 = vmatpush.bf16.msra.mxu0 %v3138
        %3319 = vmatmul.bf16.gmra.mxu0 %v2909
        %v3320 = vpop.f32.mrf.mxu0
        %v3321 = vadd.f32 %v3308, %v3320
        %v3322 = vpop.f32.mrf.mxu0
        %3323 = vdwg.mxu0
        %3324 = vmatpush.bf16.msra.mxu0 %v3168
        %3325 = vmatpush.bf16.msra.mxu0 %v3166
        %3326 = vmatpush.bf16.msra.mxu0 %v3164
        %3327 = vmatpush.bf16.msra.mxu0 %v3162
        %3328 = vmatpush.bf16.msra.mxu0 %v3160
        %3329 = vmatpush.bf16.msra.mxu0 %v3158
        %3330 = vmatpush.bf16.msra.mxu0 %v3156
        %3331 = vmatpush.bf16.msra.mxu0 %v3154
        %3332 = vmatmul.bf16.gmra.mxu0 %v2910
        %v3333 = vpop.f32.mrf.mxu0
        %v3334 = vadd.f32 %v3321, %v3333
        %v3335 = vpop.f32.mrf.mxu0
        %3336 = vdwg.mxu0
        %v3337 = vadd.f32 %v2294, %v3282
        %v3338 = vadd.f32 %v2295, %v3334
        %v3339 = vld [vmem:[#allocation2] sm:$0x3]
        %v3340 = vsel %vm909, %v3337, 0.0
        %v3341 = vrot.slane %v3340, 4
        %v3342 = vadd.f32 %v3340, %v3341
        %v3343 = vrot.slane %v3342, 2
        %v3344 = vadd.f32 %v3342, %v3343
        %v3345 = vrot.slane %v3344, 1
        %v3346 = vadd.f32 %v3344, %v3345
        %v3347 = vsel %vm909, %v3338, 0.0
        %v3348 = vrot.slane %v3347, 4
        %v3349 = vadd.f32 %v3347, %v3348
        %v3350 = vrot.slane %v3349, 2
        %v3351 = vadd.f32 %v3349, %v3350
        %v3352 = vrot.slane %v3351, 1
        %v3353 = vadd.f32 %v3351, %v3352
        %v3356 = vrot.slane %v3353, 7
        %vm3357 = vcmask 1040384
        %v3358 = vsel %vm3357, %v3346, %v3356
        %v3360 = vadd.f32 %v3339, %v3358
        %v3361 = vlaneseq
        %vm3362 = vcmp.ge.s32.totalorder %v3361, 0
        %vm3363 = vcmp.lt.s32.totalorder %v3361, 256
        %vm3364 = vmand %vm3362, %vm3363
        %3365 = vst.msk [vmem:[#allocation2] sm:$0x3] %vm3364, %v3360
        // Predicated region
        $region89: #{generator_forward.1} parent=67 // pred_check
          %p3366 = pneg %p544
        $region90: #{generator_forward.1} parent=67 // pred_check_branch
          %3368 = sbr.rel (%p3366) target = $region92
        $region91: #{generator_forward.1} parent=67 // pred_region
          %v3369 = vld [vmem:[#allocation2] sm:$0x3]
          %3372 = vst [vmem:[#allocation1] sm:$0xff] %v557
          %3373 = vst [vmem:[#allocation1 + $0x9] sm:$0xff] %v558
          %s3374 = scalar_lea.vmem [#allocation1], 3
          %v3375 = vld [vmem:[%s3374] ss:$9 sm:$0xff]
          %v3377 = vadd.f32 %v3369, %v3375
          %v3378 = vmul.f32 %v3377, 0.2
          %v3380 = vperm.slane %v3378, 0
          %v3381 = vperm.slane %v3378, 1
          %v3384 = vpack.c.bf16 %v3380, %v3380
          %v3385 = vpack.c.bf16 %v3381, %v3381
          %v3386 = vld [vmem:[#allocation8] sm:$0xff]
          %v3387 = vld [vmem:[#allocation8 + $0x8] sm:$0xff]
          %v3388 = vld [vmem:[#allocation8 + $0x10] sm:$0xff]
          %v3389 = vld [vmem:[#allocation8 + $0x18] sm:$0xff]
          %v3390 = vld [vmem:[#allocation8 + $0x20] sm:$0xff]
          %v3391 = vld [vmem:[#allocation8 + $0x28] sm:$0xff]
          %v3392 = vld [vmem:[#allocation8 + $0x30] sm:$0xff]
          %v3393 = vld [vmem:[#allocation8 + $0x38] sm:$0xff]
          %v3394 = vld [vmem:[#allocation8 + $0x40] sm:$0xff]
          %v3395 = vld [vmem:[#allocation8 + $0x48] sm:$0xff]
          %v3396 = vld [vmem:[#allocation8 + $0x50] sm:$0xff]
          %v3397 = vld [vmem:[#allocation8 + $0x58] sm:$0xff]
          %v3398 = vld [vmem:[#allocation8 + $0x60] sm:$0xff]
          %v3399 = vld [vmem:[#allocation8 + $0x68] sm:$0xff]
          %v3400 = vld [vmem:[#allocation8 + $0x70] sm:$0xff]
          %v3401 = vld [vmem:[#allocation8 + $0x78] sm:$0xff]
          %v3402 = vld [vmem:[#allocation8 + $0x80] sm:$0xff]
          %v3403 = vld [vmem:[#allocation8 + $0x88] sm:$0xff]
          %v3404 = vld [vmem:[#allocation8 + $0x90] sm:$0xff]
          %v3405 = vld [vmem:[#allocation8 + $0x98] sm:$0xff]
          %v3406 = vld [vmem:[#allocation8 + $0xa0] sm:$0xff]
          %v3407 = vld [vmem:[#allocation8 + $0xa8] sm:$0xff]
          %v3408 = vld [vmem:[#allocation8 + $0xb0] sm:$0xff]
          %v3409 = vld [vmem:[#allocation8 + $0xb8] sm:$0xff]
          %v3410 = vld [vmem:[#allocation8 + $0xc0] sm:$0xff]
          %v3411 = vld [vmem:[#allocation8 + $0xc8] sm:$0xff]
          %v3412 = vld [vmem:[#allocation8 + $0xd0] sm:$0xff]
          %v3413 = vld [vmem:[#allocation8 + $0xd8] sm:$0xff]
          %v3414 = vld [vmem:[#allocation8 + $0xe0] sm:$0xff]
          %v3415 = vld [vmem:[#allocation8 + $0xe8] sm:$0xff]
          %v3416 = vld [vmem:[#allocation8 + $0xf0] sm:$0xff]
          %v3417 = vld [vmem:[#allocation8 + $0xf8] sm:$0xff]
          %v3418 = vld [vmem:[#allocation8 + $0x100] sm:$0xff]
          %v3419 = vld [vmem:[#allocation8 + $0x108] sm:$0xff]
          %v3420 = vld [vmem:[#allocation8 + $0x110] sm:$0xff]
          %v3421 = vld [vmem:[#allocation8 + $0x118] sm:$0xff]
          %v3422 = vld [vmem:[#allocation8 + $0x120] sm:$0xff]
          %v3423 = vld [vmem:[#allocation8 + $0x128] sm:$0xff]
          %v3424 = vld [vmem:[#allocation8 + $0x130] sm:$0xff]
          %v3425 = vld [vmem:[#allocation8 + $0x138] sm:$0xff]
          %v3426 = vld [vmem:[#allocation8 + $0x140] sm:$0xff]
          %v3427 = vld [vmem:[#allocation8 + $0x148] sm:$0xff]
          %v3428 = vld [vmem:[#allocation8 + $0x150] sm:$0xff]
          %v3429 = vld [vmem:[#allocation8 + $0x158] sm:$0xff]
          %v3430 = vld [vmem:[#allocation8 + $0x160] sm:$0xff]
          %v3431 = vld [vmem:[#allocation8 + $0x168] sm:$0xff]
          %v3432 = vld [vmem:[#allocation8 + $0x170] sm:$0xff]
          %v3433 = vld [vmem:[#allocation8 + $0x178] sm:$0xff]
          %v3434 = vld [vmem:[#allocation8 + $0x180] sm:$0xff]
          %v3435 = vld [vmem:[#allocation8 + $0x188] sm:$0xff]
          %v3436 = vld [vmem:[#allocation8 + $0x190] sm:$0xff]
          %v3437 = vld [vmem:[#allocation8 + $0x198] sm:$0xff]
          %v3438 = vld [vmem:[#allocation8 + $0x1a0] sm:$0xff]
          %v3439 = vld [vmem:[#allocation8 + $0x1a8] sm:$0xff]
          %v3440 = vld [vmem:[#allocation8 + $0x1b0] sm:$0xff]
          %v3441 = vld [vmem:[#allocation8 + $0x1b8] sm:$0xff]
          %v3442 = vld [vmem:[#allocation8 + $0x1c0] sm:$0xff]
          %v3443 = vld [vmem:[#allocation8 + $0x1c8] sm:$0xff]
          %v3444 = vld [vmem:[#allocation8 + $0x1d0] sm:$0xff]
          %v3445 = vld [vmem:[#allocation8 + $0x1d8] sm:$0xff]
          %v3446 = vld [vmem:[#allocation8 + $0x1e0] sm:$0xff]
          %v3447 = vld [vmem:[#allocation8 + $0x1e8] sm:$0xff]
          %v3448 = vld [vmem:[#allocation8 + $0x1f0] sm:$0xff]
          %v3449 = vld [vmem:[#allocation8 + $0x1f8] sm:$0xff]
          %v3514 = vunpack.c.l.b16 %v3386
          %v3515 = vunpack.c.h.b16 %v3386
          %v3516 = vunpack.c.l.b16 %v3387
          %v3517 = vunpack.c.h.b16 %v3387
          %v3518 = vunpack.c.l.b16 %v3388
          %v3519 = vunpack.c.h.b16 %v3388
          %v3520 = vunpack.c.l.b16 %v3389
          %v3521 = vunpack.c.h.b16 %v3389
          %v3522 = vunpack.c.l.b16 %v3390
          %v3523 = vunpack.c.h.b16 %v3390
          %v3524 = vunpack.c.l.b16 %v3391
          %v3525 = vunpack.c.h.b16 %v3391
          %v3526 = vunpack.c.l.b16 %v3392
          %v3527 = vunpack.c.h.b16 %v3392
          %v3528 = vunpack.c.l.b16 %v3393
          %v3529 = vunpack.c.h.b16 %v3393
          %v3530 = vunpack.c.l.b16 %v3394
          %v3531 = vunpack.c.h.b16 %v3394
          %v3532 = vunpack.c.l.b16 %v3395
          %v3533 = vunpack.c.h.b16 %v3395
          %v3534 = vunpack.c.l.b16 %v3396
          %v3535 = vunpack.c.h.b16 %v3396
          %v3536 = vunpack.c.l.b16 %v3397
          %v3537 = vunpack.c.h.b16 %v3397
          %v3538 = vunpack.c.l.b16 %v3398
          %v3539 = vunpack.c.h.b16 %v3398
          %v3540 = vunpack.c.l.b16 %v3399
          %v3541 = vunpack.c.h.b16 %v3399
          %v3542 = vunpack.c.l.b16 %v3400
          %v3543 = vunpack.c.h.b16 %v3400
          %v3544 = vunpack.c.l.b16 %v3401
          %v3545 = vunpack.c.h.b16 %v3401
          %v3546 = vunpack.c.l.b16 %v3402
          %v3547 = vunpack.c.h.b16 %v3402
          %v3548 = vunpack.c.l.b16 %v3403
          %v3549 = vunpack.c.h.b16 %v3403
          %v3550 = vunpack.c.l.b16 %v3404
          %v3551 = vunpack.c.h.b16 %v3404
          %v3552 = vunpack.c.l.b16 %v3405
          %v3553 = vunpack.c.h.b16 %v3405
          %v3554 = vunpack.c.l.b16 %v3406
          %v3555 = vunpack.c.h.b16 %v3406
          %v3556 = vunpack.c.l.b16 %v3407
          %v3557 = vunpack.c.h.b16 %v3407
          %v3558 = vunpack.c.l.b16 %v3408
          %v3559 = vunpack.c.h.b16 %v3408
          %v3560 = vunpack.c.l.b16 %v3409
          %v3561 = vunpack.c.h.b16 %v3409
          %v3562 = vunpack.c.l.b16 %v3410
          %v3563 = vunpack.c.h.b16 %v3410
          %v3564 = vunpack.c.l.b16 %v3411
          %v3565 = vunpack.c.h.b16 %v3411
          %v3566 = vunpack.c.l.b16 %v3412
          %v3567 = vunpack.c.h.b16 %v3412
          %v3568 = vunpack.c.l.b16 %v3413
          %v3569 = vunpack.c.h.b16 %v3413
          %v3570 = vunpack.c.l.b16 %v3414
          %v3571 = vunpack.c.h.b16 %v3414
          %v3572 = vunpack.c.l.b16 %v3415
          %v3573 = vunpack.c.h.b16 %v3415
          %v3574 = vunpack.c.l.b16 %v3416
          %v3575 = vunpack.c.h.b16 %v3416
          %v3576 = vunpack.c.l.b16 %v3417
          %v3577 = vunpack.c.h.b16 %v3417
          %v3578 = vunpack.c.l.b16 %v3418
          %v3579 = vunpack.c.h.b16 %v3418
          %v3580 = vunpack.c.l.b16 %v3419
          %v3581 = vunpack.c.h.b16 %v3419
          %v3582 = vunpack.c.l.b16 %v3420
          %v3583 = vunpack.c.h.b16 %v3420
          %v3584 = vunpack.c.l.b16 %v3421
          %v3585 = vunpack.c.h.b16 %v3421
          %v3586 = vunpack.c.l.b16 %v3422
          %v3587 = vunpack.c.h.b16 %v3422
          %v3588 = vunpack.c.l.b16 %v3423
          %v3589 = vunpack.c.h.b16 %v3423
          %v3590 = vunpack.c.l.b16 %v3424
          %v3591 = vunpack.c.h.b16 %v3424
          %v3592 = vunpack.c.l.b16 %v3425
          %v3593 = vunpack.c.h.b16 %v3425
          %v3594 = vunpack.c.l.b16 %v3426
          %v3595 = vunpack.c.h.b16 %v3426
          %v3596 = vunpack.c.l.b16 %v3427
          %v3597 = vunpack.c.h.b16 %v3427
          %v3598 = vunpack.c.l.b16 %v3428
          %v3599 = vunpack.c.h.b16 %v3428
          %v3600 = vunpack.c.l.b16 %v3429
          %v3601 = vunpack.c.h.b16 %v3429
          %v3602 = vunpack.c.l.b16 %v3430
          %v3603 = vunpack.c.h.b16 %v3430
          %v3604 = vunpack.c.l.b16 %v3431
          %v3605 = vunpack.c.h.b16 %v3431
          %v3606 = vunpack.c.l.b16 %v3432
          %v3607 = vunpack.c.h.b16 %v3432
          %v3608 = vunpack.c.l.b16 %v3433
          %v3609 = vunpack.c.h.b16 %v3433
          %v3610 = vunpack.c.l.b16 %v3434
          %v3611 = vunpack.c.h.b16 %v3434
          %v3612 = vunpack.c.l.b16 %v3435
          %v3613 = vunpack.c.h.b16 %v3435
          %v3614 = vunpack.c.l.b16 %v3436
          %v3615 = vunpack.c.h.b16 %v3436
          %v3616 = vunpack.c.l.b16 %v3437
          %v3617 = vunpack.c.h.b16 %v3437
          %v3618 = vunpack.c.l.b16 %v3438
          %v3619 = vunpack.c.h.b16 %v3438
          %v3620 = vunpack.c.l.b16 %v3439
          %v3621 = vunpack.c.h.b16 %v3439
          %v3622 = vunpack.c.l.b16 %v3440
          %v3623 = vunpack.c.h.b16 %v3440
          %v3624 = vunpack.c.l.b16 %v3441
          %v3625 = vunpack.c.h.b16 %v3441
          %v3626 = vunpack.c.l.b16 %v3442
          %v3627 = vunpack.c.h.b16 %v3442
          %v3628 = vunpack.c.l.b16 %v3443
          %v3629 = vunpack.c.h.b16 %v3443
          %v3630 = vunpack.c.l.b16 %v3444
          %v3631 = vunpack.c.h.b16 %v3444
          %v3632 = vunpack.c.l.b16 %v3445
          %v3633 = vunpack.c.h.b16 %v3445
          %v3634 = vunpack.c.l.b16 %v3446
          %v3635 = vunpack.c.h.b16 %v3446
          %v3636 = vunpack.c.l.b16 %v3447
          %v3637 = vunpack.c.h.b16 %v3447
          %v3638 = vunpack.c.l.b16 %v3448
          %v3639 = vunpack.c.h.b16 %v3448
          %v3640 = vunpack.c.l.b16 %v3449
          %v3641 = vunpack.c.h.b16 %v3449
          %v3642 = vpack.c.b16 %v3518, %v3514
          %v3643 = vpack.c.b16 %v3519, %v3515
          %v3644 = vpack.c.b16 %v3520, %v3516
          %v3645 = vpack.c.b16 %v3521, %v3517
          %v3646 = vpack.c.b16 %v3526, %v3522
          %v3647 = vpack.c.b16 %v3527, %v3523
          %v3648 = vpack.c.b16 %v3528, %v3524
          %v3649 = vpack.c.b16 %v3529, %v3525
          %v3650 = vpack.c.b16 %v3534, %v3530
          %v3651 = vpack.c.b16 %v3535, %v3531
          %v3652 = vpack.c.b16 %v3536, %v3532
          %v3653 = vpack.c.b16 %v3537, %v3533
          %v3654 = vpack.c.b16 %v3542, %v3538
          %v3655 = vpack.c.b16 %v3543, %v3539
          %v3656 = vpack.c.b16 %v3544, %v3540
          %v3657 = vpack.c.b16 %v3545, %v3541
          %v3658 = vpack.c.b16 %v3550, %v3546
          %v3659 = vpack.c.b16 %v3551, %v3547
          %v3660 = vpack.c.b16 %v3552, %v3548
          %v3661 = vpack.c.b16 %v3553, %v3549
          %v3662 = vpack.c.b16 %v3558, %v3554
          %v3663 = vpack.c.b16 %v3559, %v3555
          %v3664 = vpack.c.b16 %v3560, %v3556
          %v3665 = vpack.c.b16 %v3561, %v3557
          %v3666 = vpack.c.b16 %v3566, %v3562
          %v3667 = vpack.c.b16 %v3567, %v3563
          %v3668 = vpack.c.b16 %v3568, %v3564
          %v3669 = vpack.c.b16 %v3569, %v3565
          %v3670 = vpack.c.b16 %v3574, %v3570
          %v3671 = vpack.c.b16 %v3575, %v3571
          %v3672 = vpack.c.b16 %v3576, %v3572
          %v3673 = vpack.c.b16 %v3577, %v3573
          %v3674 = vpack.c.b16 %v3582, %v3578
          %v3675 = vpack.c.b16 %v3583, %v3579
          %v3676 = vpack.c.b16 %v3584, %v3580
          %v3677 = vpack.c.b16 %v3585, %v3581
          %v3678 = vpack.c.b16 %v3590, %v3586
          %v3679 = vpack.c.b16 %v3591, %v3587
          %v3680 = vpack.c.b16 %v3592, %v3588
          %v3681 = vpack.c.b16 %v3593, %v3589
          %v3682 = vpack.c.b16 %v3598, %v3594
          %v3683 = vpack.c.b16 %v3599, %v3595
          %v3684 = vpack.c.b16 %v3600, %v3596
          %v3685 = vpack.c.b16 %v3601, %v3597
          %v3686 = vpack.c.b16 %v3606, %v3602
          %v3687 = vpack.c.b16 %v3607, %v3603
          %v3688 = vpack.c.b16 %v3608, %v3604
          %v3689 = vpack.c.b16 %v3609, %v3605
          %v3690 = vpack.c.b16 %v3614, %v3610
          %v3691 = vpack.c.b16 %v3615, %v3611
          %v3692 = vpack.c.b16 %v3616, %v3612
          %v3693 = vpack.c.b16 %v3617, %v3613
          %v3694 = vpack.c.b16 %v3622, %v3618
          %v3695 = vpack.c.b16 %v3623, %v3619
          %v3696 = vpack.c.b16 %v3624, %v3620
          %v3697 = vpack.c.b16 %v3625, %v3621
          %v3698 = vpack.c.b16 %v3630, %v3626
          %v3699 = vpack.c.b16 %v3631, %v3627
          %v3700 = vpack.c.b16 %v3632, %v3628
          %v3701 = vpack.c.b16 %v3633, %v3629
          %v3702 = vpack.c.b16 %v3638, %v3634
          %v3703 = vpack.c.b16 %v3639, %v3635
          %v3704 = vpack.c.b16 %v3640, %v3636
          %v3705 = vpack.c.b16 %v3641, %v3637
          %v3772 = vrot.slane %v557, 4
          %v3773 = vrot.slane %v558, 4
          %v3774 = vrot.slane %v559, 4
          %v3775 = vrot.slane %v560, 4
          %3780 = vmatpush.bf16.msra.mxu0 %v3670
          %3781 = vmatpush.bf16.msra.mxu0 %v3666
          %3782 = vmatpush.bf16.msra.mxu0 %v3662
          %3783 = vmatpush.bf16.msra.mxu0 %v3658
          %3784 = vmatpush.bf16.msra.mxu0 %v3654
          %3785 = vmatpush.bf16.msra.mxu0 %v3650
          %3786 = vmatpush.bf16.msra.mxu0 %v3646
          %3787 = vmatpush.bf16.msra.mxu0 %v3642
          %3788 = vmatmul.bf16.gmra.mxu0 %v3384
          %v3789 = vpop.f32.mrf.mxu0
          %v3790 = vadd.f32 %v3772, %v3789
          %v3791 = vpop.f32.mrf.mxu0
          %3792 = vdwg.mxu0
          %3793 = vmatpush.bf16.msra.mxu0 %v3702
          %3794 = vmatpush.bf16.msra.mxu0 %v3698
          %3795 = vmatpush.bf16.msra.mxu0 %v3694
          %3796 = vmatpush.bf16.msra.mxu0 %v3690
          %3797 = vmatpush.bf16.msra.mxu0 %v3686
          %3798 = vmatpush.bf16.msra.mxu0 %v3682
          %3799 = vmatpush.bf16.msra.mxu0 %v3678
          %3800 = vmatpush.bf16.msra.mxu0 %v3674
          %3801 = vmatmul.bf16.gmra.mxu0 %v3385
          %v3802 = vpop.f32.mrf.mxu0
          %v3803 = vadd.f32 %v3790, %v3802
          %v3804 = vpop.f32.mrf.mxu0
          %3805 = vdwg.mxu0
          %3806 = vmatpush.bf16.msra.mxu0 %v3671
          %3807 = vmatpush.bf16.msra.mxu0 %v3667
          %3808 = vmatpush.bf16.msra.mxu0 %v3663
          %3809 = vmatpush.bf16.msra.mxu0 %v3659
          %3810 = vmatpush.bf16.msra.mxu0 %v3655
          %3811 = vmatpush.bf16.msra.mxu0 %v3651
          %3812 = vmatpush.bf16.msra.mxu0 %v3647
          %3813 = vmatpush.bf16.msra.mxu0 %v3643
          %3814 = vmatmul.bf16.gmra.mxu0 %v3384
          %v3815 = vpop.f32.mrf.mxu0
          %v3816 = vadd.f32 %v3773, %v3815
          %v3817 = vpop.f32.mrf.mxu0
          %3818 = vdwg.mxu0
          %3819 = vmatpush.bf16.msra.mxu0 %v3703
          %3820 = vmatpush.bf16.msra.mxu0 %v3699
          %3821 = vmatpush.bf16.msra.mxu0 %v3695
          %3822 = vmatpush.bf16.msra.mxu0 %v3691
          %3823 = vmatpush.bf16.msra.mxu0 %v3687
          %3824 = vmatpush.bf16.msra.mxu0 %v3683
          %3825 = vmatpush.bf16.msra.mxu0 %v3679
          %3826 = vmatpush.bf16.msra.mxu0 %v3675
          %3827 = vmatmul.bf16.gmra.mxu0 %v3385
          %v3828 = vpop.f32.mrf.mxu0
          %v3829 = vadd.f32 %v3816, %v3828
          %v3830 = vpop.f32.mrf.mxu0
          %3831 = vdwg.mxu0
          %3832 = vmatpush.bf16.msra.mxu0 %v3672
          %3833 = vmatpush.bf16.msra.mxu0 %v3668
          %3834 = vmatpush.bf16.msra.mxu0 %v3664
          %3835 = vmatpush.bf16.msra.mxu0 %v3660
          %3836 = vmatpush.bf16.msra.mxu0 %v3656
          %3837 = vmatpush.bf16.msra.mxu0 %v3652
          %3838 = vmatpush.bf16.msra.mxu0 %v3648
          %3839 = vmatpush.bf16.msra.mxu0 %v3644
          %3840 = vmatmul.bf16.gmra.mxu0 %v3384
          %v3841 = vpop.f32.mrf.mxu0
          %v3842 = vadd.f32 %v3774, %v3841
          %v3843 = vpop.f32.mrf.mxu0
          %3844 = vdwg.mxu0
          %3845 = vmatpush.bf16.msra.mxu0 %v3704
          %3846 = vmatpush.bf16.msra.mxu0 %v3700
          %3847 = vmatpush.bf16.msra.mxu0 %v3696
          %3848 = vmatpush.bf16.msra.mxu0 %v3692
          %3849 = vmatpush.bf16.msra.mxu0 %v3688
          %3850 = vmatpush.bf16.msra.mxu0 %v3684
          %3851 = vmatpush.bf16.msra.mxu0 %v3680
          %3852 = vmatpush.bf16.msra.mxu0 %v3676
          %3853 = vmatmul.bf16.gmra.mxu0 %v3385
          %v3854 = vpop.f32.mrf.mxu0
          %v3855 = vadd.f32 %v3842, %v3854
          %v3856 = vpop.f32.mrf.mxu0
          %3857 = vdwg.mxu0
          %3858 = vmatpush.bf16.msra.mxu0 %v3673
          %3859 = vmatpush.bf16.msra.mxu0 %v3669
          %3860 = vmatpush.bf16.msra.mxu0 %v3665
          %3861 = vmatpush.bf16.msra.mxu0 %v3661
          %3862 = vmatpush.bf16.msra.mxu0 %v3657
          %3863 = vmatpush.bf16.msra.mxu0 %v3653
          %3864 = vmatpush.bf16.msra.mxu0 %v3649
          %3865 = vmatpush.bf16.msra.mxu0 %v3645
          %3866 = vmatmul.bf16.gmra.mxu0 %v3384
          %v3867 = vpop.f32.mrf.mxu0
          %v3868 = vadd.f32 %v3775, %v3867
          %v3869 = vpop.f32.mrf.mxu0
          %3870 = vdwg.mxu0
          %3871 = vmatpush.bf16.msra.mxu0 %v3705
          %3872 = vmatpush.bf16.msra.mxu0 %v3701
          %3873 = vmatpush.bf16.msra.mxu0 %v3697
          %3874 = vmatpush.bf16.msra.mxu0 %v3693
          %3875 = vmatpush.bf16.msra.mxu0 %v3689
          %3876 = vmatpush.bf16.msra.mxu0 %v3685
          %3877 = vmatpush.bf16.msra.mxu0 %v3681
          %3878 = vmatpush.bf16.msra.mxu0 %v3677
          %3879 = vmatmul.bf16.gmra.mxu0 %v3385
          %v3880 = vpop.f32.mrf.mxu0
          %v3881 = vadd.f32 %v3868, %v3880
          %v3882 = vpop.f32.mrf.mxu0
          %3883 = vdwg.mxu0
          %v3884 = vmax.f32 %v3803, 0.0
          %v3885 = vmax.f32 %v3829, 0.0
          %v3886 = vmax.f32 %v3855, 0.0
          %v3887 = vmax.f32 %v3881, 0.0
          %v3888 = vrot.slane %v557, 5
          %v3889 = vrot.slane %v558, 5
          %v3890 = vrot.slane %v559, 5
          %v3891 = vrot.slane %v560, 5
          %v3896 = vmul.f32 %v3884, %v3888
          %v3897 = vmul.f32 %v3885, %v3889
          %v3898 = vmul.f32 %v3886, %v3890
          %v3899 = vmul.f32 %v3887, %v3891
          %v3900 = vsel %vm3357, %v3896, 0.0
          %v3901 = vsel %vm3357, %v3897, 0.0
          %v3902 = vadd.f32 %v3900, %v3901
          %v3903 = vsel %vm3357, %v3898, 0.0
          %v3904 = vadd.f32 %v3902, %v3903
          %v3905 = vsel %vm3357, %v3899, 0.0
          %v3906 = vadd.f32 %v3904, %v3905
          %3907 = vadd.xlane.f32.xlu0 %v3906
          %v3908 = vpop.xlane.xlu0 %3907
          %v3909 = vrot.slane %v557, 6
          %v3911 = vadd.f32 %v3908, %v3909
          %v3912 = vxor.u32 %v3911, 2147483648
          %v3913 = vmul.f32 %v3912, 1.442695
          %v3914 = vpow.pop %v3913
          %v3915 = vadd.f32 %v3914, 1.0
          %v3916 = vrcp.pop %v3915
          %v3917 = vmul.f32 %v3915, %v3916
          %v3918 = vsub.f32 1.0, %v3917
          %v3919 = vmul.f32 %v3916, %v3918
          %v3920 = vadd.f32 %v3916, %v3919
          %vm3921 = vweird.f32 %v3915
          %vm3922 = vweird.f32 %v3916
          %vm3923 = vmor %vm3921, %vm3922
          %v3924 = vsel %vm3923, %v3916, %v3920
          %v3925 = vand.u32 2147483647, %v3915
          %vm3926 = vcmp.eq.f32.partialorder %v3925, 8.507059e+37
          %v3927 = vand.u32 %v3915, 2147483648
          %v3928 = vor.u32 1.1754944e-38, %v3927
          %v3929 = vsel %vm3926, %v3928, %v3924
          %v3930 = vmul.f32 1.0, %v3929
          %vm3931 = vcmask 0
          %3932 = vst.msk [vmem:[%s542] sm:$0x1] %vm3931, %v3930
        $region92: #{generator_forward.1} parent=67 // pred_fallthru
          _
        %p3933 = scmp.lt.s32.totalorder %s30, 1
        %s3934 = scalar_select %p3933, %s30, 1
        %s3935 = scalar_lea.vmem %s12, %s3934
        // Predicated region
        $region93: #{generator_forward.1} parent=67 // pred_check
          %p3936 = pneg %p325
        $region94: #{generator_forward.1} parent=67 // pred_check_branch
          %3938 = sbr.rel (%p3936) target = $region96
        $region95: #{generator_forward.1} parent=67 // pred_region
          _
        $region96: #{generator_forward.1} parent=67 // pred_fallthru
          _
      $region68: #{generator_forward.1} parent=5 // pred_fallthru
        _
      %p3939 = scmp.le.s32.totalorder 2, %s21
      // Predicated region
      $region97: #{generator_forward.1} parent=5 // pred_check
        %p3940 = pneg %p3939
      $region98: #{generator_forward.1} parent=5 // pred_check_branch
        %3942 = sbr.rel (%p3940) target = $region100
      $region99: #{generator_forward.1} parent=5 // pred_region
        %s3943 = ssub.s32 %s21, 2
        // Predicated region
        $region101: #{generator_forward.1} parent=99 // pred_check
          %p3944 = pneg %p331
        $region102: #{generator_forward.1} parent=99 // pred_check_branch
          %3946 = sbr.rel (%p3944) target = $region104
        $region103: #{generator_forward.1} parent=99 // pred_region
          %p3947 = scmp.lt.s32.totalorder %s32, 1
          %s3948 = scalar_select %p3947, %s32, 1
          %s3949 = scalar_lea.vmem %s12, %s3948
        $region104: #{generator_forward.1} parent=99 // pred_fallthru
          _
      $region100: #{generator_forward.1} parent=5 // pred_fallthru
        _
    $region6: #{generator_forward.1} parent=1 // loop_footer
      %s25 = sadd.s32 1, %s21
    $region7: #{generator_forward.1} parent=1 // loop_footer_branch
      %20 = sbr.rel target = $region3
    $region8: #{generator_forward.1} parent=1 // loop_exit
      _
    %3950 = vsyncpa [#allocation4], 1
    %s3951 = scalar_lea.sflag [#allocation4], 1
    %3952 = vsyncpa %s3951, 1
    %3953 = vsyncpa [#allocation6], 1
    %3954 = vsyncpa [#allocation9], 1

</llo_original>
